<compile_context>
chip_gen: v7x
topology: tpu7x:2x2x1
jax: 0.10.0
libtpu: 0.0.40
codegen_flags: <defaults>
</compile_context>

<pallas_src>
import jax
import jax.numpy as jnp
from jax.experimental import pallas as pl
from jax.experimental.pallas import tpu as pltpu


# ----------------------------------------------------------------------------
# Fused Down block kernel:  MaxPool2d(2) -> (Conv3x3+BN+ReLU) -> (Conv3x3+BN+ReLU)
# Grid = (batch,); one full image per grid step.
# ----------------------------------------------------------------------------
def _down_block_kernel(x_ref, w1_ref, s1_ref, b1_ref, w2_ref, s2_ref, b2_ref,
                       o_ref, pooled_ref, mid_ref):
    # x_ref      : (1, H, W, Cin)        NHWC input image (one batch element)
    # w1_ref     : (9*Cin,  Cmid)        im2col-packed conv1 weights
    # s1_ref/b1  : (1, Cmid)             folded BN1 scale / shift
    # w2_ref     : (9*Cmid, Cout)        im2col-packed conv2 weights
    # s2_ref/b2  : (1, Cout)             folded BN2 scale / shift
    # o_ref      : (1, Ho*Wo, Cout)      flattened-spatial output slab
    # pooled_ref : (Ho+2, Wo+2, Cin)     VMEM scratch: zero-padded pooled image
    # mid_ref    : (Ho+2, Wo+2, Cmid)    VMEM scratch: zero-padded conv1 output
    _, H, W, Cin = x_ref.shape
    Ho, Wo = H // 2, W // 2
    Cmid = mid_ref.shape[2]

    # ---- MaxPool2d(kernel=2, stride=2) via reshape + max (no strided slices) --
    xv = x_ref[0]                                             # (H, W, Cin)
    xv = jnp.max(xv.reshape(Ho, 2, W, Cin), axis=1)           # pool row pairs
    pooled = jnp.max(xv.reshape(Ho, Wo, 2, Cin), axis=2)      # pool col pairs

    # ---- in-kernel zero padding (halo = 1) into VMEM scratch ------------------
    pooled_ref[...] = jnp.zeros_like(pooled_ref)
    pooled_ref[pl.ds(1, Ho), pl.ds(1, Wo), :] = pooled.astype(pooled_ref.dtype)

    def conv3x3_bn_relu(pref, w_ref, s_ref, b_ref, cin):
        # pref: (Ho+2, Wo+2, cin) zero-padded image; one im2col matmul (K=9*cin).
        taps = []
        for dy in range(3):
            for dx in range(3):
                taps.append(pref[pl.ds(dy, Ho), pl.ds(dx, Wo), :])   # (Ho,Wo,cin)
        patches = jnp.concatenate(taps, axis=-1)              # (Ho, Wo, 9*cin)
        patches = patches.reshape(Ho * Wo, 9 * cin)
        acc = jnp.dot(patches, w_ref[...],
                      preferred_element_type=jnp.float32)     # (Ho*Wo, cout) f32
        return jnp.maximum(acc * s_ref[...] + b_ref[...], 0.0)

    # ---- conv1 + BN + ReLU ----------------------------------------------------
    y1 = conv3x3_bn_relu(pooled_ref, w1_ref, s1_ref, b1_ref, Cin)   # (Ho*Wo, Cmid)

    mid_ref[...] = jnp.zeros_like(mid_ref)
    mid_ref[pl.ds(1, Ho), pl.ds(1, Wo), :] = (
        y1.reshape(Ho, Wo, Cmid).astype(mid_ref.dtype))

    # ---- conv2 + BN + ReLU ----------------------------------------------------
    y2 = conv3x3_bn_relu(mid_ref, w2_ref, s2_ref, b2_ref, Cmid)     # (Ho*Wo, Cout)
    o_ref[0] = y2.astype(o_ref.dtype)


def down_block(x, stage_params):
    """One fused Down block.  x: (N, H, W, Cin) NHWC -> (N, H//2, W//2, Cout)."""
    (w1, s1, b1), (w2, s2, b2) = stage_params
    N, H, W, Cin = x.shape
    Ho, Wo = H // 2, W // 2
    Cmid = w1.shape[-1]
    Cout = w2.shape[-1]

    # Pack weights for the im2col contraction: (3,3,ci,co) -> ((dy*3+dx)*ci, co).
    w1p = w1.reshape(9 * Cin, Cmid)
    w2p = w2.reshape(9 * Cmid, Cout)
    s1p, b1p = s1.reshape(1, Cmid), b1.reshape(1, Cmid)
    s2p, b2p = s2.reshape(1, Cout), b2.reshape(1, Cout)

    out = pl.pallas_call(
        _down_block_kernel,
        out_shape=jax.ShapeDtypeStruct((N, Ho * Wo, Cout), x.dtype),
        grid=(N,),
        in_specs=[
            pl.BlockSpec((1, H, W, Cin), lambda n: (n, 0, 0, 0)),
            pl.BlockSpec((9 * Cin, Cmid), lambda n: (0, 0)),
            pl.BlockSpec((1, Cmid), lambda n: (0, 0)),
            pl.BlockSpec((1, Cmid), lambda n: (0, 0)),
            pl.BlockSpec((9 * Cmid, Cout), lambda n: (0, 0)),
            pl.BlockSpec((1, Cout), lambda n: (0, 0)),
            pl.BlockSpec((1, Cout), lambda n: (0, 0)),
        ],
        out_specs=pl.BlockSpec((1, Ho * Wo, Cout), lambda n: (n, 0, 0)),
        scratch_shapes=[
            pltpu.VMEM((Ho + 2, Wo + 2, Cin), jnp.float32),
            pltpu.VMEM((Ho + 2, Wo + 2, Cmid), jnp.float32),
        ],
        compiler_params=pltpu.CompilerParams(
            dimension_semantics=("parallel",)),
    )(x, w1p, s1p, b1p, w2p, s2p, b2p)
    return out.reshape(N, Ho, Wo, Cout)


# ----------------------------------------------------------------------------
# Parameter construction (deterministic, in-script) and module forward.
# ----------------------------------------------------------------------------
def init_down_params(key, c_in, c_out):
    """Two (conv3x3, folded-BN) stages: c_in->c_out, c_out->c_out."""
    params = []
    for ci, co in ((c_in, c_out), (c_out, c_out)):
        key, wk = jax.random.split(key)
        fan_in = 3 * 3 * ci
        w = jax.random.normal(wk, (3, 3, ci, co), jnp.float32) * jnp.sqrt(2.0 / fan_in)
        gamma = jnp.ones((co,), jnp.float32)
        beta = 0.01 * jnp.arange(co, dtype=jnp.float32)
        running_mean = jnp.zeros((co,), jnp.float32)
        running_var = jnp.ones((co,), jnp.float32)
        eps = 1e-5
        scale = gamma / jnp.sqrt(running_var + eps)
        shift = beta - running_mean * scale
        params.append((w, scale, shift))
    return key, params


@jax.jit
def encoder2_forward(x_nchw, all_block_params):
    """Equivalent of Encoder2.forward: returns the list of skip tensors (NCHW)."""
    x = jnp.transpose(x_nchw, (0, 2, 3, 1))                   # NCHW -> NHWC once
    skips_nhwc = []
    for block_params in all_block_params:                     # each block = Down(...)
        x = down_block(x, block_params)
        skips_nhwc.append(x)
    # NCHW only at the public boundary to match the PyTorch layout; a consumer
    # that accepts NHWC should drop these transposes entirely.
    return [jnp.transpose(s, (0, 3, 1, 2)) for s in skips_nhwc]


# ----------------------------------------------------------------------------
# Plain-JAX reference of the same (assumed) Down block, for verification.
# ----------------------------------------------------------------------------
def _reference_down(x_nhwc, stage_params):
    N, H, W, C = x_nhwc.shape
    x = x_nhwc.reshape(N, H // 2, 2, W // 2, 2, C).max(axis=(2, 4))
    for (w, scale, shift) in stage_params:
        y = jax.lax.conv_general_dilated(
            x, w, window_strides=(1, 1), padding="SAME",
            dimension_numbers=("NHWC", "HWIO", "NHWC"),
            precision=jax.lax.Precision.HIGHEST)
        x = jnp.maximum(y * scale + shift, 0.0)
    return x


if __name__ == "__main__":
    encoder1_channels = [4, 8, 16]                  # small synthetic config
    in_chs = [3] + encoder1_channels[:-1]           # Down(3,4), Down(4,8), Down(8,16)
    out_chs = encoder1_channels

    key = jax.random.PRNGKey(0)
    key, xk = jax.random.split(key)
    x = jax.random.normal(xk, (2, 3, 16, 16), jnp.float32)    # NCHW like PyTorch

    all_block_params = []
    for ci, co in zip(in_chs, out_chs):
        key, p = init_down_params(key, ci, co)
        all_block_params.append(p)

    skips = encoder2_forward(x, all_block_params)
    skips = jax.block_until_ready(skips)

    expected = [(2, 4, 8, 8), (2, 8, 4, 4), (2, 16, 2, 2)]
    assert [tuple(s.shape) for s in skips] == expected, \
        [tuple(s.shape) for s in skips]

    # Numerical check against the plain-JAX reference chain.
    ref = jnp.transpose(x, (0, 2, 3, 1))                      # NHWC
    for s, p in zip(skips, all_block_params):
        ref = _reference_down(ref, p)
        got = jnp.transpose(s, (0, 2, 3, 1))
        assert bool(jnp.all(jnp.isfinite(s)))
        assert bool(jnp.allclose(got, ref, rtol=5e-2, atol=5e-2)), \
            float(jnp.max(jnp.abs(got - ref)))

    print("KERNEL_OK")
</pallas_src>

<mosaic_0001>
module attributes {stable_mosaic.version = 11 : i64} {
  func.func @_down_block_kernel(%arg0: i32, %arg1: memref<1x16x16x3xf32, #tpu.memory_space<vmem>>, %arg2: memref<27x4xf32, #tpu.memory_space<vmem>>, %arg3: memref<1x4xf32, #tpu.memory_space<vmem>>, %arg4: memref<1x4xf32, #tpu.memory_space<vmem>>, %arg5: memref<36x4xf32, #tpu.memory_space<vmem>>, %arg6: memref<1x4xf32, #tpu.memory_space<vmem>>, %arg7: memref<1x4xf32, #tpu.memory_space<vmem>>, %arg8: memref<1x64x4xf32, #tpu.memory_space<vmem>>, %arg9: memref<10x10x3xf32, #tpu.memory_space<vmem>>, %arg10: memref<10x10x4xf32, #tpu.memory_space<vmem>>) attributes {dimension_semantics = [#tpu.dimension_semantics<parallel>], iteration_bounds = array<i64: 2>, scalar_prefetch = 0 : i64, scratch_operands = 2 : i64, tpu.core_type = #tpu.core_type<tc>, window_params = [{transform_indices = @transform_0, window_bounds = array<i64: 1, 16, 16, 3>}, {pipeline_mode = #tpu.pipeline_mode<synchronous>, transform_indices = @transform_1, window_bounds = array<i64: 27, 4>}, {pipeline_mode = #tpu.pipeline_mode<synchronous>, transform_indices = @transform_2, window_bounds = array<i64: 1, 4>}, {pipeline_mode = #tpu.pipeline_mode<synchronous>, transform_indices = @transform_3, window_bounds = array<i64: 1, 4>}, {pipeline_mode = #tpu.pipeline_mode<synchronous>, transform_indices = @transform_4, window_bounds = array<i64: 36, 4>}, {pipeline_mode = #tpu.pipeline_mode<synchronous>, transform_indices = @transform_5, window_bounds = array<i64: 1, 4>}, {pipeline_mode = #tpu.pipeline_mode<synchronous>, transform_indices = @transform_6, window_bounds = array<i64: 1, 4>}, {transform_indices = @transform_7, window_bounds = array<i64: 1, 64, 4>}]} {
    %c0 = arith.constant 0 : index
    %c0_0 = arith.constant 0 : index
    %c0_1 = arith.constant 0 : index
    %c0_2 = arith.constant 0 : index
    %0 = vector.load %arg1[%c0, %c0_0, %c0_1, %c0_2] : memref<1x16x16x3xf32, #tpu.memory_space<vmem>>, vector<1x16x16x3xf32>
    %1 = vector.shape_cast %0 : vector<1x16x16x3xf32> to vector<16x16x3xf32>
    %2 = vector.shape_cast %1 : vector<16x16x3xf32> to vector<8x2x16x3xf32>
    %cst = arith.constant dense<0xFF800000> : vector<8x16x3xf32>
    %3 = vector.multi_reduction <maximumf>, %2, %cst [1] : vector<8x2x16x3xf32> to vector<8x16x3xf32>
    %4 = vector.shape_cast %3 : vector<8x16x3xf32> to vector<8x8x2x3xf32>
    %cst_3 = arith.constant dense<0xFF800000> : vector<8x8x3xf32>
    %5 = vector.multi_reduction <maximumf>, %4, %cst_3 [2] : vector<8x8x2x3xf32> to vector<8x8x3xf32>
    %cst_4 = arith.constant 0.000000e+00 : f32
    %6 = vector.broadcast %cst_4 : f32 to vector<10x10x3xf32>
    %c0_5 = arith.constant 0 : index
    %c0_6 = arith.constant 0 : index
    %c0_7 = arith.constant 0 : index
    %7 = vector.load %arg9[%c0_5, %c0_6, %c0_7] : memref<10x10x3xf32, #tpu.memory_space<vmem>>, vector<10x10x3xf32>
    tpu.vector_store %arg9[%c0_5, %c0_6, %c0_7], %6 {strides = array<i32>} : memref<10x10x3xf32, #tpu.memory_space<vmem>>, vector<10x10x3xf32>,
    %c1 = arith.constant 1 : index
    %c1_8 = arith.constant 1 : index
    %c0_9 = arith.constant 0 : index
    %8 = vector.load %arg9[%c1, %c1_8, %c0_9] : memref<10x10x3xf32, #tpu.memory_space<vmem>>, vector<8x8x3xf32>
    tpu.vector_store %arg9[%c1, %c1_8, %c0_9], %5 {strides = array<i32>} : memref<10x10x3xf32, #tpu.memory_space<vmem>>, vector<8x8x3xf32>,
    %c0_10 = arith.constant 0 : index
    %c0_11 = arith.constant 0 : index
    %c0_12 = arith.constant 0 : index
    %9 = vector.load %arg9[%c0_10, %c0_11, %c0_12] : memref<10x10x3xf32, #tpu.memory_space<vmem>>, vector<8x8x3xf32>
    %c0_13 = arith.constant 0 : index
    %c1_14 = arith.constant 1 : index
    %c0_15 = arith.constant 0 : index
    %10 = vector.load %arg9[%c0_13, %c1_14, %c0_15] : memref<10x10x3xf32, #tpu.memory_space<vmem>>, vector<8x8x3xf32>
    %c0_16 = arith.constant 0 : index
    %c2 = arith.constant 2 : index
    %c0_17 = arith.constant 0 : index
    %11 = vector.load %arg9[%c0_16, %c2, %c0_17] : memref<10x10x3xf32, #tpu.memory_space<vmem>>, vector<8x8x3xf32>
    %c1_18 = arith.constant 1 : index
    %c0_19 = arith.constant 0 : index
    %c0_20 = arith.constant 0 : index
    %12 = vector.load %arg9[%c1_18, %c0_19, %c0_20] : memref<10x10x3xf32, #tpu.memory_space<vmem>>, vector<8x8x3xf32>
    %c1_21 = arith.constant 1 : index
    %c1_22 = arith.constant 1 : index
    %c0_23 = arith.constant 0 : index
    %13 = vector.load %arg9[%c1_21, %c1_22, %c0_23] : memref<10x10x3xf32, #tpu.memory_space<vmem>>, vector<8x8x3xf32>
    %c1_24 = arith.constant 1 : index
    %c2_25 = arith.constant 2 : index
    %c0_26 = arith.constant 0 : index
    %14 = vector.load %arg9[%c1_24, %c2_25, %c0_26] : memref<10x10x3xf32, #tpu.memory_space<vmem>>, vector<8x8x3xf32>
    %c2_27 = arith.constant 2 : index
    %c0_28 = arith.constant 0 : index
    %c0_29 = arith.constant 0 : index
    %15 = vector.load %arg9[%c2_27, %c0_28, %c0_29] : memref<10x10x3xf32, #tpu.memory_space<vmem>>, vector<8x8x3xf32>
    %c2_30 = arith.constant 2 : index
    %c1_31 = arith.constant 1 : index
    %c0_32 = arith.constant 0 : index
    %16 = vector.load %arg9[%c2_30, %c1_31, %c0_32] : memref<10x10x3xf32, #tpu.memory_space<vmem>>, vector<8x8x3xf32>
    %c2_33 = arith.constant 2 : index
    %c2_34 = arith.constant 2 : index
    %c0_35 = arith.constant 0 : index
    %17 = vector.load %arg9[%c2_33, %c2_34, %c0_35] : memref<10x10x3xf32, #tpu.memory_space<vmem>>, vector<8x8x3xf32>
    %18 = tpu.concatenate %9, %10, %11, %12, %13, %14, %15, %16, %17 in 2 : vector<8x8x3xf32>, vector<8x8x3xf32>, vector<8x8x3xf32>, vector<8x8x3xf32>, vector<8x8x3xf32>, vector<8x8x3xf32>, vector<8x8x3xf32>, vector<8x8x3xf32>, vector<8x8x3xf32> -> vector<8x8x27xf32>
    %19 = vector.shape_cast %18 : vector<8x8x27xf32> to vector<64x27xf32>
    %c0_36 = arith.constant 0 : index
    %c0_37 = arith.constant 0 : index
    %20 = vector.load %arg2[%c0_36, %c0_37] : memref<27x4xf32, #tpu.memory_space<vmem>>, vector<27x4xf32>
    %cst_38 = arith.constant dense<0.000000e+00> : vector<64x4xf32>
    %21 = tpu.matmul %19, %20, %cst_38 {dimension_numbers = #tpu.dot_dimension_numbers<[1], [0], [0], [1], [0, 0, 1, 1], [], []>} : vector<64x27xf32>, vector<27x4xf32>, vector<64x4xf32> -> vector<64x4xf32>
    %c0_39 = arith.constant 0 : index
    %c0_40 = arith.constant 0 : index
    %22 = vector.load %arg3[%c0_39, %c0_40] : memref<1x4xf32, #tpu.memory_space<vmem>>, vector<1x4xf32>
    %23 = vector.broadcast %22 : vector<1x4xf32> to vector<64x4xf32>
    %24 = arith.mulf %21, %23 : vector<64x4xf32>
    %c0_41 = arith.constant 0 : index
    %c0_42 = arith.constant 0 : index
    %25 = vector.load %arg4[%c0_41, %c0_42] : memref<1x4xf32, #tpu.memory_space<vmem>>, vector<1x4xf32>
    %26 = vector.broadcast %25 : vector<1x4xf32> to vector<64x4xf32>
    %27 = arith.addf %24, %26 : vector<64x4xf32>
    %cst_43 = arith.constant 0.000000e+00 : f32
    %28 = vector.broadcast %cst_43 : f32 to vector<64x4xf32>
    %29 = arith.maximumf %27, %28 : vector<64x4xf32>
    %cst_44 = arith.constant 0.000000e+00 : f32
    %30 = vector.broadcast %cst_44 : f32 to vector<10x10x4xf32>
    %c0_45 = arith.constant 0 : index
    %c0_46 = arith.constant 0 : index
    %c0_47 = arith.constant 0 : index
    %31 = vector.load %arg10[%c0_45, %c0_46, %c0_47] : memref<10x10x4xf32, #tpu.memory_space<vmem>>, vector<10x10x4xf32>
    tpu.vector_store %arg10[%c0_45, %c0_46, %c0_47], %30 {strides = array<i32>} : memref<10x10x4xf32, #tpu.memory_space<vmem>>, vector<10x10x4xf32>,
    %32 = vector.shape_cast %29 : vector<64x4xf32> to vector<8x8x4xf32>
    %c1_48 = arith.constant 1 : index
    %c1_49 = arith.constant 1 : index
    %c0_50 = arith.constant 0 : index
    %33 = vector.load %arg10[%c1_48, %c1_49, %c0_50] : memref<10x10x4xf32, #tpu.memory_space<vmem>>, vector<8x8x4xf32>
    tpu.vector_store %arg10[%c1_48, %c1_49, %c0_50], %32 {strides = array<i32>} : memref<10x10x4xf32, #tpu.memory_space<vmem>>, vector<8x8x4xf32>,
    %c0_51 = arith.constant 0 : index
    %c0_52 = arith.constant 0 : index
    %c0_53 = arith.constant 0 : index
    %34 = vector.load %arg10[%c0_51, %c0_52, %c0_53] : memref<10x10x4xf32, #tpu.memory_space<vmem>>, vector<8x8x4xf32>
    %c0_54 = arith.constant 0 : index
    %c1_55 = arith.constant 1 : index
    %c0_56 = arith.constant 0 : index
    %35 = vector.load %arg10[%c0_54, %c1_55, %c0_56] : memref<10x10x4xf32, #tpu.memory_space<vmem>>, vector<8x8x4xf32>
    %c0_57 = arith.constant 0 : index
    %c2_58 = arith.constant 2 : index
    %c0_59 = arith.constant 0 : index
    %36 = vector.load %arg10[%c0_57, %c2_58, %c0_59] : memref<10x10x4xf32, #tpu.memory_space<vmem>>, vector<8x8x4xf32>
    %c1_60 = arith.constant 1 : index
    %c0_61 = arith.constant 0 : index
    %c0_62 = arith.constant 0 : index
    %37 = vector.load %arg10[%c1_60, %c0_61, %c0_62] : memref<10x10x4xf32, #tpu.memory_space<vmem>>, vector<8x8x4xf32>
    %c1_63 = arith.constant 1 : index
    %c1_64 = arith.constant 1 : index
    %c0_65 = arith.constant 0 : index
    %38 = vector.load %arg10[%c1_63, %c1_64, %c0_65] : memref<10x10x4xf32, #tpu.memory_space<vmem>>, vector<8x8x4xf32>
    %c1_66 = arith.constant 1 : index
    %c2_67 = arith.constant 2 : index
    %c0_68 = arith.constant 0 : index
    %39 = vector.load %arg10[%c1_66, %c2_67, %c0_68] : memref<10x10x4xf32, #tpu.memory_space<vmem>>, vector<8x8x4xf32>
    %c2_69 = arith.constant 2 : index
    %c0_70 = arith.constant 0 : index
    %c0_71 = arith.constant 0 : index
    %40 = vector.load %arg10[%c2_69, %c0_70, %c0_71] : memref<10x10x4xf32, #tpu.memory_space<vmem>>, vector<8x8x4xf32>
    %c2_72 = arith.constant 2 : index
    %c1_73 = arith.constant 1 : index
    %c0_74 = arith.constant 0 : index
    %41 = vector.load %arg10[%c2_72, %c1_73, %c0_74] : memref<10x10x4xf32, #tpu.memory_space<vmem>>, vector<8x8x4xf32>
    %c2_75 = arith.constant 2 : index
    %c2_76 = arith.constant 2 : index
    %c0_77 = arith.constant 0 : index
    %42 = vector.load %arg10[%c2_75, %c2_76, %c0_77] : memref<10x10x4xf32, #tpu.memory_space<vmem>>, vector<8x8x4xf32>
    %43 = tpu.concatenate %34, %35, %36, %37, %38, %39, %40, %41, %42 in 2 : vector<8x8x4xf32>, vector<8x8x4xf32>, vector<8x8x4xf32>, vector<8x8x4xf32>, vector<8x8x4xf32>, vector<8x8x4xf32>, vector<8x8x4xf32>, vector<8x8x4xf32>, vector<8x8x4xf32> -> vector<8x8x36xf32>
    %44 = vector.shape_cast %43 : vector<8x8x36xf32> to vector<64x36xf32>
    %c0_78 = arith.constant 0 : index
    %c0_79 = arith.constant 0 : index
    %45 = vector.load %arg5[%c0_78, %c0_79] : memref<36x4xf32, #tpu.memory_space<vmem>>, vector<36x4xf32>
    %cst_80 = arith.constant dense<0.000000e+00> : vector<64x4xf32>
    %46 = tpu.matmul %44, %45, %cst_80 {dimension_numbers = #tpu.dot_dimension_numbers<[1], [0], [0], [1], [0, 0, 1, 1], [], []>} : vector<64x36xf32>, vector<36x4xf32>, vector<64x4xf32> -> vector<64x4xf32>
    %c0_81 = arith.constant 0 : index
    %c0_82 = arith.constant 0 : index
    %47 = vector.load %arg6[%c0_81, %c0_82] : memref<1x4xf32, #tpu.memory_space<vmem>>, vector<1x4xf32>
    %48 = vector.broadcast %47 : vector<1x4xf32> to vector<64x4xf32>
    %49 = arith.mulf %46, %48 : vector<64x4xf32>
    %c0_83 = arith.constant 0 : index
    %c0_84 = arith.constant 0 : index
    %50 = vector.load %arg7[%c0_83, %c0_84] : memref<1x4xf32, #tpu.memory_space<vmem>>, vector<1x4xf32>
    %51 = vector.broadcast %50 : vector<1x4xf32> to vector<64x4xf32>
    %52 = arith.addf %49, %51 : vector<64x4xf32>
    %cst_85 = arith.constant 0.000000e+00 : f32
    %53 = vector.broadcast %cst_85 : f32 to vector<64x4xf32>
    %54 = arith.maximumf %52, %53 : vector<64x4xf32>
    %c0_86 = arith.constant 0 : index
    %c0_87 = arith.constant 0 : index
    %c0_88 = arith.constant 0 : index
    %55 = vector.load %arg8[%c0_86, %c0_87, %c0_88] : memref<1x64x4xf32, #tpu.memory_space<vmem>>, vector<1x64x4xf32>
    %56 = vector.shape_cast %55 : vector<1x64x4xf32> to vector<64x4xf32>
    %57 = vector.shape_cast %54 : vector<64x4xf32> to vector<1x64x4xf32>
    tpu.vector_store %arg8[%c0_86, %c0_87, %c0_88], %57 {strides = array<i32>} : memref<1x64x4xf32, #tpu.memory_space<vmem>>, vector<1x64x4xf32>,
    return
  }
  func.func @transform_0(%arg0: i32) -> (i32, i32, i32, i32) {
    %c0_i32 = arith.constant 0 : i32
    %c0_i32_0 = arith.constant 0 : i32
    %c0_i32_1 = arith.constant 0 : i32
    %c0_i32_2 = arith.constant 0 : i32
    return %arg0, %c0_i32, %c0_i32_0, %c0_i32_1 : i32, i32, i32, i32
  }
  func.func @transform_1(%arg0: i32) -> (i32, i32) {
    %c0_i32 = arith.constant 0 : i32
    %c0_i32_0 = arith.constant 0 : i32
    %c0_i32_1 = arith.constant 0 : i32
    return %c0_i32, %c0_i32_0 : i32, i32
  }
  func.func @transform_2(%arg0: i32) -> (i32, i32) {
    %c0_i32 = arith.constant 0 : i32
    %c0_i32_0 = arith.constant 0 : i32
    %c0_i32_1 = arith.constant 0 : i32
    return %c0_i32, %c0_i32_0 : i32, i32
  }
  func.func @transform_3(%arg0: i32) -> (i32, i32) {
    %c0_i32 = arith.constant 0 : i32
    %c0_i32_0 = arith.constant 0 : i32
    %c0_i32_1 = arith.constant 0 : i32
    return %c0_i32, %c0_i32_0 : i32, i32
  }
  func.func @transform_4(%arg0: i32) -> (i32, i32) {
    %c0_i32 = arith.constant 0 : i32
    %c0_i32_0 = arith.constant 0 : i32
    %c0_i32_1 = arith.constant 0 : i32
    return %c0_i32, %c0_i32_0 : i32, i32
  }
  func.func @transform_5(%arg0: i32) -> (i32, i32) {
    %c0_i32 = arith.constant 0 : i32
    %c0_i32_0 = arith.constant 0 : i32
    %c0_i32_1 = arith.constant 0 : i32
    return %c0_i32, %c0_i32_0 : i32, i32
  }
  func.func @transform_6(%arg0: i32) -> (i32, i32) {
    %c0_i32 = arith.constant 0 : i32
    %c0_i32_0 = arith.constant 0 : i32
    %c0_i32_1 = arith.constant 0 : i32
    return %c0_i32, %c0_i32_0 : i32, i32
  }
  func.func @transform_7(%arg0: i32) -> (i32, i32, i32) {
    %c0_i32 = arith.constant 0 : i32
    %c0_i32_0 = arith.constant 0 : i32
    %c0_i32_1 = arith.constant 0 : i32
    return %arg0, %c0_i32, %c0_i32_0 : i32, i32, i32
  }
}

module attributes {stable_mosaic.version = 11 : i64} {
  func.func @_down_block_kernel(%arg0: i32, %arg1: memref<1x8x8x4xf32, #tpu.memory_space<vmem>>, %arg2: memref<36x8xf32, #tpu.memory_space<vmem>>, %arg3: memref<1x8xf32, #tpu.memory_space<vmem>>, %arg4: memref<1x8xf32, #tpu.memory_space<vmem>>, %arg5: memref<72x8xf32, #tpu.memory_space<vmem>>, %arg6: memref<1x8xf32, #tpu.memory_space<vmem>>, %arg7: memref<1x8xf32, #tpu.memory_space<vmem>>, %arg8: memref<1x16x8xf32, #tpu.memory_space<vmem>>, %arg9: memref<6x6x4xf32, #tpu.memory_space<vmem>>, %arg10: memref<6x6x8xf32, #tpu.memory_space<vmem>>) attributes {dimension_semantics = [#tpu.dimension_semantics<parallel>], iteration_bounds = array<i64: 2>, scalar_prefetch = 0 : i64, scratch_operands = 2 : i64, tpu.core_type = #tpu.core_type<tc>, window_params = [{transform_indices = @transform_0, window_bounds = array<i64: 1, 8, 8, 4>}, {pipeline_mode = #tpu.pipeline_mode<synchronous>, transform_indices = @transform_1, window_bounds = array<i64: 36, 8>}, {pipeline_mode = #tpu.pipeline_mode<synchronous>, transform_indices = @transform_2, window_bounds = array<i64: 1, 8>}, {pipeline_mode = #tpu.pipeline_mode<synchronous>, transform_indices = @transform_3, window_bounds = array<i64: 1, 8>}, {pipeline_mode = #tpu.pipeline_mode<synchronous>, transform_indices = @transform_4, window_bounds = array<i64: 72, 8>}, {pipeline_mode = #tpu.pipeline_mode<synchronous>, transform_indices = @transform_5, window_bounds = array<i64: 1, 8>}, {pipeline_mode = #tpu.pipeline_mode<synchronous>, transform_indices = @transform_6, window_bounds = array<i64: 1, 8>}, {transform_indices = @transform_7, window_bounds = array<i64: 1, 16, 8>}]} {
    %c0 = arith.constant 0 : index
    %c0_0 = arith.constant 0 : index
    %c0_1 = arith.constant 0 : index
    %c0_2 = arith.constant 0 : index
    %0 = vector.load %arg1[%c0, %c0_0, %c0_1, %c0_2] : memref<1x8x8x4xf32, #tpu.memory_space<vmem>>, vector<1x8x8x4xf32>
    %1 = vector.shape_cast %0 : vector<1x8x8x4xf32> to vector<8x8x4xf32>
    %2 = vector.shape_cast %1 : vector<8x8x4xf32> to vector<4x2x8x4xf32>
    %cst = arith.constant dense<0xFF800000> : vector<4x8x4xf32>
    %3 = vector.multi_reduction <maximumf>, %2, %cst [1] : vector<4x2x8x4xf32> to vector<4x8x4xf32>
    %4 = vector.shape_cast %3 : vector<4x8x4xf32> to vector<4x4x2x4xf32>
    %cst_3 = arith.constant dense<0xFF800000> : vector<4x4x4xf32>
    %5 = vector.multi_reduction <maximumf>, %4, %cst_3 [2] : vector<4x4x2x4xf32> to vector<4x4x4xf32>
    %cst_4 = arith.constant 0.000000e+00 : f32
    %6 = vector.broadcast %cst_4 : f32 to vector<6x6x4xf32>
    %c0_5 = arith.constant 0 : index
    %c0_6 = arith.constant 0 : index
    %c0_7 = arith.constant 0 : index
    %7 = vector.load %arg9[%c0_5, %c0_6, %c0_7] : memref<6x6x4xf32, #tpu.memory_space<vmem>>, vector<6x6x4xf32>
    tpu.vector_store %arg9[%c0_5, %c0_6, %c0_7], %6 {strides = array<i32>} : memref<6x6x4xf32, #tpu.memory_space<vmem>>, vector<6x6x4xf32>,
    %c1 = arith.constant 1 : index
    %c1_8 = arith.constant 1 : index
    %c0_9 = arith.constant 0 : index
    %8 = vector.load %arg9[%c1, %c1_8, %c0_9] : memref<6x6x4xf32, #tpu.memory_space<vmem>>, vector<4x4x4xf32>
    tpu.vector_store %arg9[%c1, %c1_8, %c0_9], %5 {strides = array<i32>} : memref<6x6x4xf32, #tpu.memory_space<vmem>>, vector<4x4x4xf32>,
    %c0_10 = arith.constant 0 : index
    %c0_11 = arith.constant 0 : index
    %c0_12 = arith.constant 0 : index
    %9 = vector.load %arg9[%c0_10, %c0_11, %c0_12] : memref<6x6x4xf32, #tpu.memory_space<vmem>>, vector<4x4x4xf32>
    %c0_13 = arith.constant 0 : index
    %c1_14 = arith.constant 1 : index
    %c0_15 = arith.constant 0 : index
    %10 = vector.load %arg9[%c0_13, %c1_14, %c0_15] : memref<6x6x4xf32, #tpu.memory_space<vmem>>, vector<4x4x4xf32>
    %c0_16 = arith.constant 0 : index
    %c2 = arith.constant 2 : index
    %c0_17 = arith.constant 0 : index
    %11 = vector.load %arg9[%c0_16, %c2, %c0_17] : memref<6x6x4xf32, #tpu.memory_space<vmem>>, vector<4x4x4xf32>
    %c1_18 = arith.constant 1 : index
    %c0_19 = arith.constant 0 : index
    %c0_20 = arith.constant 0 : index
    %12 = vector.load %arg9[%c1_18, %c0_19, %c0_20] : memref<6x6x4xf32, #tpu.memory_space<vmem>>, vector<4x4x4xf32>
    %c1_21 = arith.constant 1 : index
    %c1_22 = arith.constant 1 : index
    %c0_23 = arith.constant 0 : index
    %13 = vector.load %arg9[%c1_21, %c1_22, %c0_23] : memref<6x6x4xf32, #tpu.memory_space<vmem>>, vector<4x4x4xf32>
    %c1_24 = arith.constant 1 : index
    %c2_25 = arith.constant 2 : index
    %c0_26 = arith.constant 0 : index
    %14 = vector.load %arg9[%c1_24, %c2_25, %c0_26] : memref<6x6x4xf32, #tpu.memory_space<vmem>>, vector<4x4x4xf32>
    %c2_27 = arith.constant 2 : index
    %c0_28 = arith.constant 0 : index
    %c0_29 = arith.constant 0 : index
    %15 = vector.load %arg9[%c2_27, %c0_28, %c0_29] : memref<6x6x4xf32, #tpu.memory_space<vmem>>, vector<4x4x4xf32>
    %c2_30 = arith.constant 2 : index
    %c1_31 = arith.constant 1 : index
    %c0_32 = arith.constant 0 : index
    %16 = vector.load %arg9[%c2_30, %c1_31, %c0_32] : memref<6x6x4xf32, #tpu.memory_space<vmem>>, vector<4x4x4xf32>
    %c2_33 = arith.constant 2 : index
    %c2_34 = arith.constant 2 : index
    %c0_35 = arith.constant 0 : index
    %17 = vector.load %arg9[%c2_33, %c2_34, %c0_35] : memref<6x6x4xf32, #tpu.memory_space<vmem>>, vector<4x4x4xf32>
    %18 = tpu.concatenate %9, %10, %11, %12, %13, %14, %15, %16, %17 in 2 : vector<4x4x4xf32>, vector<4x4x4xf32>, vector<4x4x4xf32>, vector<4x4x4xf32>, vector<4x4x4xf32>, vector<4x4x4xf32>, vector<4x4x4xf32>, vector<4x4x4xf32>, vector<4x4x4xf32> -> vector<4x4x36xf32>
    %19 = vector.shape_cast %18 : vector<4x4x36xf32> to vector<16x36xf32>
    %c0_36 = arith.constant 0 : index
    %c0_37 = arith.constant 0 : index
    %20 = vector.load %arg2[%c0_36, %c0_37] : memref<36x8xf32, #tpu.memory_space<vmem>>, vector<36x8xf32>
    %cst_38 = arith.constant dense<0.000000e+00> : vector<16x8xf32>
    %21 = tpu.matmul %19, %20, %cst_38 {dimension_numbers = #tpu.dot_dimension_numbers<[1], [0], [0], [1], [0, 0, 1, 1], [], []>} : vector<16x36xf32>, vector<36x8xf32>, vector<16x8xf32> -> vector<16x8xf32>
    %c0_39 = arith.constant 0 : index
    %c0_40 = arith.constant 0 : index
    %22 = vector.load %arg3[%c0_39, %c0_40] : memref<1x8xf32, #tpu.memory_space<vmem>>, vector<1x8xf32>
    %23 = vector.broadcast %22 : vector<1x8xf32> to vector<16x8xf32>
    %24 = arith.mulf %21, %23 : vector<16x8xf32>
    %c0_41 = arith.constant 0 : index
    %c0_42 = arith.constant 0 : index
    %25 = vector.load %arg4[%c0_41, %c0_42] : memref<1x8xf32, #tpu.memory_space<vmem>>, vector<1x8xf32>
    %26 = vector.broadcast %25 : vector<1x8xf32> to vector<16x8xf32>
    %27 = arith.addf %24, %26 : vector<16x8xf32>
    %cst_43 = arith.constant 0.000000e+00 : f32
    %28 = vector.broadcast %cst_43 : f32 to vector<16x8xf32>
    %29 = arith.maximumf %27, %28 : vector<16x8xf32>
    %cst_44 = arith.constant 0.000000e+00 : f32
    %30 = vector.broadcast %cst_44 : f32 to vector<6x6x8xf32>
    %c0_45 = arith.constant 0 : index
    %c0_46 = arith.constant 0 : index
    %c0_47 = arith.constant 0 : index
    %31 = vector.load %arg10[%c0_45, %c0_46, %c0_47] : memref<6x6x8xf32, #tpu.memory_space<vmem>>, vector<6x6x8xf32>
    tpu.vector_store %arg10[%c0_45, %c0_46, %c0_47], %30 {strides = array<i32>} : memref<6x6x8xf32, #tpu.memory_space<vmem>>, vector<6x6x8xf32>,
    %32 = vector.shape_cast %29 : vector<16x8xf32> to vector<4x4x8xf32>
    %c1_48 = arith.constant 1 : index
    %c1_49 = arith.constant 1 : index
    %c0_50 = arith.constant 0 : index
    %33 = vector.load %arg10[%c1_48, %c1_49, %c0_50] : memref<6x6x8xf32, #tpu.memory_space<vmem>>, vector<4x4x8xf32>
    tpu.vector_store %arg10[%c1_48, %c1_49, %c0_50], %32 {strides = array<i32>} : memref<6x6x8xf32, #tpu.memory_space<vmem>>, vector<4x4x8xf32>,
    %c0_51 = arith.constant 0 : index
    %c0_52 = arith.constant 0 : index
    %c0_53 = arith.constant 0 : index
    %34 = vector.load %arg10[%c0_51, %c0_52, %c0_53] : memref<6x6x8xf32, #tpu.memory_space<vmem>>, vector<4x4x8xf32>
    %c0_54 = arith.constant 0 : index
    %c1_55 = arith.constant 1 : index
    %c0_56 = arith.constant 0 : index
    %35 = vector.load %arg10[%c0_54, %c1_55, %c0_56] : memref<6x6x8xf32, #tpu.memory_space<vmem>>, vector<4x4x8xf32>
    %c0_57 = arith.constant 0 : index
    %c2_58 = arith.constant 2 : index
    %c0_59 = arith.constant 0 : index
    %36 = vector.load %arg10[%c0_57, %c2_58, %c0_59] : memref<6x6x8xf32, #tpu.memory_space<vmem>>, vector<4x4x8xf32>
    %c1_60 = arith.constant 1 : index
    %c0_61 = arith.constant 0 : index
    %c0_62 = arith.constant 0 : index
    %37 = vector.load %arg10[%c1_60, %c0_61, %c0_62] : memref<6x6x8xf32, #tpu.memory_space<vmem>>, vector<4x4x8xf32>
    %c1_63 = arith.constant 1 : index
    %c1_64 = arith.constant 1 : index
    %c0_65 = arith.constant 0 : index
    %38 = vector.load %arg10[%c1_63, %c1_64, %c0_65] : memref<6x6x8xf32, #tpu.memory_space<vmem>>, vector<4x4x8xf32>
    %c1_66 = arith.constant 1 : index
    %c2_67 = arith.constant 2 : index
    %c0_68 = arith.constant 0 : index
    %39 = vector.load %arg10[%c1_66, %c2_67, %c0_68] : memref<6x6x8xf32, #tpu.memory_space<vmem>>, vector<4x4x8xf32>
    %c2_69 = arith.constant 2 : index
    %c0_70 = arith.constant 0 : index
    %c0_71 = arith.constant 0 : index
    %40 = vector.load %arg10[%c2_69, %c0_70, %c0_71] : memref<6x6x8xf32, #tpu.memory_space<vmem>>, vector<4x4x8xf32>
    %c2_72 = arith.constant 2 : index
    %c1_73 = arith.constant 1 : index
    %c0_74 = arith.constant 0 : index
    %41 = vector.load %arg10[%c2_72, %c1_73, %c0_74] : memref<6x6x8xf32, #tpu.memory_space<vmem>>, vector<4x4x8xf32>
    %c2_75 = arith.constant 2 : index
    %c2_76 = arith.constant 2 : index
    %c0_77 = arith.constant 0 : index
    %42 = vector.load %arg10[%c2_75, %c2_76, %c0_77] : memref<6x6x8xf32, #tpu.memory_space<vmem>>, vector<4x4x8xf32>
    %43 = tpu.concatenate %34, %35, %36, %37, %38, %39, %40, %41, %42 in 2 : vector<4x4x8xf32>, vector<4x4x8xf32>, vector<4x4x8xf32>, vector<4x4x8xf32>, vector<4x4x8xf32>, vector<4x4x8xf32>, vector<4x4x8xf32>, vector<4x4x8xf32>, vector<4x4x8xf32> -> vector<4x4x72xf32>
    %44 = vector.shape_cast %43 : vector<4x4x72xf32> to vector<16x72xf32>
    %c0_78 = arith.constant 0 : index
    %c0_79 = arith.constant 0 : index
    %45 = vector.load %arg5[%c0_78, %c0_79] : memref<72x8xf32, #tpu.memory_space<vmem>>, vector<72x8xf32>
    %cst_80 = arith.constant dense<0.000000e+00> : vector<16x8xf32>
    %46 = tpu.matmul %44, %45, %cst_80 {dimension_numbers = #tpu.dot_dimension_numbers<[1], [0], [0], [1], [0, 0, 1, 1], [], []>} : vector<16x72xf32>, vector<72x8xf32>, vector<16x8xf32> -> vector<16x8xf32>
    %c0_81 = arith.constant 0 : index
    %c0_82 = arith.constant 0 : index
    %47 = vector.load %arg6[%c0_81, %c0_82] : memref<1x8xf32, #tpu.memory_space<vmem>>, vector<1x8xf32>
    %48 = vector.broadcast %47 : vector<1x8xf32> to vector<16x8xf32>
    %49 = arith.mulf %46, %48 : vector<16x8xf32>
    %c0_83 = arith.constant 0 : index
    %c0_84 = arith.constant 0 : index
    %50 = vector.load %arg7[%c0_83, %c0_84] : memref<1x8xf32, #tpu.memory_space<vmem>>, vector<1x8xf32>
    %51 = vector.broadcast %50 : vector<1x8xf32> to vector<16x8xf32>
    %52 = arith.addf %49, %51 : vector<16x8xf32>
    %cst_85 = arith.constant 0.000000e+00 : f32
    %53 = vector.broadcast %cst_85 : f32 to vector<16x8xf32>
    %54 = arith.maximumf %52, %53 : vector<16x8xf32>
    %c0_86 = arith.constant 0 : index
    %c0_87 = arith.constant 0 : index
    %c0_88 = arith.constant 0 : index
    %55 = vector.load %arg8[%c0_86, %c0_87, %c0_88] : memref<1x16x8xf32, #tpu.memory_space<vmem>>, vector<1x16x8xf32>
    %56 = vector.shape_cast %55 : vector<1x16x8xf32> to vector<16x8xf32>
    %57 = vector.shape_cast %54 : vector<16x8xf32> to vector<1x16x8xf32>
    tpu.vector_store %arg8[%c0_86, %c0_87, %c0_88], %57 {strides = array<i32>} : memref<1x16x8xf32, #tpu.memory_space<vmem>>, vector<1x16x8xf32>,
    return
  }
  func.func @transform_0(%arg0: i32) -> (i32, i32, i32, i32) {
    %c0_i32 = arith.constant 0 : i32
    %c0_i32_0 = arith.constant 0 : i32
    %c0_i32_1 = arith.constant 0 : i32
    %c0_i32_2 = arith.constant 0 : i32
    return %arg0, %c0_i32, %c0_i32_0, %c0_i32_1 : i32, i32, i32, i32
  }
  func.func @transform_1(%arg0: i32) -> (i32, i32) {
    %c0_i32 = arith.constant 0 : i32
    %c0_i32_0 = arith.constant 0 : i32
    %c0_i32_1 = arith.constant 0 : i32
    return %c0_i32, %c0_i32_0 : i32, i32
  }
  func.func @transform_2(%arg0: i32) -> (i32, i32) {
    %c0_i32 = arith.constant 0 : i32
    %c0_i32_0 = arith.constant 0 : i32
    %c0_i32_1 = arith.constant 0 : i32
    return %c0_i32, %c0_i32_0 : i32, i32
  }
  func.func @transform_3(%arg0: i32) -> (i32, i32) {
    %c0_i32 = arith.constant 0 : i32
    %c0_i32_0 = arith.constant 0 : i32
    %c0_i32_1 = arith.constant 0 : i32
    return %c0_i32, %c0_i32_0 : i32, i32
  }
  func.func @transform_4(%arg0: i32) -> (i32, i32) {
    %c0_i32 = arith.constant 0 : i32
    %c0_i32_0 = arith.constant 0 : i32
    %c0_i32_1 = arith.constant 0 : i32
    return %c0_i32, %c0_i32_0 : i32, i32
  }
  func.func @transform_5(%arg0: i32) -> (i32, i32) {
    %c0_i32 = arith.constant 0 : i32
    %c0_i32_0 = arith.constant 0 : i32
    %c0_i32_1 = arith.constant 0 : i32
    return %c0_i32, %c0_i32_0 : i32, i32
  }
  func.func @transform_6(%arg0: i32) -> (i32, i32) {
    %c0_i32 = arith.constant 0 : i32
    %c0_i32_0 = arith.constant 0 : i32
    %c0_i32_1 = arith.constant 0 : i32
    return %c0_i32, %c0_i32_0 : i32, i32
  }
  func.func @transform_7(%arg0: i32) -> (i32, i32, i32) {
    %c0_i32 = arith.constant 0 : i32
    %c0_i32_0 = arith.constant 0 : i32
    %c0_i32_1 = arith.constant 0 : i32
    return %arg0, %c0_i32, %c0_i32_0 : i32, i32, i32
  }
}

module attributes {stable_mosaic.version = 11 : i64} {
  func.func @_down_block_kernel(%arg0: i32, %arg1: memref<1x4x4x8xf32, #tpu.memory_space<vmem>>, %arg2: memref<72x16xf32, #tpu.memory_space<vmem>>, %arg3: memref<1x16xf32, #tpu.memory_space<vmem>>, %arg4: memref<1x16xf32, #tpu.memory_space<vmem>>, %arg5: memref<144x16xf32, #tpu.memory_space<vmem>>, %arg6: memref<1x16xf32, #tpu.memory_space<vmem>>, %arg7: memref<1x16xf32, #tpu.memory_space<vmem>>, %arg8: memref<1x4x16xf32, #tpu.memory_space<vmem>>, %arg9: memref<4x4x8xf32, #tpu.memory_space<vmem>>, %arg10: memref<4x4x16xf32, #tpu.memory_space<vmem>>) attributes {dimension_semantics = [#tpu.dimension_semantics<parallel>], iteration_bounds = array<i64: 2>, scalar_prefetch = 0 : i64, scratch_operands = 2 : i64, tpu.core_type = #tpu.core_type<tc>, window_params = [{transform_indices = @transform_0, window_bounds = array<i64: 1, 4, 4, 8>}, {pipeline_mode = #tpu.pipeline_mode<synchronous>, transform_indices = @transform_1, window_bounds = array<i64: 72, 16>}, {pipeline_mode = #tpu.pipeline_mode<synchronous>, transform_indices = @transform_2, window_bounds = array<i64: 1, 16>}, {pipeline_mode = #tpu.pipeline_mode<synchronous>, transform_indices = @transform_3, window_bounds = array<i64: 1, 16>}, {pipeline_mode = #tpu.pipeline_mode<synchronous>, transform_indices = @transform_4, window_bounds = array<i64: 144, 16>}, {pipeline_mode = #tpu.pipeline_mode<synchronous>, transform_indices = @transform_5, window_bounds = array<i64: 1, 16>}, {pipeline_mode = #tpu.pipeline_mode<synchronous>, transform_indices = @transform_6, window_bounds = array<i64: 1, 16>}, {transform_indices = @transform_7, window_bounds = array<i64: 1, 4, 16>}]} {
    %c0 = arith.constant 0 : index
    %c0_0 = arith.constant 0 : index
    %c0_1 = arith.constant 0 : index
    %c0_2 = arith.constant 0 : index
    %0 = vector.load %arg1[%c0, %c0_0, %c0_1, %c0_2] : memref<1x4x4x8xf32, #tpu.memory_space<vmem>>, vector<1x4x4x8xf32>
    %1 = vector.shape_cast %0 : vector<1x4x4x8xf32> to vector<4x4x8xf32>
    %2 = vector.shape_cast %1 : vector<4x4x8xf32> to vector<2x2x4x8xf32>
    %cst = arith.constant dense<0xFF800000> : vector<2x4x8xf32>
    %3 = vector.multi_reduction <maximumf>, %2, %cst [1] : vector<2x2x4x8xf32> to vector<2x4x8xf32>
    %4 = vector.shape_cast %3 : vector<2x4x8xf32> to vector<2x2x2x8xf32>
    %cst_3 = arith.constant dense<0xFF800000> : vector<2x2x8xf32>
    %5 = vector.multi_reduction <maximumf>, %4, %cst_3 [2] : vector<2x2x2x8xf32> to vector<2x2x8xf32>
    %cst_4 = arith.constant 0.000000e+00 : f32
    %6 = vector.broadcast %cst_4 : f32 to vector<4x4x8xf32>
    %c0_5 = arith.constant 0 : index
    %c0_6 = arith.constant 0 : index
    %c0_7 = arith.constant 0 : index
    %7 = vector.load %arg9[%c0_5, %c0_6, %c0_7] : memref<4x4x8xf32, #tpu.memory_space<vmem>>, vector<4x4x8xf32>
    tpu.vector_store %arg9[%c0_5, %c0_6, %c0_7], %6 {strides = array<i32>} : memref<4x4x8xf32, #tpu.memory_space<vmem>>, vector<4x4x8xf32>,
    %c1 = arith.constant 1 : index
    %c1_8 = arith.constant 1 : index
    %c0_9 = arith.constant 0 : index
    %8 = vector.load %arg9[%c1, %c1_8, %c0_9] : memref<4x4x8xf32, #tpu.memory_space<vmem>>, vector<2x2x8xf32>
    tpu.vector_store %arg9[%c1, %c1_8, %c0_9], %5 {strides = array<i32>} : memref<4x4x8xf32, #tpu.memory_space<vmem>>, vector<2x2x8xf32>,
    %c0_10 = arith.constant 0 : index
    %c0_11 = arith.constant 0 : index
    %c0_12 = arith.constant 0 : index
    %9 = vector.load %arg9[%c0_10, %c0_11, %c0_12] : memref<4x4x8xf32, #tpu.memory_space<vmem>>, vector<2x2x8xf32>
    %c0_13 = arith.constant 0 : index
    %c1_14 = arith.constant 1 : index
    %c0_15 = arith.constant 0 : index
    %10 = vector.load %arg9[%c0_13, %c1_14, %c0_15] : memref<4x4x8xf32, #tpu.memory_space<vmem>>, vector<2x2x8xf32>
    %c0_16 = arith.constant 0 : index
    %c2 = arith.constant 2 : index
    %c0_17 = arith.constant 0 : index
    %11 = vector.load %arg9[%c0_16, %c2, %c0_17] : memref<4x4x8xf32, #tpu.memory_space<vmem>>, vector<2x2x8xf32>
    %c1_18 = arith.constant 1 : index
    %c0_19 = arith.constant 0 : index
    %c0_20 = arith.constant 0 : index
    %12 = vector.load %arg9[%c1_18, %c0_19, %c0_20] : memref<4x4x8xf32, #tpu.memory_space<vmem>>, vector<2x2x8xf32>
    %c1_21 = arith.constant 1 : index
    %c1_22 = arith.constant 1 : index
    %c0_23 = arith.constant 0 : index
    %13 = vector.load %arg9[%c1_21, %c1_22, %c0_23] : memref<4x4x8xf32, #tpu.memory_space<vmem>>, vector<2x2x8xf32>
    %c1_24 = arith.constant 1 : index
    %c2_25 = arith.constant 2 : index
    %c0_26 = arith.constant 0 : index
    %14 = vector.load %arg9[%c1_24, %c2_25, %c0_26] : memref<4x4x8xf32, #tpu.memory_space<vmem>>, vector<2x2x8xf32>
    %c2_27 = arith.constant 2 : index
    %c0_28 = arith.constant 0 : index
    %c0_29 = arith.constant 0 : index
    %15 = vector.load %arg9[%c2_27, %c0_28, %c0_29] : memref<4x4x8xf32, #tpu.memory_space<vmem>>, vector<2x2x8xf32>
    %c2_30 = arith.constant 2 : index
    %c1_31 = arith.constant 1 : index
    %c0_32 = arith.constant 0 : index
    %16 = vector.load %arg9[%c2_30, %c1_31, %c0_32] : memref<4x4x8xf32, #tpu.memory_space<vmem>>, vector<2x2x8xf32>
    %c2_33 = arith.constant 2 : index
    %c2_34 = arith.constant 2 : index
    %c0_35 = arith.constant 0 : index
    %17 = vector.load %arg9[%c2_33, %c2_34, %c0_35] : memref<4x4x8xf32, #tpu.memory_space<vmem>>, vector<2x2x8xf32>
    %18 = tpu.concatenate %9, %10, %11, %12, %13, %14, %15, %16, %17 in 2 : vector<2x2x8xf32>, vector<2x2x8xf32>, vector<2x2x8xf32>, vector<2x2x8xf32>, vector<2x2x8xf32>, vector<2x2x8xf32>, vector<2x2x8xf32>, vector<2x2x8xf32>, vector<2x2x8xf32> -> vector<2x2x72xf32>
    %19 = vector.shape_cast %18 : vector<2x2x72xf32> to vector<4x72xf32>
    %c0_36 = arith.constant 0 : index
    %c0_37 = arith.constant 0 : index
    %20 = vector.load %arg2[%c0_36, %c0_37] : memref<72x16xf32, #tpu.memory_space<vmem>>, vector<72x16xf32>
    %cst_38 = arith.constant dense<0.000000e+00> : vector<4x16xf32>
    %21 = tpu.matmul %19, %20, %cst_38 {dimension_numbers = #tpu.dot_dimension_numbers<[1], [0], [0], [1], [0, 0, 1, 1], [], []>} : vector<4x72xf32>, vector<72x16xf32>, vector<4x16xf32> -> vector<4x16xf32>
    %c0_39 = arith.constant 0 : index
    %c0_40 = arith.constant 0 : index
    %22 = vector.load %arg3[%c0_39, %c0_40] : memref<1x16xf32, #tpu.memory_space<vmem>>, vector<1x16xf32>
    %23 = vector.broadcast %22 : vector<1x16xf32> to vector<4x16xf32>
    %24 = arith.mulf %21, %23 : vector<4x16xf32>
    %c0_41 = arith.constant 0 : index
    %c0_42 = arith.constant 0 : index
    %25 = vector.load %arg4[%c0_41, %c0_42] : memref<1x16xf32, #tpu.memory_space<vmem>>, vector<1x16xf32>
    %26 = vector.broadcast %25 : vector<1x16xf32> to vector<4x16xf32>
    %27 = arith.addf %24, %26 : vector<4x16xf32>
    %cst_43 = arith.constant 0.000000e+00 : f32
    %28 = vector.broadcast %cst_43 : f32 to vector<4x16xf32>
    %29 = arith.maximumf %27, %28 : vector<4x16xf32>
    %cst_44 = arith.constant 0.000000e+00 : f32
    %30 = vector.broadcast %cst_44 : f32 to vector<4x4x16xf32>
    %c0_45 = arith.constant 0 : index
    %c0_46 = arith.constant 0 : index
    %c0_47 = arith.constant 0 : index
    %31 = vector.load %arg10[%c0_45, %c0_46, %c0_47] : memref<4x4x16xf32, #tpu.memory_space<vmem>>, vector<4x4x16xf32>
    tpu.vector_store %arg10[%c0_45, %c0_46, %c0_47], %30 {strides = array<i32>} : memref<4x4x16xf32, #tpu.memory_space<vmem>>, vector<4x4x16xf32>,
    %32 = vector.shape_cast %29 : vector<4x16xf32> to vector<2x2x16xf32>
    %c1_48 = arith.constant 1 : index
    %c1_49 = arith.constant 1 : index
    %c0_50 = arith.constant 0 : index
    %33 = vector.load %arg10[%c1_48, %c1_49, %c0_50] : memref<4x4x16xf32, #tpu.memory_space<vmem>>, vector<2x2x16xf32>
    tpu.vector_store %arg10[%c1_48, %c1_49, %c0_50], %32 {strides = array<i32>} : memref<4x4x16xf32, #tpu.memory_space<vmem>>, vector<2x2x16xf32>,
    %c0_51 = arith.constant 0 : index
    %c0_52 = arith.constant 0 : index
    %c0_53 = arith.constant 0 : index
    %34 = vector.load %arg10[%c0_51, %c0_52, %c0_53] : memref<4x4x16xf32, #tpu.memory_space<vmem>>, vector<2x2x16xf32>
    %c0_54 = arith.constant 0 : index
    %c1_55 = arith.constant 1 : index
    %c0_56 = arith.constant 0 : index
    %35 = vector.load %arg10[%c0_54, %c1_55, %c0_56] : memref<4x4x16xf32, #tpu.memory_space<vmem>>, vector<2x2x16xf32>
    %c0_57 = arith.constant 0 : index
    %c2_58 = arith.constant 2 : index
    %c0_59 = arith.constant 0 : index
    %36 = vector.load %arg10[%c0_57, %c2_58, %c0_59] : memref<4x4x16xf32, #tpu.memory_space<vmem>>, vector<2x2x16xf32>
    %c1_60 = arith.constant 1 : index
    %c0_61 = arith.constant 0 : index
    %c0_62 = arith.constant 0 : index
    %37 = vector.load %arg10[%c1_60, %c0_61, %c0_62] : memref<4x4x16xf32, #tpu.memory_space<vmem>>, vector<2x2x16xf32>
    %c1_63 = arith.constant 1 : index
    %c1_64 = arith.constant 1 : index
    %c0_65 = arith.constant 0 : index
    %38 = vector.load %arg10[%c1_63, %c1_64, %c0_65] : memref<4x4x16xf32, #tpu.memory_space<vmem>>, vector<2x2x16xf32>
    %c1_66 = arith.constant 1 : index
    %c2_67 = arith.constant 2 : index
    %c0_68 = arith.constant 0 : index
    %39 = vector.load %arg10[%c1_66, %c2_67, %c0_68] : memref<4x4x16xf32, #tpu.memory_space<vmem>>, vector<2x2x16xf32>
    %c2_69 = arith.constant 2 : index
    %c0_70 = arith.constant 0 : index
    %c0_71 = arith.constant 0 : index
    %40 = vector.load %arg10[%c2_69, %c0_70, %c0_71] : memref<4x4x16xf32, #tpu.memory_space<vmem>>, vector<2x2x16xf32>
    %c2_72 = arith.constant 2 : index
    %c1_73 = arith.constant 1 : index
    %c0_74 = arith.constant 0 : index
    %41 = vector.load %arg10[%c2_72, %c1_73, %c0_74] : memref<4x4x16xf32, #tpu.memory_space<vmem>>, vector<2x2x16xf32>
    %c2_75 = arith.constant 2 : index
    %c2_76 = arith.constant 2 : index
    %c0_77 = arith.constant 0 : index
    %42 = vector.load %arg10[%c2_75, %c2_76, %c0_77] : memref<4x4x16xf32, #tpu.memory_space<vmem>>, vector<2x2x16xf32>
    %43 = tpu.concatenate %34, %35, %36, %37, %38, %39, %40, %41, %42 in 2 : vector<2x2x16xf32>, vector<2x2x16xf32>, vector<2x2x16xf32>, vector<2x2x16xf32>, vector<2x2x16xf32>, vector<2x2x16xf32>, vector<2x2x16xf32>, vector<2x2x16xf32>, vector<2x2x16xf32> -> vector<2x2x144xf32>
    %44 = vector.shape_cast %43 : vector<2x2x144xf32> to vector<4x144xf32>
    %c0_78 = arith.constant 0 : index
    %c0_79 = arith.constant 0 : index
    %45 = vector.load %arg5[%c0_78, %c0_79] : memref<144x16xf32, #tpu.memory_space<vmem>>, vector<144x16xf32>
    %cst_80 = arith.constant dense<0.000000e+00> : vector<4x16xf32>
    %46 = tpu.matmul %44, %45, %cst_80 {dimension_numbers = #tpu.dot_dimension_numbers<[1], [0], [0], [1], [0, 0, 1, 1], [], []>} : vector<4x144xf32>, vector<144x16xf32>, vector<4x16xf32> -> vector<4x16xf32>
    %c0_81 = arith.constant 0 : index
    %c0_82 = arith.constant 0 : index
    %47 = vector.load %arg6[%c0_81, %c0_82] : memref<1x16xf32, #tpu.memory_space<vmem>>, vector<1x16xf32>
    %48 = vector.broadcast %47 : vector<1x16xf32> to vector<4x16xf32>
    %49 = arith.mulf %46, %48 : vector<4x16xf32>
    %c0_83 = arith.constant 0 : index
    %c0_84 = arith.constant 0 : index
    %50 = vector.load %arg7[%c0_83, %c0_84] : memref<1x16xf32, #tpu.memory_space<vmem>>, vector<1x16xf32>
    %51 = vector.broadcast %50 : vector<1x16xf32> to vector<4x16xf32>
    %52 = arith.addf %49, %51 : vector<4x16xf32>
    %cst_85 = arith.constant 0.000000e+00 : f32
    %53 = vector.broadcast %cst_85 : f32 to vector<4x16xf32>
    %54 = arith.maximumf %52, %53 : vector<4x16xf32>
    %c0_86 = arith.constant 0 : index
    %c0_87 = arith.constant 0 : index
    %c0_88 = arith.constant 0 : index
    %55 = vector.load %arg8[%c0_86, %c0_87, %c0_88] : memref<1x4x16xf32, #tpu.memory_space<vmem>>, vector<1x4x16xf32>
    %56 = vector.shape_cast %55 : vector<1x4x16xf32> to vector<4x16xf32>
    %57 = vector.shape_cast %54 : vector<4x16xf32> to vector<1x4x16xf32>
    tpu.vector_store %arg8[%c0_86, %c0_87, %c0_88], %57 {strides = array<i32>} : memref<1x4x16xf32, #tpu.memory_space<vmem>>, vector<1x4x16xf32>,
    return
  }
  func.func @transform_0(%arg0: i32) -> (i32, i32, i32, i32) {
    %c0_i32 = arith.constant 0 : i32
    %c0_i32_0 = arith.constant 0 : i32
    %c0_i32_1 = arith.constant 0 : i32
    %c0_i32_2 = arith.constant 0 : i32
    return %arg0, %c0_i32, %c0_i32_0, %c0_i32_1 : i32, i32, i32, i32
  }
  func.func @transform_1(%arg0: i32) -> (i32, i32) {
    %c0_i32 = arith.constant 0 : i32
    %c0_i32_0 = arith.constant 0 : i32
    %c0_i32_1 = arith.constant 0 : i32
    return %c0_i32, %c0_i32_0 : i32, i32
  }
  func.func @transform_2(%arg0: i32) -> (i32, i32) {
    %c0_i32 = arith.constant 0 : i32
    %c0_i32_0 = arith.constant 0 : i32
    %c0_i32_1 = arith.constant 0 : i32
    return %c0_i32, %c0_i32_0 : i32, i32
  }
  func.func @transform_3(%arg0: i32) -> (i32, i32) {
    %c0_i32 = arith.constant 0 : i32
    %c0_i32_0 = arith.constant 0 : i32
    %c0_i32_1 = arith.constant 0 : i32
    return %c0_i32, %c0_i32_0 : i32, i32
  }
  func.func @transform_4(%arg0: i32) -> (i32, i32) {
    %c0_i32 = arith.constant 0 : i32
    %c0_i32_0 = arith.constant 0 : i32
    %c0_i32_1 = arith.constant 0 : i32
    return %c0_i32, %c0_i32_0 : i32, i32
  }
  func.func @transform_5(%arg0: i32) -> (i32, i32) {
    %c0_i32 = arith.constant 0 : i32
    %c0_i32_0 = arith.constant 0 : i32
    %c0_i32_1 = arith.constant 0 : i32
    return %c0_i32, %c0_i32_0 : i32, i32
  }
  func.func @transform_6(%arg0: i32) -> (i32, i32) {
    %c0_i32 = arith.constant 0 : i32
    %c0_i32_0 = arith.constant 0 : i32
    %c0_i32_1 = arith.constant 0 : i32
    return %c0_i32, %c0_i32_0 : i32, i32
  }
  func.func @transform_7(%arg0: i32) -> (i32, i32, i32) {
    %c0_i32 = arith.constant 0 : i32
    %c0_i32_0 = arith.constant 0 : i32
    %c0_i32_1 = arith.constant 0 : i32
    return %arg0, %c0_i32, %c0_i32_0 : i32, i32, i32
  }
}

</mosaic_0001>

<llo_original>
// kernel: encoder2_forward.4
$region0: #{encoder2_forward.4}
  #allocation0 [shape = 'u32[]', space=smem, size = 0x4, offset = 0x4, fixed_abs, tag = 'smem constant byte address 0x4 - core index']
  #allocation1 [shape = 'u32[144,128]{1,0:T(1,128)}', space=vmem, size = 0x12000, scoped, tag = 'internal scratch']
  #allocation2 [shape = 'f32[6,6,4]{2,1,0:T(8,128)}', space=vmem, size = 0x6000, scoped, tag = 'scratch operand']
  #allocation3 [shape = 'f32[6,6,8]{2,1,0:T(8,128)}', space=vmem, size = 0x6000, scoped, tag = 'scratch operand']
  %s0 = inlined_call_operand.vmem [shape: f32[2,8,8,4], index: 0, kind: input, shape index: {}]
  %s1 = inlined_call_operand.vmem [shape: f32[36,8], index: 1, kind: input, shape index: {}]
  %s2 = inlined_call_operand.vmem [shape: f32[1,8], index: 2, kind: input, shape index: {}]
  %s3 = inlined_call_operand.vmem [shape: f32[1,8], index: 3, kind: input, shape index: {}]
  %s4 = inlined_call_operand.vmem [shape: f32[72,8], index: 4, kind: input, shape index: {}]
  %s5 = inlined_call_operand.vmem [shape: f32[1,8], index: 5, kind: input, shape index: {}]
  %s6 = inlined_call_operand.vmem [shape: f32[1,8], index: 6, kind: input, shape index: {}]
  %s7 = inlined_call_operand.vmem [shape: f32[2,16,8], index: 7, kind: output, shape index: {}]
  %s8 = sld [smem:[#allocation0]]
  $region61: #{encoder2_forward.4} parent=0
    _
  %s10 = ssub.s32 1, %s8
  %s11 = scalar_select 0, %s10, %s8
  loop: start=0, step=1, limit=4
  $region2: #{encoder2_forward.4} parent=0 // loop_pre_header
    _
  $region3: #{encoder2_forward.4} parent=0 // loop_header
    %s13 = sphi 0, %s17
    %p14 = scmp.ge.s32.totalorder %s13, 4
    %s23 = sphi 0, %s25
    %s26 = sphi 0, %s23
    %s27 = sphi 0, %s26
    %s43 = sphi 0, %s27
    %s47 = sphi 0, %s47
    %s49 = sphi 0, %s47
    %s50 = sphi 0, %s49
    %s64 = sphi 0, %s50
    %s68 = sphi 0, %s68
    %s70 = sphi 0, %s68
    %s71 = sphi 0, %s70
    %s85 = sphi 0, %s71
    %s89 = sphi 0, %s89
    %s91 = sphi 0, %s89
    %s92 = sphi 0, %s91
    %s106 = sphi 0, %s92
    %s110 = sphi 0, %s110
    %s112 = sphi 0, %s110
    %s113 = sphi 0, %s112
    %s127 = sphi 0, %s113
    %s131 = sphi 0, %s131
    %s133 = sphi 0, %s131
    %s134 = sphi 0, %s133
    %s148 = sphi 0, %s134
    %s152 = sphi 0, %s152
    %s154 = sphi 0, %s152
    %s155 = sphi 0, %s154
    %s169 = sphi 0, %s155
    %s175 = sphi 0, %s177
    %s178 = sphi 0, %s175
    %s179 = sphi 0, %s178
    %s195 = sphi 0, %s179
  $region4: #{encoder2_forward.4} parent=0 // loop_header_branch
    %16 = sbr.rel (%p14) target = $region8
  $region5: #{encoder2_forward.4} parent=0 // loop_body
    %s18 = ssub.s32 %s13, 1
    %s19 = ssub.s32 %s13, 2
    %s20 = sadd.s32 %s13, 1
    %s21 = ssub.s32 %s13, %s20
    %p22 = scmp.eq.s32.totalorder %s21, 0
    %s24 = sadd.s32 %s23, 1
    %s25 = scalar_select %p22, %s23, %s24
    %p28 = pneg %p22
    %p29 = scmp.eq.s32.totalorder %s13, 1
    %p30 = por %p28, %p29
    %p31 = scmp.ne.s32.totalorder %s23, %s26
    %p32 = scmp.eq.s32.totalorder %s13, 0
    %p33 = por %p31, %p32
    %p34 = scmp.ne.s32.totalorder %s23, %s26
    %p35 = scmp.eq.s32.totalorder %s18, 1
    %p36 = por %p34, %p35
    %p37 = scmp.ne.s32.totalorder %s26, %s27
    %p38 = scmp.eq.s32.totalorder %s18, 0
    %p39 = por %p37, %p38
    %p40 = scmp.ne.s32.totalorder %s26, %s27
    %p41 = scmp.eq.s32.totalorder %s19, 1
    %p42 = por %p40, %p41
    %p44 = scmp.ne.s32.totalorder %s27, %s43
    %p45 = scmp.eq.s32.totalorder %s19, 0
    %p46 = por %p44, %p45
    %s48 = sadd.s32 %s47, 1
    %p51 = scmp.eq.s32.totalorder %s13, 1
    %p52 = scmp.ne.s32.totalorder %s47, %s49
    %p53 = scmp.eq.s32.totalorder %s13, 0
    %p54 = por %p52, %p53
    %p55 = scmp.ne.s32.totalorder %s47, %s49
    %p56 = scmp.eq.s32.totalorder %s18, 1
    %p57 = por %p55, %p56
    %p58 = scmp.ne.s32.totalorder %s49, %s50
    %p59 = scmp.eq.s32.totalorder %s18, 0
    %p60 = por %p58, %p59
    %p61 = scmp.ne.s32.totalorder %s49, %s50
    %p62 = scmp.eq.s32.totalorder %s19, 1
    %p63 = por %p61, %p62
    %p65 = scmp.ne.s32.totalorder %s50, %s64
    %p66 = scmp.eq.s32.totalorder %s19, 0
    %p67 = por %p65, %p66
    %s69 = sadd.s32 %s68, 1
    %p72 = scmp.eq.s32.totalorder %s13, 1
    %p73 = scmp.ne.s32.totalorder %s68, %s70
    %p74 = scmp.eq.s32.totalorder %s13, 0
    %p75 = por %p73, %p74
    %p76 = scmp.ne.s32.totalorder %s68, %s70
    %p77 = scmp.eq.s32.totalorder %s18, 1
    %p78 = por %p76, %p77
    %p79 = scmp.ne.s32.totalorder %s70, %s71
    %p80 = scmp.eq.s32.totalorder %s18, 0
    %p81 = por %p79, %p80
    %p82 = scmp.ne.s32.totalorder %s70, %s71
    %p83 = scmp.eq.s32.totalorder %s19, 1
    %p84 = por %p82, %p83
    %p86 = scmp.ne.s32.totalorder %s71, %s85
    %p87 = scmp.eq.s32.totalorder %s19, 0
    %p88 = por %p86, %p87
    %s90 = sadd.s32 %s89, 1
    %p93 = scmp.eq.s32.totalorder %s13, 1
    %p94 = scmp.ne.s32.totalorder %s89, %s91
    %p95 = scmp.eq.s32.totalorder %s13, 0
    %p96 = por %p94, %p95
    %p97 = scmp.ne.s32.totalorder %s89, %s91
    %p98 = scmp.eq.s32.totalorder %s18, 1
    %p99 = por %p97, %p98
    %p100 = scmp.ne.s32.totalorder %s91, %s92
    %p101 = scmp.eq.s32.totalorder %s18, 0
    %p102 = por %p100, %p101
    %p103 = scmp.ne.s32.totalorder %s91, %s92
    %p104 = scmp.eq.s32.totalorder %s19, 1
    %p105 = por %p103, %p104
    %p107 = scmp.ne.s32.totalorder %s92, %s106
    %p108 = scmp.eq.s32.totalorder %s19, 0
    %p109 = por %p107, %p108
    %s111 = sadd.s32 %s110, 1
    %p114 = scmp.eq.s32.totalorder %s13, 1
    %p115 = scmp.ne.s32.totalorder %s110, %s112
    %p116 = scmp.eq.s32.totalorder %s13, 0
    %p117 = por %p115, %p116
    %p118 = scmp.ne.s32.totalorder %s110, %s112
    %p119 = scmp.eq.s32.totalorder %s18, 1
    %p120 = por %p118, %p119
    %p121 = scmp.ne.s32.totalorder %s112, %s113
    %p122 = scmp.eq.s32.totalorder %s18, 0
    %p123 = por %p121, %p122
    %p124 = scmp.ne.s32.totalorder %s112, %s113
    %p125 = scmp.eq.s32.totalorder %s19, 1
    %p126 = por %p124, %p125
    %p128 = scmp.ne.s32.totalorder %s113, %s127
    %p129 = scmp.eq.s32.totalorder %s19, 0
    %p130 = por %p128, %p129
    %s132 = sadd.s32 %s131, 1
    %p135 = scmp.eq.s32.totalorder %s13, 1
    %p136 = scmp.ne.s32.totalorder %s131, %s133
    %p137 = scmp.eq.s32.totalorder %s13, 0
    %p138 = por %p136, %p137
    %p139 = scmp.ne.s32.totalorder %s131, %s133
    %p140 = scmp.eq.s32.totalorder %s18, 1
    %p141 = por %p139, %p140
    %p142 = scmp.ne.s32.totalorder %s133, %s134
    %p143 = scmp.eq.s32.totalorder %s18, 0
    %p144 = por %p142, %p143
    %p145 = scmp.ne.s32.totalorder %s133, %s134
    %p146 = scmp.eq.s32.totalorder %s19, 1
    %p147 = por %p145, %p146
    %p149 = scmp.ne.s32.totalorder %s134, %s148
    %p150 = scmp.eq.s32.totalorder %s19, 0
    %p151 = por %p149, %p150
    %s153 = sadd.s32 %s152, 1
    %p156 = scmp.eq.s32.totalorder %s13, 1
    %p157 = scmp.ne.s32.totalorder %s152, %s154
    %p158 = scmp.eq.s32.totalorder %s13, 0
    %p159 = por %p157, %p158
    %p160 = scmp.ne.s32.totalorder %s152, %s154
    %p161 = scmp.eq.s32.totalorder %s18, 1
    %p162 = por %p160, %p161
    %p163 = scmp.ne.s32.totalorder %s154, %s155
    %p164 = scmp.eq.s32.totalorder %s18, 0
    %p165 = por %p163, %p164
    %p166 = scmp.ne.s32.totalorder %s154, %s155
    %p167 = scmp.eq.s32.totalorder %s19, 1
    %p168 = por %p166, %p167
    %p170 = scmp.ne.s32.totalorder %s155, %s169
    %p171 = scmp.eq.s32.totalorder %s19, 0
    %p172 = por %p170, %p171
    %s173 = ssub.s32 %s13, %s20
    %p174 = scmp.eq.s32.totalorder %s173, 0
    %s176 = sadd.s32 %s175, 1
    %s177 = scalar_select %p174, %s175, %s176
    %p180 = pneg %p174
    %p181 = scmp.eq.s32.totalorder %s13, 1
    %p182 = por %p180, %p181
    %p183 = scmp.ne.s32.totalorder %s175, %s178
    %p184 = scmp.eq.s32.totalorder %s13, 0
    %p185 = por %p183, %p184
    %p186 = scmp.ne.s32.totalorder %s175, %s178
    %p187 = scmp.eq.s32.totalorder %s18, 1
    %p188 = por %p186, %p187
    %p189 = scmp.ne.s32.totalorder %s178, %s179
    %p190 = scmp.eq.s32.totalorder %s18, 0
    %p191 = por %p189, %p190
    %p192 = scmp.ne.s32.totalorder %s178, %s179
    %p193 = scmp.eq.s32.totalorder %s19, 1
    %p194 = por %p192, %p193
    %p196 = scmp.ne.s32.totalorder %s179, %s195
    %p197 = scmp.eq.s32.totalorder %s19, 0
    %p198 = por %p196, %p197
    %p199 = scmp.le.s32.totalorder 1, %s13
    %p200 = scmp.lt.s32.totalorder %s13, 3
    %p201 = pnand %p199, %p200
    %p202 = pneg %p201
    // Predicated region
    $region9: #{encoder2_forward.4} parent=5 // pred_check
      _
    $region10: #{encoder2_forward.4} parent=5 // pred_check_branch
      %204 = sbr.rel (%p201) target = $region12
    $region11: #{encoder2_forward.4} parent=5 // pred_region
      %s205 = ssub.s32 %s13, 1
      // Predicated region
      $region13: #{encoder2_forward.4} parent=11 // pred_check
        %p206 = pneg %p60
      $region14: #{encoder2_forward.4} parent=11 // pred_check_branch
        %208 = sbr.rel (%p206) target = $region16
      $region15: #{encoder2_forward.4} parent=11 // pred_region
        _
      $region16: #{encoder2_forward.4} parent=11 // pred_fallthru
        _
      // Predicated region
      $region17: #{encoder2_forward.4} parent=11 // pred_check
        %p209 = pneg %p81
      $region18: #{encoder2_forward.4} parent=11 // pred_check_branch
        %211 = sbr.rel (%p209) target = $region20
      $region19: #{encoder2_forward.4} parent=11 // pred_region
        _
      $region20: #{encoder2_forward.4} parent=11 // pred_fallthru
        _
      // Predicated region
      $region21: #{encoder2_forward.4} parent=11 // pred_check
        %p212 = pneg %p102
      $region22: #{encoder2_forward.4} parent=11 // pred_check_branch
        %214 = sbr.rel (%p212) target = $region24
      $region23: #{encoder2_forward.4} parent=11 // pred_region
        _
      $region24: #{encoder2_forward.4} parent=11 // pred_fallthru
        _
      // Predicated region
      $region25: #{encoder2_forward.4} parent=11 // pred_check
        %p215 = pneg %p123
      $region26: #{encoder2_forward.4} parent=11 // pred_check_branch
        %217 = sbr.rel (%p215) target = $region28
      $region27: #{encoder2_forward.4} parent=11 // pred_region
        _
      $region28: #{encoder2_forward.4} parent=11 // pred_fallthru
        _
      // Predicated region
      $region29: #{encoder2_forward.4} parent=11 // pred_check
        %p218 = pneg %p144
      $region30: #{encoder2_forward.4} parent=11 // pred_check_branch
        %220 = sbr.rel (%p218) target = $region32
      $region31: #{encoder2_forward.4} parent=11 // pred_region
        _
      $region32: #{encoder2_forward.4} parent=11 // pred_fallthru
        _
      // Predicated region
      $region33: #{encoder2_forward.4} parent=11 // pred_check
        %p221 = pneg %p165
      $region34: #{encoder2_forward.4} parent=11 // pred_check_branch
        %223 = sbr.rel (%p221) target = $region36
      $region35: #{encoder2_forward.4} parent=11 // pred_region
        _
      $region36: #{encoder2_forward.4} parent=11 // pred_fallthru
        _
    $region12: #{encoder2_forward.4} parent=5 // pred_fallthru
      _
    %p224 = scmp.lt.s32.totalorder %s13, 2
    // Predicated region
    $region37: #{encoder2_forward.4} parent=5 // pred_check
      %p225 = pneg %p224
    $region38: #{encoder2_forward.4} parent=5 // pred_check_branch
      %227 = sbr.rel (%p225) target = $region40
    $region39: #{encoder2_forward.4} parent=5 // pred_region
      // Predicated region
      $region41: #{encoder2_forward.4} parent=39 // pred_check
        %p228 = pneg %p33
      $region42: #{encoder2_forward.4} parent=39 // pred_check_branch
        %230 = sbr.rel (%p228) target = $region44
      $region43: #{encoder2_forward.4} parent=39 // pred_region
        %p231 = scmp.lt.s32.totalorder %s13, 1
        %s232 = scalar_select %p231, %s13, 1
        %s233 = smul.addr %s232, 8
        %s234 = smul.addr %s233, 8
        %s235 = scalar_lea.vmem %s0, %s234
      $region44: #{encoder2_forward.4} parent=39 // pred_fallthru
        _
    $region40: #{encoder2_forward.4} parent=5 // pred_fallthru
      _
    %p236 = scmp.le.s32.totalorder 1, %s13
    %p237 = scmp.lt.s32.totalorder %s13, 3
    %p238 = pnand %p236, %p237
    %p239 = pneg %p238
    // Predicated region
    $region45: #{encoder2_forward.4} parent=5 // pred_check
      _
    $region46: #{encoder2_forward.4} parent=5 // pred_check_branch
      %241 = sbr.rel (%p238) target = $region48
    $region47: #{encoder2_forward.4} parent=5 // pred_region
      %s242 = ssub.s32 %s13, 1
      %p243 = scmp.lt.s32.totalorder %s18, 1
      %s244 = scalar_select %p243, %s18, 1
      %s245 = smul.addr %s244, 8
      %s246 = smul.addr %s245, 8
      %s247 = scalar_lea.vmem %s0, %s246
      %p248 = pneg %p39
      %p249 = pneg %p36
      %p250 = pneg %p60
      %p251 = pneg %p57
      %p252 = pneg %p81
      %p253 = pneg %p78
      %p254 = pneg %p102
      %p255 = pneg %p99
      %p256 = pneg %p123
      %p257 = pneg %p120
      %p258 = pneg %p144
      %p259 = pneg %p141
      %p260 = pneg %p165
      %p261 = pneg %p162
      %p262 = pneg %p191
      %p263 = pneg %p188
      %p264 = scmp.lt.s32.totalorder %s18, 1
      %s265 = scalar_select %p264, %s18, 1
      %s266 = smul.addr %s265, 2
      %s267 = smul.addr %s266, 8
      %s268 = scalar_lea.vmem %s7, %s267
      %p269 = scmp.lt.s32.totalorder %s18, 1
      %s270 = scalar_select %p269, %s18, 1
      %s271 = smul.addr %s270, 8
      %s272 = smul.addr %s271, 8
      %s273 = scalar_lea.vmem %s0, %s272
      %p274 = scmp.lt.s32.totalorder %s18, 1
      %s275 = scalar_select %p274, %s18, 1
      %s276 = smul.addr %s275, 2
      %s277 = smul.addr %s276, 8
      %s278 = scalar_lea.vmem %s7, %s277
      %v279 = vld [vmem:[%s273] sm:$0xff]
      %v280 = vld [vmem:[%s273 + $0x8] sm:$0xff]
      %v281 = vld [vmem:[%s273 + $0x10] sm:$0xff]
      %v282 = vld [vmem:[%s273 + $0x18] sm:$0xff]
      %v283 = vld [vmem:[%s273 + $0x20] sm:$0xff]
      %v284 = vld [vmem:[%s273 + $0x28] sm:$0xff]
      %v285 = vld [vmem:[%s273 + $0x30] sm:$0xff]
      %v286 = vld [vmem:[%s273 + $0x38] sm:$0xff]
      %vm287 = vcmask 31744
      %v288 = vsel %vm287, %v279, -inf
      %v289 = vsel %vm287, %v280, -inf
      %v290 = vmax.f32 %v288, %v289
      %v291 = vsel %vm287, %v281, -inf
      %v292 = vsel %vm287, %v282, -inf
      %v293 = vmax.f32 %v291, %v292
      %v294 = vsel %vm287, %v283, -inf
      %v295 = vsel %vm287, %v284, -inf
      %v296 = vmax.f32 %v294, %v295
      %v297 = vsel %vm287, %v285, -inf
      %v298 = vsel %vm287, %v286, -inf
      %v299 = vmax.f32 %v297, %v298
      %v304 = vcombine.high %v290, %v290
      %v306 = vunpack.c.l.s4 1983009808
      %v307 = vunpack.c.0.s8 %v306
      %v308 = vlaneseq
      %v309 = vshrl.u32 %v308, 7
      %v310 = vsub.s32 %v307, %v309
      %v311 = vrot.slane %v290, %v310
      %v313 = vunpack.c.l.s4 1983009808
      %v314 = vunpack.c.0.s8 %v313
      %v315 = vlaneseq
      %v316 = vshrl.u32 %v315, 7
      %v317 = vsub.s32 %v314, %v316
      %v318 = vrot.slane %v304, %v317
      %v319 = vcombine.high %v311, %v311
      %v320 = vcombine.high %v318, %v318
      %v321 = vcombine.high %v293, %v293
      %v323 = vunpack.c.l.s4 1983009808
      %v324 = vunpack.c.0.s8 %v323
      %v325 = vlaneseq
      %v326 = vshrl.u32 %v325, 7
      %v327 = vsub.s32 %v324, %v326
      %v328 = vrot.slane %v293, %v327
      %v330 = vunpack.c.l.s4 1983009808
      %v331 = vunpack.c.0.s8 %v330
      %v332 = vlaneseq
      %v333 = vshrl.u32 %v332, 7
      %v334 = vsub.s32 %v331, %v333
      %v335 = vrot.slane %v321, %v334
      %v336 = vcombine.high %v328, %v328
      %v337 = vcombine.high %v335, %v335
      %v338 = vcombine.high %v296, %v296
      %v340 = vunpack.c.l.s4 1983009808
      %v341 = vunpack.c.0.s8 %v340
      %v342 = vlaneseq
      %v343 = vshrl.u32 %v342, 7
      %v344 = vsub.s32 %v341, %v343
      %v345 = vrot.slane %v296, %v344
      %v347 = vunpack.c.l.s4 1983009808
      %v348 = vunpack.c.0.s8 %v347
      %v349 = vlaneseq
      %v350 = vshrl.u32 %v349, 7
      %v351 = vsub.s32 %v348, %v350
      %v352 = vrot.slane %v338, %v351
      %v353 = vcombine.high %v345, %v345
      %v354 = vcombine.high %v352, %v352
      %v355 = vcombine.high %v299, %v299
      %v357 = vunpack.c.l.s4 1983009808
      %v358 = vunpack.c.0.s8 %v357
      %v359 = vlaneseq
      %v360 = vshrl.u32 %v359, 7
      %v361 = vsub.s32 %v358, %v360
      %v362 = vrot.slane %v299, %v361
      %v364 = vunpack.c.l.s4 1983009808
      %v365 = vunpack.c.0.s8 %v364
      %v366 = vlaneseq
      %v367 = vshrl.u32 %v366, 7
      %v368 = vsub.s32 %v365, %v367
      %v369 = vrot.slane %v355, %v368
      %v370 = vcombine.high %v362, %v362
      %v371 = vcombine.high %v369, %v369
      %vm388 = vcmask 25600
      %v389 = vsel %vm388, %v311, -inf
      %v390 = vrot.slane %v389, 4
      %v391 = vmax.f32 %v389, %v390
      %v392 = vrot.slane %v391, 2
      %v393 = vmax.f32 %v391, %v392
      %v394 = vrot.slane %v393, 1
      %v395 = vmax.f32 %v393, %v394
      %v396 = vsel %vm388, %v319, -inf
      %v397 = vrot.slane %v396, 4
      %v398 = vmax.f32 %v396, %v397
      %v399 = vrot.slane %v398, 2
      %v400 = vmax.f32 %v398, %v399
      %v401 = vrot.slane %v400, 1
      %v402 = vmax.f32 %v400, %v401
      %v403 = vsel %vm388, %v318, -inf
      %v404 = vrot.slane %v403, 4
      %v405 = vmax.f32 %v403, %v404
      %v406 = vrot.slane %v405, 2
      %v407 = vmax.f32 %v405, %v406
      %v408 = vrot.slane %v407, 1
      %v409 = vmax.f32 %v407, %v408
      %v410 = vsel %vm388, %v320, -inf
      %v411 = vrot.slane %v410, 4
      %v412 = vmax.f32 %v410, %v411
      %v413 = vrot.slane %v412, 2
      %v414 = vmax.f32 %v412, %v413
      %v415 = vrot.slane %v414, 1
      %v416 = vmax.f32 %v414, %v415
      %v417 = vsel %vm388, %v328, -inf
      %v418 = vrot.slane %v417, 4
      %v419 = vmax.f32 %v417, %v418
      %v420 = vrot.slane %v419, 2
      %v421 = vmax.f32 %v419, %v420
      %v422 = vrot.slane %v421, 1
      %v423 = vmax.f32 %v421, %v422
      %v424 = vsel %vm388, %v336, -inf
      %v425 = vrot.slane %v424, 4
      %v426 = vmax.f32 %v424, %v425
      %v427 = vrot.slane %v426, 2
      %v428 = vmax.f32 %v426, %v427
      %v429 = vrot.slane %v428, 1
      %v430 = vmax.f32 %v428, %v429
      %v431 = vsel %vm388, %v335, -inf
      %v432 = vrot.slane %v431, 4
      %v433 = vmax.f32 %v431, %v432
      %v434 = vrot.slane %v433, 2
      %v435 = vmax.f32 %v433, %v434
      %v436 = vrot.slane %v435, 1
      %v437 = vmax.f32 %v435, %v436
      %v438 = vsel %vm388, %v337, -inf
      %v439 = vrot.slane %v438, 4
      %v440 = vmax.f32 %v438, %v439
      %v441 = vrot.slane %v440, 2
      %v442 = vmax.f32 %v440, %v441
      %v443 = vrot.slane %v442, 1
      %v444 = vmax.f32 %v442, %v443
      %v445 = vsel %vm388, %v345, -inf
      %v446 = vrot.slane %v445, 4
      %v447 = vmax.f32 %v445, %v446
      %v448 = vrot.slane %v447, 2
      %v449 = vmax.f32 %v447, %v448
      %v450 = vrot.slane %v449, 1
      %v451 = vmax.f32 %v449, %v450
      %v452 = vsel %vm388, %v353, -inf
      %v453 = vrot.slane %v452, 4
      %v454 = vmax.f32 %v452, %v453
      %v455 = vrot.slane %v454, 2
      %v456 = vmax.f32 %v454, %v455
      %v457 = vrot.slane %v456, 1
      %v458 = vmax.f32 %v456, %v457
      %v459 = vsel %vm388, %v352, -inf
      %v460 = vrot.slane %v459, 4
      %v461 = vmax.f32 %v459, %v460
      %v462 = vrot.slane %v461, 2
      %v463 = vmax.f32 %v461, %v462
      %v464 = vrot.slane %v463, 1
      %v465 = vmax.f32 %v463, %v464
      %v466 = vsel %vm388, %v354, -inf
      %v467 = vrot.slane %v466, 4
      %v468 = vmax.f32 %v466, %v467
      %v469 = vrot.slane %v468, 2
      %v470 = vmax.f32 %v468, %v469
      %v471 = vrot.slane %v470, 1
      %v472 = vmax.f32 %v470, %v471
      %v473 = vsel %vm388, %v362, -inf
      %v474 = vrot.slane %v473, 4
      %v475 = vmax.f32 %v473, %v474
      %v476 = vrot.slane %v475, 2
      %v477 = vmax.f32 %v475, %v476
      %v478 = vrot.slane %v477, 1
      %v479 = vmax.f32 %v477, %v478
      %v480 = vsel %vm388, %v370, -inf
      %v481 = vrot.slane %v480, 4
      %v482 = vmax.f32 %v480, %v481
      %v483 = vrot.slane %v482, 2
      %v484 = vmax.f32 %v482, %v483
      %v485 = vrot.slane %v484, 1
      %v486 = vmax.f32 %v484, %v485
      %v487 = vsel %vm388, %v369, -inf
      %v488 = vrot.slane %v487, 4
      %v489 = vmax.f32 %v487, %v488
      %v490 = vrot.slane %v489, 2
      %v491 = vmax.f32 %v489, %v490
      %v492 = vrot.slane %v491, 1
      %v493 = vmax.f32 %v491, %v492
      %v494 = vsel %vm388, %v371, -inf
      %v495 = vrot.slane %v494, 4
      %v496 = vmax.f32 %v494, %v495
      %v497 = vrot.slane %v496, 2
      %v498 = vmax.f32 %v496, %v497
      %v499 = vrot.slane %v498, 1
      %v500 = vmax.f32 %v498, %v499
      %vm501 = vcmask 29696
      %502 = vst.msk [vmem:[#allocation2] sm:$0x3f] %vm501, 0.0
      %503 = vst.msk [vmem:[#allocation2 + $0x8] sm:$0x3f] %vm501, 0.0
      %504 = vst.msk [vmem:[#allocation2 + $0x10] sm:$0x3f] %vm501, 0.0
      %505 = vst.msk [vmem:[#allocation2 + $0x18] sm:$0x3f] %vm501, 0.0
      %506 = vst.msk [vmem:[#allocation2 + $0x20] sm:$0x3f] %vm501, 0.0
      %507 = vst.msk [vmem:[#allocation2 + $0x28] sm:$0x3f] %vm501, 0.0
      %vm524 = vcmask 1041409
      %v525 = vsel %vm524, %v402, %v395
      %vm526 = vcmask 1042434
      %v527 = vsel %vm526, %v409, %v525
      %vm528 = vcmask 1043459
      %v529 = vsel %vm528, %v416, %v527
      %v530 = vsel %vm524, %v430, %v423
      %v531 = vsel %vm526, %v437, %v530
      %v532 = vsel %vm528, %v444, %v531
      %v533 = vsel %vm524, %v458, %v451
      %v534 = vsel %vm526, %v465, %v533
      %v535 = vsel %vm528, %v472, %v534
      %v536 = vsel %vm524, %v486, %v479
      %v537 = vsel %vm526, %v493, %v536
      %v538 = vsel %vm528, %v500, %v537
      %s543 = scalar_lea.vmem [#allocation2], 8
      %vm544 = vcmask 27648
      %545 = vst.msk [vmem:[%s543 + $0x1] sm:$0xf] %vm544, %v529
      %546 = vst.msk [vmem:[%s543 + $0x9] sm:$0xf] %vm544, %v532
      %547 = vst.msk [vmem:[%s543 + $0x11] sm:$0xf] %vm544, %v535
      %548 = vst.msk [vmem:[%s543 + $0x19] sm:$0xf] %vm544, %v538
      %v549 = vld [vmem:[#allocation2] sm:$0xf]
      %v550 = vld [vmem:[#allocation2 + $0x8] sm:$0xf]
      %v551 = vld [vmem:[#allocation2 + $0x10] sm:$0xf]
      %v552 = vld [vmem:[#allocation2 + $0x18] sm:$0xf]
      %v553 = vld [vmem:[#allocation2 + $0x1] sm:$0xf]
      %v554 = vld [vmem:[#allocation2 + $0x9] sm:$0xf]
      %v555 = vld [vmem:[#allocation2 + $0x11] sm:$0xf]
      %v556 = vld [vmem:[#allocation2 + $0x19] sm:$0xf]
      %v557 = vld [vmem:[#allocation2 + $0x2] sm:$0xf]
      %v558 = vld [vmem:[#allocation2 + $0xa] sm:$0xf]
      %v559 = vld [vmem:[#allocation2 + $0x12] sm:$0xf]
      %v560 = vld [vmem:[#allocation2 + $0x1a] sm:$0xf]
      %v561 = vld [vmem:[%s543] sm:$0xf]
      %v562 = vld [vmem:[%s543 + $0x8] sm:$0xf]
      %v563 = vld [vmem:[%s543 + $0x10] sm:$0xf]
      %v564 = vld [vmem:[%s543 + $0x18] sm:$0xf]
      %v565 = vld [vmem:[%s543 + $0x1] sm:$0xf]
      %v566 = vld [vmem:[%s543 + $0x9] sm:$0xf]
      %v567 = vld [vmem:[%s543 + $0x11] sm:$0xf]
      %v568 = vld [vmem:[%s543 + $0x19] sm:$0xf]
      %v569 = vld [vmem:[%s543 + $0x2] sm:$0xf]
      %v570 = vld [vmem:[%s543 + $0xa] sm:$0xf]
      %v571 = vld [vmem:[%s543 + $0x12] sm:$0xf]
      %v572 = vld [vmem:[%s543 + $0x1a] sm:$0xf]
      %s573 = scalar_lea.vmem [#allocation2], 16
      %v574 = vld [vmem:[%s573] sm:$0xf]
      %v575 = vld [vmem:[%s573 + $0x8] sm:$0xf]
      %v576 = vld [vmem:[%s573 + $0x10] sm:$0xf]
      %v577 = vld [vmem:[%s573 + $0x18] sm:$0xf]
      %v578 = vld [vmem:[%s573 + $0x1] sm:$0xf]
      %v579 = vld [vmem:[%s573 + $0x9] sm:$0xf]
      %v580 = vld [vmem:[%s573 + $0x11] sm:$0xf]
      %v581 = vld [vmem:[%s573 + $0x19] sm:$0xf]
      %v582 = vld [vmem:[%s573 + $0x2] sm:$0xf]
      %v583 = vld [vmem:[%s573 + $0xa] sm:$0xf]
      %v584 = vld [vmem:[%s573 + $0x12] sm:$0xf]
      %v585 = vld [vmem:[%s573 + $0x1a] sm:$0xf]
      %590 = vrot.lane.b32.xlu0 %v553, 4
      %v591 = vpop.permute.xlu0 %590
      %592 = vrot.lane.b32.xlu0 %v554, 4
      %v593 = vpop.permute.xlu0 %592
      %594 = vrot.lane.b32.xlu0 %v555, 4
      %v595 = vpop.permute.xlu0 %594
      %596 = vrot.lane.b32.xlu0 %v556, 4
      %v597 = vpop.permute.xlu0 %596
      %606 = vrot.lane.b32.xlu0 %v557, 8
      %v607 = vpop.permute.xlu0 %606
      %608 = vrot.lane.b32.xlu0 %v558, 8
      %v609 = vpop.permute.xlu0 %608
      %610 = vrot.lane.b32.xlu0 %v559, 8
      %v611 = vpop.permute.xlu0 %610
      %612 = vrot.lane.b32.xlu0 %v560, 8
      %v613 = vpop.permute.xlu0 %612
      %622 = vrot.lane.b32.xlu0 %v561, 12
      %v623 = vpop.permute.xlu0 %622
      %624 = vrot.lane.b32.xlu0 %v562, 12
      %v625 = vpop.permute.xlu0 %624
      %626 = vrot.lane.b32.xlu0 %v563, 12
      %v627 = vpop.permute.xlu0 %626
      %628 = vrot.lane.b32.xlu0 %v564, 12
      %v629 = vpop.permute.xlu0 %628
      %638 = vrot.lane.b32.xlu0 %v565, 16
      %v639 = vpop.permute.xlu0 %638
      %640 = vrot.lane.b32.xlu0 %v566, 16
      %v641 = vpop.permute.xlu0 %640
      %642 = vrot.lane.b32.xlu0 %v567, 16
      %v643 = vpop.permute.xlu0 %642
      %644 = vrot.lane.b32.xlu0 %v568, 16
      %v645 = vpop.permute.xlu0 %644
      %654 = vrot.lane.b32.xlu0 %v569, 20
      %v655 = vpop.permute.xlu0 %654
      %656 = vrot.lane.b32.xlu0 %v570, 20
      %v657 = vpop.permute.xlu0 %656
      %658 = vrot.lane.b32.xlu0 %v571, 20
      %v659 = vpop.permute.xlu0 %658
      %660 = vrot.lane.b32.xlu0 %v572, 20
      %v661 = vpop.permute.xlu0 %660
      %670 = vrot.lane.b32.xlu0 %v574, 24
      %v671 = vpop.permute.xlu0 %670
      %672 = vrot.lane.b32.xlu0 %v575, 24
      %v673 = vpop.permute.xlu0 %672
      %674 = vrot.lane.b32.xlu0 %v576, 24
      %v675 = vpop.permute.xlu0 %674
      %676 = vrot.lane.b32.xlu0 %v577, 24
      %v677 = vpop.permute.xlu0 %676
      %686 = vrot.lane.b32.xlu0 %v578, 28
      %v687 = vpop.permute.xlu0 %686
      %688 = vrot.lane.b32.xlu0 %v579, 28
      %v689 = vpop.permute.xlu0 %688
      %690 = vrot.lane.b32.xlu0 %v580, 28
      %v691 = vpop.permute.xlu0 %690
      %692 = vrot.lane.b32.xlu0 %v581, 28
      %v693 = vpop.permute.xlu0 %692
      %702 = vrot.lane.b32.xlu0 %v582, 32
      %v703 = vpop.permute.xlu0 %702
      %704 = vrot.lane.b32.xlu0 %v583, 32
      %v705 = vpop.permute.xlu0 %704
      %706 = vrot.lane.b32.xlu0 %v584, 32
      %v707 = vpop.permute.xlu0 %706
      %708 = vrot.lane.b32.xlu0 %v585, 32
      %v709 = vpop.permute.xlu0 %708
      %v714 = vsel %vm287, %v549, %v591
      %v715 = vsel %vm287, %v550, %v593
      %v716 = vsel %vm287, %v551, %v595
      %v717 = vsel %vm287, %v552, %v597
      %vm718 = vcmask 64512
      %v719 = vsel %vm718, %v714, %v607
      %v720 = vsel %vm718, %v715, %v609
      %v721 = vsel %vm718, %v716, %v611
      %v722 = vsel %vm718, %v717, %v613
      %vm723 = vcmask 97280
      %v724 = vsel %vm723, %v719, %v623
      %v725 = vsel %vm723, %v720, %v625
      %v726 = vsel %vm723, %v721, %v627
      %v727 = vsel %vm723, %v722, %v629
      %vm728 = vcmask 130048
      %v729 = vsel %vm728, %v724, %v639
      %v730 = vsel %vm728, %v725, %v641
      %v731 = vsel %vm728, %v726, %v643
      %v732 = vsel %vm728, %v727, %v645
      %vm733 = vcmask 162816
      %v734 = vsel %vm733, %v729, %v655
      %v735 = vsel %vm733, %v730, %v657
      %v736 = vsel %vm733, %v731, %v659
      %v737 = vsel %vm733, %v732, %v661
      %vm738 = vcmask 195584
      %v739 = vsel %vm738, %v734, %v671
      %v740 = vsel %vm738, %v735, %v673
      %v741 = vsel %vm738, %v736, %v675
      %v742 = vsel %vm738, %v737, %v677
      %vm743 = vcmask 228352
      %v744 = vsel %vm743, %v739, %v687
      %v745 = vsel %vm743, %v740, %v689
      %v746 = vsel %vm743, %v741, %v691
      %v747 = vsel %vm743, %v742, %v693
      %vm748 = vcmask 261120
      %v749 = vsel %vm748, %v744, %v703
      %v750 = vsel %vm748, %v745, %v705
      %v751 = vsel %vm748, %v746, %v707
      %v752 = vsel %vm748, %v747, %v709
      %v753 = vld [vmem:[%s1] sm:$0xff]
      %v754 = vld [vmem:[%s1 + $0x8] sm:$0xff]
      %v755 = vld [vmem:[%s1 + $0x10] sm:$0xff]
      %v756 = vld [vmem:[%s1 + $0x18] sm:$0xff]
      %v757 = vld [vmem:[%s1 + $0x20] sm:$0xf]
      %v762 = vcombine.low %v749, %v750
      %v763 = vcombine.low %v751, %v752
      %vm764 = vcmask 293888
      %v765 = vsel %vm764, %v762, 0
      %v767 = vsel %vm764, %v763, 0
      %vm769 = vcmask 1043456
      %v771 = vsel %vm769, %v757, 0
      %773 = vmatprep.subr.mxu0 0.0
      %774 = vmatpush1.msra.mxu0 %v753
      %775 = vmatprep.subr.mxu0 0.0
      %776 = vmatpush1.msra.mxu0 %v754
      %777 = vmatprep.subr.mxu0 0.0
      %778 = vmatpush1.msra.mxu0 %v755
      %779 = vmatprep.subr.mxu0 0.0
      %780 = vmatpush1.msra.mxu0 %v756
      %781 = vmatprep.subr.mxu0 0.0
      %782 = vmatpush1.msra.mxu0 %v771
      %783 = vmatprep.subr.mxu0 0.0
      %784 = vmatpush1.msra.mxu0 0.0
      %785 = vmatprep.subr.mxu0 0.0
      %786 = vmatpush1.msra.mxu0 0.0
      %787 = vmatprep.subr.mxu0 0.0
      %788 = vmatpush1.msra.mxu0 0.0
      %789 = vmatprep.subr.mxu0 0.0
      %790 = vmatpush1.msra.mxu0 0.0
      %791 = vmatprep.subr.mxu0 0.0
      %792 = vmatpush1.msra.mxu0 0.0
      %793 = vmatprep.subr.mxu0 0.0
      %794 = vmatpush1.msra.mxu0 0.0
      %795 = vmatprep.subr.mxu0 0.0
      %796 = vmatpush1.msra.mxu0 0.0
      %797 = vmatprep.subr.mxu0 0.0
      %798 = vmatpush1.msra.mxu0 0.0
      %799 = vmatprep.subr.mxu0 0.0
      %800 = vmatpush1.msra.mxu0 0.0
      %801 = vmatprep.subr.mxu0 0.0
      %802 = vmatpush1.msra.mxu0 0.0
      %803 = vmatprep.subr.mxu0 0.0
      %804 = vmatpush1.msra.mxu0 0.0
      %805 = vmatprep.subr.mxu0 0.0
      %806 = vmatpush1.msra.mxu0 0.0
      %807 = vmatprep.subr.mxu0 0.0
      %808 = vmatpush1.msra.mxu0 0.0
      %809 = vmatprep.subr.mxu0 0.0
      %810 = vmatpush1.msra.mxu0 0.0
      %811 = vmatprep.subr.mxu0 0.0
      %812 = vmatpush1.msra.mxu0 0.0
      %813 = vmatprep.subr.mxu0 0.0
      %814 = vmatpush1.msra.mxu0 0.0
      %815 = vmatprep.subr.mxu0 0.0
      %816 = vmatpush1.msra.mxu0 0.0
      %817 = vmatprep.subr.mxu0 0.0
      %818 = vmatpush1.msra.mxu0 0.0
      %819 = vmatprep.subr.mxu0 0.0
      %820 = vmatpush1.msra.mxu0 0.0
      %821 = vmatprep.subr.mxu0 0.0
      %822 = vmatpush1.msra.mxu0 0.0
      %823 = vmatprep.subr.mxu0 0.0
      %824 = vmatpush1.msra.mxu0 0.0
      %825 = vmatprep.subr.mxu0 0.0
      %826 = vmatpush1.msra.mxu0 0.0
      %827 = vmatprep.subr.mxu0 0.0
      %828 = vmatpush1.msra.mxu0 0.0
      %829 = vmatprep.subr.mxu0 0.0
      %830 = vmatpush1.msra.mxu0 0.0
      %831 = vmatprep.subr.mxu0 0.0
      %832 = vmatpush1.msra.mxu0 0.0
      %833 = vmatprep.subr.mxu0 0.0
      %834 = vmatpush1.msra.mxu0 0.0
      %835 = vmatprep.subr.mxu0 0.0
      %836 = vmatpush1.msra.mxu0 0.0
      %837 = vmatprep.mubr.f32.mxu0 0.0
      %838 = vmatmul.mubr.f32.gmra.mrb[0].mxu0 %v765
      %v839 = vpop.f32.mrb[0].mxu0
      %v840 = vadd.f32 0.0, %v839
      %v841 = vpop.f32.mrb[0].mxu0
      %842 = vmatprep.mubr.f32.mxu0 0.0
      %843 = vmatmul.mubr.f32.gmra.mrb[0].mxu0 %v767
      %v844 = vpop.f32.mrb[0].mxu0
      %v845 = vadd.f32 0.0, %v844
      %v846 = vpop.f32.mrb[0].mxu0
      %847 = vdwg.mxu0
      %v848 = vld [vmem:[%s2] sm:$0x1]
      %v850 = vlaneseq
      %v851 = vshrl.u32 %v850, 7
      %v852 = vsub.s32 0, %v851
      %v853 = vrot.slane %v848, %v852
      %v855 = vmul.f32 %v840, %v853
      %v856 = vmul.f32 %v845, %v853
      %v857 = vld [vmem:[%s3] sm:$0x1]
      %v859 = vlaneseq
      %v860 = vshrl.u32 %v859, 7
      %v861 = vsub.s32 0, %v860
      %v862 = vrot.slane %v857, %v861
      %v864 = vadd.f32 %v855, %v862
      %v865 = vadd.f32 %v856, %v862
      %v866 = vmax.f32 %v864, 0.0
      %v867 = vmax.f32 %v865, 0.0
      %vm868 = vcmask 62464
      %869 = vst.msk [vmem:[#allocation3] sm:$0x3f] %vm868, 0.0
      %870 = vst.msk [vmem:[#allocation3 + $0x8] sm:$0x3f] %vm868, 0.0
      %871 = vst.msk [vmem:[#allocation3 + $0x10] sm:$0x3f] %vm868, 0.0
      %872 = vst.msk [vmem:[#allocation3 + $0x18] sm:$0x3f] %vm868, 0.0
      %873 = vst.msk [vmem:[#allocation3 + $0x20] sm:$0x3f] %vm868, 0.0
      %874 = vst.msk [vmem:[#allocation3 + $0x28] sm:$0x3f] %vm868, 0.0
      %v877 = vcombine.high %v866, %v866
      %v878 = vcombine.high %v867, %v867
      %s881 = scalar_lea.vmem [#allocation3], 8
      %vm882 = vcmask 60416
      %883 = vst.msk [vmem:[%s881 + $0x1] sm:$0xf] %vm882, %v866
      %884 = vst.msk [vmem:[%s881 + $0x9] sm:$0xf] %vm882, %v877
      %885 = vst.msk [vmem:[%s881 + $0x11] sm:$0xf] %vm882, %v867
      %886 = vst.msk [vmem:[%s881 + $0x19] sm:$0xf] %vm882, %v878
      %v887 = vld [vmem:[#allocation3] sm:$0xf]
      %v888 = vld [vmem:[#allocation3 + $0x8] sm:$0xf]
      %v889 = vld [vmem:[#allocation3 + $0x10] sm:$0xf]
      %v890 = vld [vmem:[#allocation3 + $0x18] sm:$0xf]
      %v891 = vld [vmem:[#allocation3 + $0x1] sm:$0xf]
      %v892 = vld [vmem:[#allocation3 + $0x9] sm:$0xf]
      %v893 = vld [vmem:[#allocation3 + $0x11] sm:$0xf]
      %v894 = vld [vmem:[#allocation3 + $0x19] sm:$0xf]
      %v895 = vld [vmem:[#allocation3 + $0x2] sm:$0xf]
      %v896 = vld [vmem:[#allocation3 + $0xa] sm:$0xf]
      %v897 = vld [vmem:[#allocation3 + $0x12] sm:$0xf]
      %v898 = vld [vmem:[#allocation3 + $0x1a] sm:$0xf]
      %v899 = vld [vmem:[%s881] sm:$0xf]
      %v900 = vld [vmem:[%s881 + $0x8] sm:$0xf]
      %v901 = vld [vmem:[%s881 + $0x10] sm:$0xf]
      %v902 = vld [vmem:[%s881 + $0x18] sm:$0xf]
      %v903 = vld [vmem:[%s881 + $0x1] sm:$0xf]
      %v904 = vld [vmem:[%s881 + $0x9] sm:$0xf]
      %v905 = vld [vmem:[%s881 + $0x11] sm:$0xf]
      %v906 = vld [vmem:[%s881 + $0x19] sm:$0xf]
      %v907 = vld [vmem:[%s881 + $0x2] sm:$0xf]
      %v908 = vld [vmem:[%s881 + $0xa] sm:$0xf]
      %v909 = vld [vmem:[%s881 + $0x12] sm:$0xf]
      %v910 = vld [vmem:[%s881 + $0x1a] sm:$0xf]
      %s911 = scalar_lea.vmem [#allocation3], 16
      %v912 = vld [vmem:[%s911] sm:$0xf]
      %v913 = vld [vmem:[%s911 + $0x8] sm:$0xf]
      %v914 = vld [vmem:[%s911 + $0x10] sm:$0xf]
      %v915 = vld [vmem:[%s911 + $0x18] sm:$0xf]
      %v916 = vld [vmem:[%s911 + $0x1] sm:$0xf]
      %v917 = vld [vmem:[%s911 + $0x9] sm:$0xf]
      %v918 = vld [vmem:[%s911 + $0x11] sm:$0xf]
      %v919 = vld [vmem:[%s911 + $0x19] sm:$0xf]
      %v920 = vld [vmem:[%s911 + $0x2] sm:$0xf]
      %v921 = vld [vmem:[%s911 + $0xa] sm:$0xf]
      %v922 = vld [vmem:[%s911 + $0x12] sm:$0xf]
      %v923 = vld [vmem:[%s911 + $0x1a] sm:$0xf]
      %928 = vrot.lane.b32.xlu0 %v891, 8
      %v929 = vpop.permute.xlu0 %928
      %930 = vrot.lane.b32.xlu0 %v892, 8
      %v931 = vpop.permute.xlu0 %930
      %932 = vrot.lane.b32.xlu0 %v893, 8
      %v933 = vpop.permute.xlu0 %932
      %934 = vrot.lane.b32.xlu0 %v894, 8
      %v935 = vpop.permute.xlu0 %934
      %944 = vrot.lane.b32.xlu0 %v895, 16
      %v945 = vpop.permute.xlu0 %944
      %946 = vrot.lane.b32.xlu0 %v896, 16
      %v947 = vpop.permute.xlu0 %946
      %948 = vrot.lane.b32.xlu0 %v897, 16
      %v949 = vpop.permute.xlu0 %948
      %950 = vrot.lane.b32.xlu0 %v898, 16
      %v951 = vpop.permute.xlu0 %950
      %960 = vrot.lane.b32.xlu0 %v899, 24
      %v961 = vpop.permute.xlu0 %960
      %962 = vrot.lane.b32.xlu0 %v900, 24
      %v963 = vpop.permute.xlu0 %962
      %964 = vrot.lane.b32.xlu0 %v901, 24
      %v965 = vpop.permute.xlu0 %964
      %966 = vrot.lane.b32.xlu0 %v902, 24
      %v967 = vpop.permute.xlu0 %966
      %976 = vrot.lane.b32.xlu0 %v903, 32
      %v977 = vpop.permute.xlu0 %976
      %978 = vrot.lane.b32.xlu0 %v904, 32
      %v979 = vpop.permute.xlu0 %978
      %980 = vrot.lane.b32.xlu0 %v905, 32
      %v981 = vpop.permute.xlu0 %980
      %982 = vrot.lane.b32.xlu0 %v906, 32
      %v983 = vpop.permute.xlu0 %982
      %992 = vrot.lane.b32.xlu0 %v907, 40
      %v993 = vpop.permute.xlu0 %992
      %994 = vrot.lane.b32.xlu0 %v908, 40
      %v995 = vpop.permute.xlu0 %994
      %996 = vrot.lane.b32.xlu0 %v909, 40
      %v997 = vpop.permute.xlu0 %996
      %998 = vrot.lane.b32.xlu0 %v910, 40
      %v999 = vpop.permute.xlu0 %998
      %1008 = vrot.lane.b32.xlu0 %v912, 48
      %v1009 = vpop.permute.xlu0 %1008
      %1010 = vrot.lane.b32.xlu0 %v913, 48
      %v1011 = vpop.permute.xlu0 %1010
      %1012 = vrot.lane.b32.xlu0 %v914, 48
      %v1013 = vpop.permute.xlu0 %1012
      %1014 = vrot.lane.b32.xlu0 %v915, 48
      %v1015 = vpop.permute.xlu0 %1014
      %1024 = vrot.lane.b32.xlu0 %v916, 56
      %v1025 = vpop.permute.xlu0 %1024
      %1026 = vrot.lane.b32.xlu0 %v917, 56
      %v1027 = vpop.permute.xlu0 %1026
      %1028 = vrot.lane.b32.xlu0 %v918, 56
      %v1029 = vpop.permute.xlu0 %1028
      %1030 = vrot.lane.b32.xlu0 %v919, 56
      %v1031 = vpop.permute.xlu0 %1030
      %1040 = vrot.lane.b32.xlu0 %v920, 64
      %v1041 = vpop.permute.xlu0 %1040
      %1042 = vrot.lane.b32.xlu0 %v921, 64
      %v1043 = vpop.permute.xlu0 %1042
      %1044 = vrot.lane.b32.xlu0 %v922, 64
      %v1045 = vpop.permute.xlu0 %1044
      %1046 = vrot.lane.b32.xlu0 %v923, 64
      %v1047 = vpop.permute.xlu0 %1046
      %v1052 = vsel %vm718, %v887, %v929
      %v1053 = vsel %vm718, %v888, %v931
      %v1054 = vsel %vm718, %v889, %v933
      %v1055 = vsel %vm718, %v890, %v935
      %v1056 = vsel %vm728, %v1052, %v945
      %v1057 = vsel %vm728, %v1053, %v947
      %v1058 = vsel %vm728, %v1054, %v949
      %v1059 = vsel %vm728, %v1055, %v951
      %v1060 = vsel %vm738, %v1056, %v961
      %v1061 = vsel %vm738, %v1057, %v963
      %v1062 = vsel %vm738, %v1058, %v965
      %v1063 = vsel %vm738, %v1059, %v967
      %v1064 = vsel %vm748, %v1060, %v977
      %v1065 = vsel %vm748, %v1061, %v979
      %v1066 = vsel %vm748, %v1062, %v981
      %v1067 = vsel %vm748, %v1063, %v983
      %vm1068 = vcmask 326656
      %v1069 = vsel %vm1068, %v1064, %v993
      %v1070 = vsel %vm1068, %v1065, %v995
      %v1071 = vsel %vm1068, %v1066, %v997
      %v1072 = vsel %vm1068, %v1067, %v999
      %vm1073 = vcmask 392192
      %v1074 = vsel %vm1073, %v1069, %v1009
      %v1075 = vsel %vm1073, %v1070, %v1011
      %v1076 = vsel %vm1073, %v1071, %v1013
      %v1077 = vsel %vm1073, %v1072, %v1015
      %vm1078 = vcmask 457728
      %v1079 = vsel %vm1078, %v1074, %v1025
      %v1080 = vsel %vm1078, %v1075, %v1027
      %v1081 = vsel %vm1078, %v1076, %v1029
      %v1082 = vsel %vm1078, %v1077, %v1031
      %vm1083 = vcmask 523264
      %v1084 = vsel %vm1083, %v1079, %v1041
      %v1085 = vsel %vm1083, %v1080, %v1043
      %v1086 = vsel %vm1083, %v1081, %v1045
      %v1087 = vsel %vm1083, %v1082, %v1047
      %v1088 = vld [vmem:[%s4] sm:$0xff]
      %v1089 = vld [vmem:[%s4 + $0x8] sm:$0xff]
      %v1090 = vld [vmem:[%s4 + $0x10] sm:$0xff]
      %v1091 = vld [vmem:[%s4 + $0x18] sm:$0xff]
      %v1092 = vld [vmem:[%s4 + $0x20] sm:$0xff]
      %v1093 = vld [vmem:[%s4 + $0x28] sm:$0xff]
      %v1094 = vld [vmem:[%s4 + $0x30] sm:$0xff]
      %v1095 = vld [vmem:[%s4 + $0x38] sm:$0xff]
      %v1096 = vld [vmem:[%s4 + $0x40] sm:$0xff]
      %v1101 = vcombine.low %v1084, %v1085
      %v1102 = vcombine.low %v1086, %v1087
      %vm1103 = vcmask 588800
      %v1104 = vsel %vm1103, %v1101, 0
      %v1106 = vsel %vm1103, %v1102, 0
      %1108 = vmatprep.subr.mxu0 0.0
      %1109 = vmatpush1.msra.mxu0 %v1088
      %1110 = vmatprep.subr.mxu0 0.0
      %1111 = vmatpush1.msra.mxu0 %v1089
      %1112 = vmatprep.subr.mxu0 0.0
      %1113 = vmatpush1.msra.mxu0 %v1090
      %1114 = vmatprep.subr.mxu0 0.0
      %1115 = vmatpush1.msra.mxu0 %v1091
      %1116 = vmatprep.subr.mxu0 0.0
      %1117 = vmatpush1.msra.mxu0 %v1092
      %1118 = vmatprep.subr.mxu0 0.0
      %1119 = vmatpush1.msra.mxu0 %v1093
      %1120 = vmatprep.subr.mxu0 0.0
      %1121 = vmatpush1.msra.mxu0 %v1094
      %1122 = vmatprep.subr.mxu0 0.0
      %1123 = vmatpush1.msra.mxu0 %v1095
      %1124 = vmatprep.subr.mxu0 0.0
      %1125 = vmatpush1.msra.mxu0 %v1096
      %1126 = vmatprep.subr.mxu0 0.0
      %1127 = vmatpush1.msra.mxu0 0.0
      %1128 = vmatprep.subr.mxu0 0.0
      %1129 = vmatpush1.msra.mxu0 0.0
      %1130 = vmatprep.subr.mxu0 0.0
      %1131 = vmatpush1.msra.mxu0 0.0
      %1132 = vmatprep.subr.mxu0 0.0
      %1133 = vmatpush1.msra.mxu0 0.0
      %1134 = vmatprep.subr.mxu0 0.0
      %1135 = vmatpush1.msra.mxu0 0.0
      %1136 = vmatprep.subr.mxu0 0.0
      %1137 = vmatpush1.msra.mxu0 0.0
      %1138 = vmatprep.subr.mxu0 0.0
      %1139 = vmatpush1.msra.mxu0 0.0
      %1140 = vmatprep.subr.mxu0 0.0
      %1141 = vmatpush1.msra.mxu0 0.0
      %1142 = vmatprep.subr.mxu0 0.0
      %1143 = vmatpush1.msra.mxu0 0.0
      %1144 = vmatprep.subr.mxu0 0.0
      %1145 = vmatpush1.msra.mxu0 0.0
      %1146 = vmatprep.subr.mxu0 0.0
      %1147 = vmatpush1.msra.mxu0 0.0
      %1148 = vmatprep.subr.mxu0 0.0
      %1149 = vmatpush1.msra.mxu0 0.0
      %1150 = vmatprep.subr.mxu0 0.0
      %1151 = vmatpush1.msra.mxu0 0.0
      %1152 = vmatprep.subr.mxu0 0.0
      %1153 = vmatpush1.msra.mxu0 0.0
      %1154 = vmatprep.subr.mxu0 0.0
      %1155 = vmatpush1.msra.mxu0 0.0
      %1156 = vmatprep.subr.mxu0 0.0
      %1157 = vmatpush1.msra.mxu0 0.0
      %1158 = vmatprep.subr.mxu0 0.0
      %1159 = vmatpush1.msra.mxu0 0.0
      %1160 = vmatprep.subr.mxu0 0.0
      %1161 = vmatpush1.msra.mxu0 0.0
      %1162 = vmatprep.subr.mxu0 0.0
      %1163 = vmatpush1.msra.mxu0 0.0
      %1164 = vmatprep.subr.mxu0 0.0
      %1165 = vmatpush1.msra.mxu0 0.0
      %1166 = vmatprep.subr.mxu0 0.0
      %1167 = vmatpush1.msra.mxu0 0.0
      %1168 = vmatprep.subr.mxu0 0.0
      %1169 = vmatpush1.msra.mxu0 0.0
      %1170 = vmatprep.subr.mxu0 0.0
      %1171 = vmatpush1.msra.mxu0 0.0
      %1172 = vmatprep.mubr.f32.mxu0 0.0
      %1173 = vmatmul.mubr.f32.gmra.mrb[0].mxu0 %v1104
      %v1174 = vpop.f32.mrb[0].mxu0
      %v1175 = vadd.f32 0.0, %v1174
      %v1176 = vpop.f32.mrb[0].mxu0
      %1177 = vmatprep.mubr.f32.mxu0 0.0
      %1178 = vmatmul.mubr.f32.gmra.mrb[0].mxu0 %v1106
      %v1179 = vpop.f32.mrb[0].mxu0
      %v1180 = vadd.f32 0.0, %v1179
      %v1181 = vpop.f32.mrb[0].mxu0
      %1182 = vdwg.mxu0
      %v1183 = vld [vmem:[%s5] sm:$0x1]
      %v1185 = vlaneseq
      %v1186 = vshrl.u32 %v1185, 7
      %v1187 = vsub.s32 0, %v1186
      %v1188 = vrot.slane %v1183, %v1187
      %v1190 = vmul.f32 %v1175, %v1188
      %v1191 = vmul.f32 %v1180, %v1188
      %v1192 = vld [vmem:[%s6] sm:$0x1]
      %v1194 = vlaneseq
      %v1195 = vshrl.u32 %v1194, 7
      %v1196 = vsub.s32 0, %v1195
      %v1197 = vrot.slane %v1192, %v1196
      %v1199 = vadd.f32 %v1190, %v1197
      %v1200 = vadd.f32 %v1191, %v1197
      %v1201 = vmax.f32 %v1199, 0.0
      %v1202 = vmax.f32 %v1200, 0.0
      %1203 = vst.msk [vmem:[%s278] sm:$0xff] %vm718, %v1201
      %1204 = vst.msk [vmem:[%s278 + $0x8] sm:$0xff] %vm718, %v1202
      %p1205 = scmp.lt.s32.totalorder %s18, 1
      %s1206 = scalar_select %p1205, %s18, 1
      %s1207 = smul.addr %s1206, 2
      %s1208 = smul.addr %s1207, 8
      %s1209 = scalar_lea.vmem %s7, %s1208
      // Predicated region
      $region49: #{encoder2_forward.4} parent=47 // pred_check
        %p1210 = pneg %p188
      $region50: #{encoder2_forward.4} parent=47 // pred_check_branch
        %1212 = sbr.rel (%p1210) target = $region52
      $region51: #{encoder2_forward.4} parent=47 // pred_region
        _
      $region52: #{encoder2_forward.4} parent=47 // pred_fallthru
        _
    $region48: #{encoder2_forward.4} parent=5 // pred_fallthru
      _
    %p1213 = scmp.le.s32.totalorder 2, %s13
    // Predicated region
    $region53: #{encoder2_forward.4} parent=5 // pred_check
      %p1214 = pneg %p1213
    $region54: #{encoder2_forward.4} parent=5 // pred_check_branch
      %1216 = sbr.rel (%p1214) target = $region56
    $region55: #{encoder2_forward.4} parent=5 // pred_region
      %s1217 = ssub.s32 %s13, 2
      // Predicated region
      $region57: #{encoder2_forward.4} parent=55 // pred_check
        %p1218 = pneg %p194
      $region58: #{encoder2_forward.4} parent=55 // pred_check_branch
        %1220 = sbr.rel (%p1218) target = $region60
      $region59: #{encoder2_forward.4} parent=55 // pred_region
        %p1221 = scmp.lt.s32.totalorder %s19, 1
        %s1222 = scalar_select %p1221, %s19, 1
        %s1223 = smul.addr %s1222, 2
        %s1224 = smul.addr %s1223, 8
        %s1225 = scalar_lea.vmem %s7, %s1224
      $region60: #{encoder2_forward.4} parent=55 // pred_fallthru
        _
    $region56: #{encoder2_forward.4} parent=5 // pred_fallthru
      _
  $region6: #{encoder2_forward.4} parent=0 // loop_footer
    %s17 = sadd.s32 1, %s13
  $region7: #{encoder2_forward.4} parent=0 // loop_footer_branch
    %12 = sbr.rel target = $region3
  $region8: #{encoder2_forward.4} parent=0 // loop_exit
    _

// kernel: encoder2_forward.5
$region0: #{encoder2_forward.5}
  #allocation0 [shape = 'u32[]', space=smem, size = 0x4, offset = 0x4, fixed_abs, tag = 'smem constant byte address 0x4 - core index']
  #allocation1 [shape = 'u32[144,128]{1,0:T(1,128)}', space=vmem, size = 0x12000, scoped, tag = 'internal scratch']
  #allocation2 [shape = 'f32[4,4,8]{2,1,0:T(4,128)}', space=vmem, size = 0x2000, scoped, tag = 'scratch operand']
  #allocation3 [shape = 'f32[4,4,16]{2,1,0:T(4,128)}', space=vmem, size = 0x2000, scoped, tag = 'scratch operand']
  %s0 = inlined_call_operand.vmem [shape: f32[2,4,4,8], index: 0, kind: input, shape index: {}]
  %s1 = inlined_call_operand.vmem [shape: f32[72,16], index: 1, kind: input, shape index: {}]
  %s2 = inlined_call_operand.vmem [shape: f32[1,16], index: 2, kind: input, shape index: {}]
  %s3 = inlined_call_operand.vmem [shape: f32[1,16], index: 3, kind: input, shape index: {}]
  %s4 = inlined_call_operand.vmem [shape: f32[144,16], index: 4, kind: input, shape index: {}]
  %s5 = inlined_call_operand.vmem [shape: f32[1,16], index: 5, kind: input, shape index: {}]
  %s6 = inlined_call_operand.vmem [shape: f32[1,16], index: 6, kind: input, shape index: {}]
  %s7 = inlined_call_operand.hbm [shape: f32[2,4,16], index: 7, kind: output, shape index: {}]
  %s8 = sld [smem:[#allocation0]]
  $region61: #{encoder2_forward.5} parent=0
    _
  %s10 = ssub.s32 1, %s8
  %s11 = scalar_select 0, %s10, %s8
  $region1: #{encoder2_forward.5} parent=0
    #allocation4 [shape = 'u8[4096]{0}', space=vmem, size = 0x1000, scoped, tag = 'output window, operand 0']
    #allocation5 [shape = 's32[2]{0}', space=sflag, size = 0x8, scoped, tag = 'scoped memory for encoder2_forward.5']
    %12 = vsyncpa [#allocation5], 0
    %s13 = scalar_lea.sflag [#allocation5], 1
    %14 = vsyncpa %s13, 0
    loop: start=0, step=1, limit=4
    $region2: #{encoder2_forward.5} parent=1 // loop_pre_header
      _
    $region3: #{encoder2_forward.5} parent=1 // loop_header
      %s16 = sphi 0, %s20
      %p17 = scmp.ge.s32.totalorder %s16, 4
      %s26 = sphi 0, %s28
      %s29 = sphi 0, %s26
      %s30 = sphi 0, %s29
      %s46 = sphi 0, %s30
      %s50 = sphi 0, %s50
      %s52 = sphi 0, %s50
      %s53 = sphi 0, %s52
      %s67 = sphi 0, %s53
      %s71 = sphi 0, %s71
      %s73 = sphi 0, %s71
      %s74 = sphi 0, %s73
      %s88 = sphi 0, %s74
      %s92 = sphi 0, %s92
      %s94 = sphi 0, %s92
      %s95 = sphi 0, %s94
      %s109 = sphi 0, %s95
      %s113 = sphi 0, %s113
      %s115 = sphi 0, %s113
      %s116 = sphi 0, %s115
      %s130 = sphi 0, %s116
      %s134 = sphi 0, %s134
      %s136 = sphi 0, %s134
      %s137 = sphi 0, %s136
      %s151 = sphi 0, %s137
      %s155 = sphi 0, %s155
      %s157 = sphi 0, %s155
      %s158 = sphi 0, %s157
      %s172 = sphi 0, %s158
      %s178 = sphi 0, %s180
      %s181 = sphi 0, %s178
      %s182 = sphi 0, %s181
      %s198 = sphi 0, %s182
    $region4: #{encoder2_forward.5} parent=1 // loop_header_branch
      %19 = sbr.rel (%p17) target = $region8
    $region5: #{encoder2_forward.5} parent=1 // loop_body
      %s21 = ssub.s32 %s16, 1
      %s22 = ssub.s32 %s16, 2
      %s23 = sadd.s32 %s16, 1
      %s24 = ssub.s32 %s16, %s23
      %p25 = scmp.eq.s32.totalorder %s24, 0
      %s27 = sadd.s32 %s26, 1
      %s28 = scalar_select %p25, %s26, %s27
      %p31 = pneg %p25
      %p32 = scmp.eq.s32.totalorder %s16, 1
      %p33 = por %p31, %p32
      %p34 = scmp.ne.s32.totalorder %s26, %s29
      %p35 = scmp.eq.s32.totalorder %s16, 0
      %p36 = por %p34, %p35
      %p37 = scmp.ne.s32.totalorder %s26, %s29
      %p38 = scmp.eq.s32.totalorder %s21, 1
      %p39 = por %p37, %p38
      %p40 = scmp.ne.s32.totalorder %s29, %s30
      %p41 = scmp.eq.s32.totalorder %s21, 0
      %p42 = por %p40, %p41
      %p43 = scmp.ne.s32.totalorder %s29, %s30
      %p44 = scmp.eq.s32.totalorder %s22, 1
      %p45 = por %p43, %p44
      %p47 = scmp.ne.s32.totalorder %s30, %s46
      %p48 = scmp.eq.s32.totalorder %s22, 0
      %p49 = por %p47, %p48
      %s51 = sadd.s32 %s50, 1
      %p54 = scmp.eq.s32.totalorder %s16, 1
      %p55 = scmp.ne.s32.totalorder %s50, %s52
      %p56 = scmp.eq.s32.totalorder %s16, 0
      %p57 = por %p55, %p56
      %p58 = scmp.ne.s32.totalorder %s50, %s52
      %p59 = scmp.eq.s32.totalorder %s21, 1
      %p60 = por %p58, %p59
      %p61 = scmp.ne.s32.totalorder %s52, %s53
      %p62 = scmp.eq.s32.totalorder %s21, 0
      %p63 = por %p61, %p62
      %p64 = scmp.ne.s32.totalorder %s52, %s53
      %p65 = scmp.eq.s32.totalorder %s22, 1
      %p66 = por %p64, %p65
      %p68 = scmp.ne.s32.totalorder %s53, %s67
      %p69 = scmp.eq.s32.totalorder %s22, 0
      %p70 = por %p68, %p69
      %s72 = sadd.s32 %s71, 1
      %p75 = scmp.eq.s32.totalorder %s16, 1
      %p76 = scmp.ne.s32.totalorder %s71, %s73
      %p77 = scmp.eq.s32.totalorder %s16, 0
      %p78 = por %p76, %p77
      %p79 = scmp.ne.s32.totalorder %s71, %s73
      %p80 = scmp.eq.s32.totalorder %s21, 1
      %p81 = por %p79, %p80
      %p82 = scmp.ne.s32.totalorder %s73, %s74
      %p83 = scmp.eq.s32.totalorder %s21, 0
      %p84 = por %p82, %p83
      %p85 = scmp.ne.s32.totalorder %s73, %s74
      %p86 = scmp.eq.s32.totalorder %s22, 1
      %p87 = por %p85, %p86
      %p89 = scmp.ne.s32.totalorder %s74, %s88
      %p90 = scmp.eq.s32.totalorder %s22, 0
      %p91 = por %p89, %p90
      %s93 = sadd.s32 %s92, 1
      %p96 = scmp.eq.s32.totalorder %s16, 1
      %p97 = scmp.ne.s32.totalorder %s92, %s94
      %p98 = scmp.eq.s32.totalorder %s16, 0
      %p99 = por %p97, %p98
      %p100 = scmp.ne.s32.totalorder %s92, %s94
      %p101 = scmp.eq.s32.totalorder %s21, 1
      %p102 = por %p100, %p101
      %p103 = scmp.ne.s32.totalorder %s94, %s95
      %p104 = scmp.eq.s32.totalorder %s21, 0
      %p105 = por %p103, %p104
      %p106 = scmp.ne.s32.totalorder %s94, %s95
      %p107 = scmp.eq.s32.totalorder %s22, 1
      %p108 = por %p106, %p107
      %p110 = scmp.ne.s32.totalorder %s95, %s109
      %p111 = scmp.eq.s32.totalorder %s22, 0
      %p112 = por %p110, %p111
      %s114 = sadd.s32 %s113, 1
      %p117 = scmp.eq.s32.totalorder %s16, 1
      %p118 = scmp.ne.s32.totalorder %s113, %s115
      %p119 = scmp.eq.s32.totalorder %s16, 0
      %p120 = por %p118, %p119
      %p121 = scmp.ne.s32.totalorder %s113, %s115
      %p122 = scmp.eq.s32.totalorder %s21, 1
      %p123 = por %p121, %p122
      %p124 = scmp.ne.s32.totalorder %s115, %s116
      %p125 = scmp.eq.s32.totalorder %s21, 0
      %p126 = por %p124, %p125
      %p127 = scmp.ne.s32.totalorder %s115, %s116
      %p128 = scmp.eq.s32.totalorder %s22, 1
      %p129 = por %p127, %p128
      %p131 = scmp.ne.s32.totalorder %s116, %s130
      %p132 = scmp.eq.s32.totalorder %s22, 0
      %p133 = por %p131, %p132
      %s135 = sadd.s32 %s134, 1
      %p138 = scmp.eq.s32.totalorder %s16, 1
      %p139 = scmp.ne.s32.totalorder %s134, %s136
      %p140 = scmp.eq.s32.totalorder %s16, 0
      %p141 = por %p139, %p140
      %p142 = scmp.ne.s32.totalorder %s134, %s136
      %p143 = scmp.eq.s32.totalorder %s21, 1
      %p144 = por %p142, %p143
      %p145 = scmp.ne.s32.totalorder %s136, %s137
      %p146 = scmp.eq.s32.totalorder %s21, 0
      %p147 = por %p145, %p146
      %p148 = scmp.ne.s32.totalorder %s136, %s137
      %p149 = scmp.eq.s32.totalorder %s22, 1
      %p150 = por %p148, %p149
      %p152 = scmp.ne.s32.totalorder %s137, %s151
      %p153 = scmp.eq.s32.totalorder %s22, 0
      %p154 = por %p152, %p153
      %s156 = sadd.s32 %s155, 1
      %p159 = scmp.eq.s32.totalorder %s16, 1
      %p160 = scmp.ne.s32.totalorder %s155, %s157
      %p161 = scmp.eq.s32.totalorder %s16, 0
      %p162 = por %p160, %p161
      %p163 = scmp.ne.s32.totalorder %s155, %s157
      %p164 = scmp.eq.s32.totalorder %s21, 1
      %p165 = por %p163, %p164
      %p166 = scmp.ne.s32.totalorder %s157, %s158
      %p167 = scmp.eq.s32.totalorder %s21, 0
      %p168 = por %p166, %p167
      %p169 = scmp.ne.s32.totalorder %s157, %s158
      %p170 = scmp.eq.s32.totalorder %s22, 1
      %p171 = por %p169, %p170
      %p173 = scmp.ne.s32.totalorder %s158, %s172
      %p174 = scmp.eq.s32.totalorder %s22, 0
      %p175 = por %p173, %p174
      %s176 = ssub.s32 %s16, %s23
      %p177 = scmp.eq.s32.totalorder %s176, 0
      %s179 = sadd.s32 %s178, 1
      %s180 = scalar_select %p177, %s178, %s179
      %p183 = pneg %p177
      %p184 = scmp.eq.s32.totalorder %s16, 1
      %p185 = por %p183, %p184
      %p186 = scmp.ne.s32.totalorder %s178, %s181
      %p187 = scmp.eq.s32.totalorder %s16, 0
      %p188 = por %p186, %p187
      %p189 = scmp.ne.s32.totalorder %s178, %s181
      %p190 = scmp.eq.s32.totalorder %s21, 1
      %p191 = por %p189, %p190
      %p192 = scmp.ne.s32.totalorder %s181, %s182
      %p193 = scmp.eq.s32.totalorder %s21, 0
      %p194 = por %p192, %p193
      %p195 = scmp.ne.s32.totalorder %s181, %s182
      %p196 = scmp.eq.s32.totalorder %s22, 1
      %p197 = por %p195, %p196
      %p199 = scmp.ne.s32.totalorder %s182, %s198
      %p200 = scmp.eq.s32.totalorder %s22, 0
      %p201 = por %p199, %p200
      %p202 = scmp.le.s32.totalorder 1, %s16
      %p203 = scmp.lt.s32.totalorder %s16, 3
      %p204 = pnand %p202, %p203
      %p205 = pneg %p204
      // Predicated region
      $region9: #{encoder2_forward.5} parent=5 // pred_check
        _
      $region10: #{encoder2_forward.5} parent=5 // pred_check_branch
        %207 = sbr.rel (%p204) target = $region12
      $region11: #{encoder2_forward.5} parent=5 // pred_region
        %s208 = ssub.s32 %s16, 1
        // Predicated region
        $region13: #{encoder2_forward.5} parent=11 // pred_check
          %p209 = pneg %p63
        $region14: #{encoder2_forward.5} parent=11 // pred_check_branch
          %211 = sbr.rel (%p209) target = $region16
        $region15: #{encoder2_forward.5} parent=11 // pred_region
          _
        $region16: #{encoder2_forward.5} parent=11 // pred_fallthru
          _
        // Predicated region
        $region17: #{encoder2_forward.5} parent=11 // pred_check
          %p212 = pneg %p84
        $region18: #{encoder2_forward.5} parent=11 // pred_check_branch
          %214 = sbr.rel (%p212) target = $region20
        $region19: #{encoder2_forward.5} parent=11 // pred_region
          _
        $region20: #{encoder2_forward.5} parent=11 // pred_fallthru
          _
        // Predicated region
        $region21: #{encoder2_forward.5} parent=11 // pred_check
          %p215 = pneg %p105
        $region22: #{encoder2_forward.5} parent=11 // pred_check_branch
          %217 = sbr.rel (%p215) target = $region24
        $region23: #{encoder2_forward.5} parent=11 // pred_region
          _
        $region24: #{encoder2_forward.5} parent=11 // pred_fallthru
          _
        // Predicated region
        $region25: #{encoder2_forward.5} parent=11 // pred_check
          %p218 = pneg %p126
        $region26: #{encoder2_forward.5} parent=11 // pred_check_branch
          %220 = sbr.rel (%p218) target = $region28
        $region27: #{encoder2_forward.5} parent=11 // pred_region
          _
        $region28: #{encoder2_forward.5} parent=11 // pred_fallthru
          _
        // Predicated region
        $region29: #{encoder2_forward.5} parent=11 // pred_check
          %p221 = pneg %p147
        $region30: #{encoder2_forward.5} parent=11 // pred_check_branch
          %223 = sbr.rel (%p221) target = $region32
        $region31: #{encoder2_forward.5} parent=11 // pred_region
          _
        $region32: #{encoder2_forward.5} parent=11 // pred_fallthru
          _
        // Predicated region
        $region33: #{encoder2_forward.5} parent=11 // pred_check
          %p224 = pneg %p168
        $region34: #{encoder2_forward.5} parent=11 // pred_check_branch
          %226 = sbr.rel (%p224) target = $region36
        $region35: #{encoder2_forward.5} parent=11 // pred_region
          _
        $region36: #{encoder2_forward.5} parent=11 // pred_fallthru
          _
      $region12: #{encoder2_forward.5} parent=5 // pred_fallthru
        _
      %p227 = scmp.lt.s32.totalorder %s16, 2
      // Predicated region
      $region37: #{encoder2_forward.5} parent=5 // pred_check
        %p228 = pneg %p227
      $region38: #{encoder2_forward.5} parent=5 // pred_check_branch
        %230 = sbr.rel (%p228) target = $region40
      $region39: #{encoder2_forward.5} parent=5 // pred_region
        // Predicated region
        $region41: #{encoder2_forward.5} parent=39 // pred_check
          %p231 = pneg %p36
        $region42: #{encoder2_forward.5} parent=39 // pred_check_branch
          %233 = sbr.rel (%p231) target = $region44
        $region43: #{encoder2_forward.5} parent=39 // pred_region
          %p234 = scmp.lt.s32.totalorder %s16, 1
          %s235 = scalar_select %p234, %s16, 1
          %s236 = smul.addr %s235, 4
          %s237 = smul.addr %s236, 4
          %s238 = scalar_lea.vmem %s0, %s237
        $region44: #{encoder2_forward.5} parent=39 // pred_fallthru
          _
      $region40: #{encoder2_forward.5} parent=5 // pred_fallthru
        _
      %p239 = scmp.le.s32.totalorder 1, %s16
      %p240 = scmp.lt.s32.totalorder %s16, 3
      %p241 = pnand %p239, %p240
      %p242 = pneg %p241
      // Predicated region
      $region45: #{encoder2_forward.5} parent=5 // pred_check
        _
      $region46: #{encoder2_forward.5} parent=5 // pred_check_branch
        %244 = sbr.rel (%p241) target = $region48
      $region47: #{encoder2_forward.5} parent=5 // pred_region
        %s245 = ssub.s32 %s16, 1
        %p246 = scmp.lt.s32.totalorder %s21, 1
        %s247 = scalar_select %p246, %s21, 1
        %s248 = smul.addr %s247, 4
        %s249 = smul.addr %s248, 4
        %s250 = scalar_lea.vmem %s0, %s249
        %p251 = pneg %p42
        %p252 = pneg %p39
        %p253 = pneg %p63
        %p254 = pneg %p60
        %p255 = pneg %p84
        %p256 = pneg %p81
        %p257 = pneg %p105
        %p258 = pneg %p102
        %p259 = pneg %p126
        %p260 = pneg %p123
        %p261 = pneg %p147
        %p262 = pneg %p144
        %p263 = pneg %p168
        %p264 = pneg %p165
        %p265 = pneg %p194
        %p266 = pneg %p191
        %s267 = sand.u32 %s181, 1
        %s268 = scalar_lea.sflag [#allocation5], %s267
        %s269 = sand.u32 %s181, 1
        %s270 = smul.addr %s269, 4
        %s271 = scalar_lea.vmem [#allocation4], %s270
        %p272 = scmp.lt.s32.totalorder %s21, 1
        %s273 = scalar_select %p272, %s21, 1
        %s274 = smul.addr %s273, 4
        %s275 = smul.addr %s274, 4
        %s276 = scalar_lea.vmem %s0, %s275
        %v277 = vld [vmem:[%s276] sm:$0xf]
        %v278 = vld [vmem:[%s276 + $0x4] sm:$0xf]
        %v279 = vld [vmem:[%s276 + $0x8] sm:$0xf]
        %v280 = vld [vmem:[%s276 + $0xc] sm:$0xf]
        %vm281 = vcmask 60416
        %v282 = vsel %vm281, %v277, -inf
        %v283 = vsel %vm281, %v278, -inf
        %v284 = vmax.f32 %v282, %v283
        %v285 = vsel %vm281, %v279, -inf
        %v286 = vsel %vm281, %v280, -inf
        %v287 = vmax.f32 %v285, %v286
        %v291 = vunpack.c.l.s4 1983009808
        %v292 = vunpack.c.0.s8 %v291
        %v293 = vlaneseq
        %v294 = vshrl.u32 %v293, 7
        %v295 = vsub.s32 %v292, %v294
        %v296 = vrot.slane %v284, %v295
        %v297 = vcombine.high %v296, %v296
        %v299 = vunpack.c.l.s4 1983009808
        %v300 = vunpack.c.0.s8 %v299
        %v301 = vlaneseq
        %v302 = vshrl.u32 %v301, 7
        %v303 = vsub.s32 %v300, %v302
        %v304 = vrot.slane %v287, %v303
        %v305 = vcombine.high %v304, %v304
        %vm310 = vcmask 58368
        %v311 = vsel %vm310, %v296, -inf
        %v312 = vrot.slane %v311, 4
        %v313 = vmax.f32 %v311, %v312
        %v314 = vrot.slane %v313, 2
        %v315 = vmax.f32 %v313, %v314
        %v316 = vrot.slane %v315, 1
        %v317 = vmax.f32 %v315, %v316
        %v318 = vsel %vm310, %v297, -inf
        %v319 = vrot.slane %v318, 4
        %v320 = vmax.f32 %v318, %v319
        %v321 = vrot.slane %v320, 2
        %v322 = vmax.f32 %v320, %v321
        %v323 = vrot.slane %v322, 1
        %v324 = vmax.f32 %v322, %v323
        %v325 = vsel %vm310, %v304, -inf
        %v326 = vrot.slane %v325, 4
        %v327 = vmax.f32 %v325, %v326
        %v328 = vrot.slane %v327, 2
        %v329 = vmax.f32 %v327, %v328
        %v330 = vrot.slane %v329, 1
        %v331 = vmax.f32 %v329, %v330
        %v332 = vsel %vm310, %v305, -inf
        %v333 = vrot.slane %v332, 4
        %v334 = vmax.f32 %v332, %v333
        %v335 = vrot.slane %v334, 2
        %v336 = vmax.f32 %v334, %v335
        %v337 = vrot.slane %v336, 1
        %v338 = vmax.f32 %v336, %v337
        %339 = vst.msk [vmem:[#allocation2] sm:$0xf] %vm281, 0.0
        %340 = vst.msk [vmem:[#allocation2 + $0x4] sm:$0xf] %vm281, 0.0
        %341 = vst.msk [vmem:[#allocation2 + $0x8] sm:$0xf] %vm281, 0.0
        %342 = vst.msk [vmem:[#allocation2 + $0xc] sm:$0xf] %vm281, 0.0
        %vm347 = vcmask 1041409
        %v348 = vsel %vm347, %v324, %v317
        %v349 = vsel %vm347, %v338, %v331
        %s352 = scalar_lea.vmem [#allocation2], 4
        %353 = vst.msk [vmem:[%s352 + $0x1] sm:$0x3] %vm310, %v348
        %354 = vst.msk [vmem:[%s352 + $0x5] sm:$0x3] %vm310, %v349
        %v355 = vld [vmem:[#allocation2] sm:$0x3]
        %v356 = vld [vmem:[#allocation2 + $0x4] sm:$0x3]
        %v357 = vld [vmem:[#allocation2 + $0x1] sm:$0x3]
        %v358 = vld [vmem:[#allocation2 + $0x5] sm:$0x3]
        %v359 = vld [vmem:[#allocation2 + $0x2] sm:$0x3]
        %v360 = vld [vmem:[#allocation2 + $0x6] sm:$0x3]
        %v361 = vld [vmem:[%s352] sm:$0x3]
        %v362 = vld [vmem:[%s352 + $0x4] sm:$0x3]
        %v363 = vld [vmem:[%s352 + $0x1] sm:$0x3]
        %v364 = vld [vmem:[%s352 + $0x5] sm:$0x3]
        %v365 = vld [vmem:[%s352 + $0x2] sm:$0x3]
        %v366 = vld [vmem:[%s352 + $0x6] sm:$0x3]
        %s367 = scalar_lea.vmem [#allocation2], 8
        %v368 = vld [vmem:[%s367] sm:$0x3]
        %v369 = vld [vmem:[%s367 + $0x4] sm:$0x3]
        %v370 = vld [vmem:[%s367 + $0x1] sm:$0x3]
        %v371 = vld [vmem:[%s367 + $0x5] sm:$0x3]
        %v372 = vld [vmem:[%s367 + $0x2] sm:$0x3]
        %v373 = vld [vmem:[%s367 + $0x6] sm:$0x3]
        %376 = vrot.lane.b32.xlu0 %v357, 8
        %v377 = vpop.permute.xlu0 %376
        %378 = vrot.lane.b32.xlu0 %v358, 8
        %v379 = vpop.permute.xlu0 %378
        %384 = vrot.lane.b32.xlu0 %v359, 16
        %v385 = vpop.permute.xlu0 %384
        %386 = vrot.lane.b32.xlu0 %v360, 16
        %v387 = vpop.permute.xlu0 %386
        %392 = vrot.lane.b32.xlu0 %v361, 24
        %v393 = vpop.permute.xlu0 %392
        %394 = vrot.lane.b32.xlu0 %v362, 24
        %v395 = vpop.permute.xlu0 %394
        %400 = vrot.lane.b32.xlu0 %v363, 32
        %v401 = vpop.permute.xlu0 %400
        %402 = vrot.lane.b32.xlu0 %v364, 32
        %v403 = vpop.permute.xlu0 %402
        %408 = vrot.lane.b32.xlu0 %v365, 40
        %v409 = vpop.permute.xlu0 %408
        %410 = vrot.lane.b32.xlu0 %v366, 40
        %v411 = vpop.permute.xlu0 %410
        %416 = vrot.lane.b32.xlu0 %v368, 48
        %v417 = vpop.permute.xlu0 %416
        %418 = vrot.lane.b32.xlu0 %v369, 48
        %v419 = vpop.permute.xlu0 %418
        %424 = vrot.lane.b32.xlu0 %v370, 56
        %v425 = vpop.permute.xlu0 %424
        %426 = vrot.lane.b32.xlu0 %v371, 56
        %v427 = vpop.permute.xlu0 %426
        %432 = vrot.lane.b32.xlu0 %v372, 64
        %v433 = vpop.permute.xlu0 %432
        %434 = vrot.lane.b32.xlu0 %v373, 64
        %v435 = vpop.permute.xlu0 %434
        %vm438 = vcmask 64512
        %v439 = vsel %vm438, %v355, %v377
        %v440 = vsel %vm438, %v356, %v379
        %vm441 = vcmask 130048
        %v442 = vsel %vm441, %v439, %v385
        %v443 = vsel %vm441, %v440, %v387
        %vm444 = vcmask 195584
        %v445 = vsel %vm444, %v442, %v393
        %v446 = vsel %vm444, %v443, %v395
        %vm447 = vcmask 261120
        %v448 = vsel %vm447, %v445, %v401
        %v449 = vsel %vm447, %v446, %v403
        %vm450 = vcmask 326656
        %v451 = vsel %vm450, %v448, %v409
        %v452 = vsel %vm450, %v449, %v411
        %vm453 = vcmask 392192
        %v454 = vsel %vm453, %v451, %v417
        %v455 = vsel %vm453, %v452, %v419
        %vm456 = vcmask 457728
        %v457 = vsel %vm456, %v454, %v425
        %v458 = vsel %vm456, %v455, %v427
        %vm459 = vcmask 523264
        %v460 = vsel %vm459, %v457, %v433
        %v461 = vsel %vm459, %v458, %v435
        %v462 = vld [vmem:[%s1] sm:$0xff]
        %v463 = vld [vmem:[%s1 + $0x8] sm:$0xff]
        %v464 = vld [vmem:[%s1 + $0x10] sm:$0xff]
        %v465 = vld [vmem:[%s1 + $0x18] sm:$0xff]
        %v466 = vld [vmem:[%s1 + $0x20] sm:$0xff]
        %v467 = vld [vmem:[%s1 + $0x28] sm:$0xff]
        %v468 = vld [vmem:[%s1 + $0x30] sm:$0xff]
        %v469 = vld [vmem:[%s1 + $0x38] sm:$0xff]
        %v470 = vld [vmem:[%s1 + $0x40] sm:$0xff]
        %v473 = vcombine.low %v460, %v461
        %v475 = vunpack.c.l.s4 1983009808
        %v476 = vunpack.c.0.s8 %v475
        %v477 = vlaneseq
        %v478 = vshrl.u32 %v477, 7
        %v479 = vsub.s32 %v476, %v478
        %v480 = vrot.slane %v473, %v479
        %vm481 = vcmask 588800
        %v482 = vsel %vm481, %v480, 0
        %484 = vmatprep.subr.mxu0 0.0
        %485 = vmatpush1.msra.mxu0 %v462
        %486 = vmatprep.subr.mxu0 0.0
        %487 = vmatpush1.msra.mxu0 %v463
        %488 = vmatprep.subr.mxu0 0.0
        %489 = vmatpush1.msra.mxu0 %v464
        %490 = vmatprep.subr.mxu0 0.0
        %491 = vmatpush1.msra.mxu0 %v465
        %492 = vmatprep.subr.mxu0 0.0
        %493 = vmatpush1.msra.mxu0 %v466
        %494 = vmatprep.subr.mxu0 0.0
        %495 = vmatpush1.msra.mxu0 %v467
        %496 = vmatprep.subr.mxu0 0.0
        %497 = vmatpush1.msra.mxu0 %v468
        %498 = vmatprep.subr.mxu0 0.0
        %499 = vmatpush1.msra.mxu0 %v469
        %500 = vmatprep.subr.mxu0 0.0
        %501 = vmatpush1.msra.mxu0 %v470
        %502 = vmatprep.subr.mxu0 0.0
        %503 = vmatpush1.msra.mxu0 0.0
        %504 = vmatprep.subr.mxu0 0.0
        %505 = vmatpush1.msra.mxu0 0.0
        %506 = vmatprep.subr.mxu0 0.0
        %507 = vmatpush1.msra.mxu0 0.0
        %508 = vmatprep.subr.mxu0 0.0
        %509 = vmatpush1.msra.mxu0 0.0
        %510 = vmatprep.subr.mxu0 0.0
        %511 = vmatpush1.msra.mxu0 0.0
        %512 = vmatprep.subr.mxu0 0.0
        %513 = vmatpush1.msra.mxu0 0.0
        %514 = vmatprep.subr.mxu0 0.0
        %515 = vmatpush1.msra.mxu0 0.0
        %516 = vmatprep.subr.mxu0 0.0
        %517 = vmatpush1.msra.mxu0 0.0
        %518 = vmatprep.subr.mxu0 0.0
        %519 = vmatpush1.msra.mxu0 0.0
        %520 = vmatprep.subr.mxu0 0.0
        %521 = vmatpush1.msra.mxu0 0.0
        %522 = vmatprep.subr.mxu0 0.0
        %523 = vmatpush1.msra.mxu0 0.0
        %524 = vmatprep.subr.mxu0 0.0
        %525 = vmatpush1.msra.mxu0 0.0
        %526 = vmatprep.subr.mxu0 0.0
        %527 = vmatpush1.msra.mxu0 0.0
        %528 = vmatprep.subr.mxu0 0.0
        %529 = vmatpush1.msra.mxu0 0.0
        %530 = vmatprep.subr.mxu0 0.0
        %531 = vmatpush1.msra.mxu0 0.0
        %532 = vmatprep.subr.mxu0 0.0
        %533 = vmatpush1.msra.mxu0 0.0
        %534 = vmatprep.subr.mxu0 0.0
        %535 = vmatpush1.msra.mxu0 0.0
        %536 = vmatprep.subr.mxu0 0.0
        %537 = vmatpush1.msra.mxu0 0.0
        %538 = vmatprep.subr.mxu0 0.0
        %539 = vmatpush1.msra.mxu0 0.0
        %540 = vmatprep.subr.mxu0 0.0
        %541 = vmatpush1.msra.mxu0 0.0
        %542 = vmatprep.subr.mxu0 0.0
        %543 = vmatpush1.msra.mxu0 0.0
        %544 = vmatprep.subr.mxu0 0.0
        %545 = vmatpush1.msra.mxu0 0.0
        %546 = vmatprep.subr.mxu0 0.0
        %547 = vmatpush1.msra.mxu0 0.0
        %548 = vmatprep.mubr.f32.mxu0 0.0
        %549 = vmatmul.mubr.f32.gmra.mrb[0].mxu0 %v482
        %v550 = vpop.f32.mrb[0].mxu0
        %v551 = vadd.f32 0.0, %v550
        %v552 = vpop.f32.mrb[0].mxu0
        %553 = vdwg.mxu0
        %v554 = vld [vmem:[%s2] sm:$0x1]
        %v556 = vlaneseq
        %v557 = vshrl.u32 %v556, 7
        %v558 = vsub.s32 0, %v557
        %v559 = vrot.slane %v554, %v558
        %v561 = vmul.f32 %v551, %v559
        %v562 = vld [vmem:[%s3] sm:$0x1]
        %v564 = vlaneseq
        %v565 = vshrl.u32 %v564, 7
        %v566 = vsub.s32 0, %v565
        %v567 = vrot.slane %v562, %v566
        %v569 = vadd.f32 %v561, %v567
        %v570 = vmax.f32 %v569, 0.0
        %vm571 = vcmask 125952
        %572 = vst.msk [vmem:[#allocation3] sm:$0xf] %vm571, 0.0
        %573 = vst.msk [vmem:[#allocation3 + $0x4] sm:$0xf] %vm571, 0.0
        %574 = vst.msk [vmem:[#allocation3 + $0x8] sm:$0xf] %vm571, 0.0
        %575 = vst.msk [vmem:[#allocation3 + $0xc] sm:$0xf] %vm571, 0.0
        %v578 = vunpack.c.l.s4 1983009808
        %v579 = vunpack.c.0.s8 %v578
        %v580 = vlaneseq
        %v581 = vshrl.u32 %v580, 7
        %v582 = vsub.s32 %v579, %v581
        %v583 = vrot.slane %v570, %v582
        %v584 = vcombine.high %v583, %v583
        %s587 = scalar_lea.vmem [#allocation3], 4
        %vm588 = vcmask 123904
        %589 = vst.msk [vmem:[%s587 + $0x1] sm:$0x3] %vm588, %v583
        %590 = vst.msk [vmem:[%s587 + $0x5] sm:$0x3] %vm588, %v584
        %v591 = vld [vmem:[#allocation3] sm:$0x3]
        %v592 = vld [vmem:[#allocation3 + $0x4] sm:$0x3]
        %v593 = vld [vmem:[#allocation3 + $0x1] sm:$0x3]
        %v594 = vld [vmem:[#allocation3 + $0x5] sm:$0x3]
        %v595 = vld [vmem:[#allocation3 + $0x2] sm:$0x3]
        %v596 = vld [vmem:[#allocation3 + $0x6] sm:$0x3]
        %v597 = vld [vmem:[%s587] sm:$0x3]
        %v598 = vld [vmem:[%s587 + $0x4] sm:$0x3]
        %v599 = vld [vmem:[%s587 + $0x1] sm:$0x3]
        %v600 = vld [vmem:[%s587 + $0x5] sm:$0x3]
        %v601 = vld [vmem:[%s587 + $0x2] sm:$0x3]
        %v602 = vld [vmem:[%s587 + $0x6] sm:$0x3]
        %s603 = scalar_lea.vmem [#allocation3], 8
        %v604 = vld [vmem:[%s603] sm:$0x3]
        %v605 = vld [vmem:[%s603 + $0x4] sm:$0x3]
        %v606 = vld [vmem:[%s603 + $0x1] sm:$0x3]
        %v607 = vld [vmem:[%s603 + $0x5] sm:$0x3]
        %v608 = vld [vmem:[%s603 + $0x2] sm:$0x3]
        %v609 = vld [vmem:[%s603 + $0x6] sm:$0x3]
        %612 = vrot.lane.b32.xlu0 %v593, 16
        %v613 = vpop.permute.xlu0 %612
        %614 = vrot.lane.b32.xlu0 %v594, 16
        %v615 = vpop.permute.xlu0 %614
        %620 = vrot.lane.b32.xlu0 %v595, 32
        %v621 = vpop.permute.xlu0 %620
        %622 = vrot.lane.b32.xlu0 %v596, 32
        %v623 = vpop.permute.xlu0 %622
        %628 = vrot.lane.b32.xlu0 %v597, 48
        %v629 = vpop.permute.xlu0 %628
        %630 = vrot.lane.b32.xlu0 %v598, 48
        %v631 = vpop.permute.xlu0 %630
        %636 = vrot.lane.b32.xlu0 %v599, 64
        %v637 = vpop.permute.xlu0 %636
        %638 = vrot.lane.b32.xlu0 %v600, 64
        %v639 = vpop.permute.xlu0 %638
        %644 = vrot.lane.b32.xlu0 %v601, 80
        %v645 = vpop.permute.xlu0 %644
        %646 = vrot.lane.b32.xlu0 %v602, 80
        %v647 = vpop.permute.xlu0 %646
        %652 = vrot.lane.b32.xlu0 %v604, 96
        %v653 = vpop.permute.xlu0 %652
        %654 = vrot.lane.b32.xlu0 %v605, 96
        %v655 = vpop.permute.xlu0 %654
        %660 = vrot.lane.b32.xlu0 %v606, 112
        %v661 = vpop.permute.xlu0 %660
        %662 = vrot.lane.b32.xlu0 %v607, 112
        %v663 = vpop.permute.xlu0 %662
        %v666 = vsel %vm441, %v591, %v613
        %v667 = vsel %vm441, %v592, %v615
        %v668 = vsel %vm447, %v666, %v621
        %v669 = vsel %vm447, %v667, %v623
        %v670 = vsel %vm453, %v668, %v629
        %v671 = vsel %vm453, %v669, %v631
        %v672 = vsel %vm459, %v670, %v637
        %v673 = vsel %vm459, %v671, %v639
        %vm674 = vcmask 654336
        %v675 = vsel %vm674, %v672, %v645
        %v676 = vsel %vm674, %v673, %v647
        %vm677 = vcmask 785408
        %v678 = vsel %vm677, %v675, %v653
        %v679 = vsel %vm677, %v676, %v655
        %vm680 = vcmask 916480
        %v681 = vsel %vm680, %v678, %v661
        %v682 = vsel %vm680, %v679, %v663
        %v687 = vcombine.low %v681, %v608
        %v689 = vunpack.c.l.s4 1983009808
        %v690 = vunpack.c.0.s8 %v689
        %v691 = vlaneseq
        %v692 = vshrl.u32 %v691, 7
        %v693 = vsub.s32 %v690, %v692
        %v694 = vrot.slane %v687, %v693
        %v695 = vcombine.low %v682, %v609
        %v697 = vunpack.c.l.s4 1983009808
        %v698 = vunpack.c.0.s8 %v697
        %v699 = vlaneseq
        %v700 = vshrl.u32 %v699, 7
        %v701 = vsub.s32 %v698, %v700
        %v702 = vrot.slane %v695, %v701
        %v703 = vld [vmem:[%s4] sm:$0xff]
        %v704 = vld [vmem:[%s4 + $0x8] sm:$0xff]
        %v705 = vld [vmem:[%s4 + $0x10] sm:$0xff]
        %v706 = vld [vmem:[%s4 + $0x18] sm:$0xff]
        %v707 = vld [vmem:[%s4 + $0x20] sm:$0xff]
        %v708 = vld [vmem:[%s4 + $0x28] sm:$0xff]
        %v709 = vld [vmem:[%s4 + $0x30] sm:$0xff]
        %v710 = vld [vmem:[%s4 + $0x38] sm:$0xff]
        %v711 = vld [vmem:[%s4 + $0x40] sm:$0xff]
        %v712 = vld [vmem:[%s4 + $0x48] sm:$0xff]
        %v713 = vld [vmem:[%s4 + $0x50] sm:$0xff]
        %v714 = vld [vmem:[%s4 + $0x58] sm:$0xff]
        %v715 = vld [vmem:[%s4 + $0x60] sm:$0xff]
        %v716 = vld [vmem:[%s4 + $0x68] sm:$0xff]
        %v717 = vld [vmem:[%s4 + $0x70] sm:$0xff]
        %v718 = vld [vmem:[%s4 + $0x78] sm:$0xff]
        %v719 = vld [vmem:[%s4 + $0x80] sm:$0xff]
        %v720 = vld [vmem:[%s4 + $0x88] sm:$0xff]
        %v721 = vcombine.low %v694, %v702
        %v723 = vunpack.c.l.s4 1983009808
        %v724 = vunpack.c.0.s8 %v723
        %v725 = vlaneseq
        %v726 = vshrl.u32 %v725, 7
        %v727 = vsub.s32 %v724, %v726
        %v728 = vrot.slane %v721, %v727
        %v729 = vcombine.high %v728, %v728
        %v731 = vsel %vm441, %v729, 0
        %733 = vmatprep.subr.mxu0 0.0
        %734 = vmatpush1.msra.mxu0 %v703
        %735 = vmatprep.subr.mxu0 0.0
        %736 = vmatpush1.msra.mxu0 %v704
        %737 = vmatprep.subr.mxu0 0.0
        %738 = vmatpush1.msra.mxu0 %v705
        %739 = vmatprep.subr.mxu0 0.0
        %740 = vmatpush1.msra.mxu0 %v706
        %741 = vmatprep.subr.mxu0 0.0
        %742 = vmatpush1.msra.mxu0 %v707
        %743 = vmatprep.subr.mxu0 0.0
        %744 = vmatpush1.msra.mxu0 %v708
        %745 = vmatprep.subr.mxu0 0.0
        %746 = vmatpush1.msra.mxu0 %v709
        %747 = vmatprep.subr.mxu0 0.0
        %748 = vmatpush1.msra.mxu0 %v710
        %749 = vmatprep.subr.mxu0 0.0
        %750 = vmatpush1.msra.mxu0 %v711
        %751 = vmatprep.subr.mxu0 0.0
        %752 = vmatpush1.msra.mxu0 %v712
        %753 = vmatprep.subr.mxu0 0.0
        %754 = vmatpush1.msra.mxu0 %v713
        %755 = vmatprep.subr.mxu0 0.0
        %756 = vmatpush1.msra.mxu0 %v714
        %757 = vmatprep.subr.mxu0 0.0
        %758 = vmatpush1.msra.mxu0 %v715
        %759 = vmatprep.subr.mxu0 0.0
        %760 = vmatpush1.msra.mxu0 %v716
        %761 = vmatprep.subr.mxu0 0.0
        %762 = vmatpush1.msra.mxu0 %v717
        %763 = vmatprep.subr.mxu0 0.0
        %764 = vmatpush1.msra.mxu0 %v718
        %765 = vmatprep.subr.mxu0 0.0
        %766 = vmatpush1.msra.mxu0 %v719
        %767 = vmatprep.subr.mxu0 0.0
        %768 = vmatpush1.msra.mxu0 %v720
        %769 = vmatprep.subr.mxu0 0.0
        %770 = vmatpush1.msra.mxu0 0.0
        %771 = vmatprep.subr.mxu0 0.0
        %772 = vmatpush1.msra.mxu0 0.0
        %773 = vmatprep.subr.mxu0 0.0
        %774 = vmatpush1.msra.mxu0 0.0
        %775 = vmatprep.subr.mxu0 0.0
        %776 = vmatpush1.msra.mxu0 0.0
        %777 = vmatprep.subr.mxu0 0.0
        %778 = vmatpush1.msra.mxu0 0.0
        %779 = vmatprep.subr.mxu0 0.0
        %780 = vmatpush1.msra.mxu0 0.0
        %781 = vmatprep.subr.mxu0 0.0
        %782 = vmatpush1.msra.mxu0 0.0
        %783 = vmatprep.subr.mxu0 0.0
        %784 = vmatpush1.msra.mxu0 0.0
        %785 = vmatprep.subr.mxu0 0.0
        %786 = vmatpush1.msra.mxu0 0.0
        %787 = vmatprep.subr.mxu0 0.0
        %788 = vmatpush1.msra.mxu0 0.0
        %789 = vmatprep.subr.mxu0 0.0
        %790 = vmatpush1.msra.mxu0 0.0
        %791 = vmatprep.subr.mxu0 0.0
        %792 = vmatpush1.msra.mxu0 0.0
        %793 = vmatprep.subr.mxu0 0.0
        %794 = vmatpush1.msra.mxu0 0.0
        %795 = vmatprep.subr.mxu0 0.0
        %796 = vmatpush1.msra.mxu0 0.0
        %797 = vmatprep.mubr.f32.mxu0 %v731
        %798 = vmatmul.mubr.f32.gmra.mrb[0].mxu0 %v728
        %v799 = vpop.f32.mrb[0].mxu0
        %v800 = vadd.f32 0.0, %v799
        %v801 = vpop.f32.mrb[0].mxu0
        %802 = vdwg.mxu0
        %v803 = vld [vmem:[%s5] sm:$0x1]
        %v805 = vlaneseq
        %v806 = vshrl.u32 %v805, 7
        %v807 = vsub.s32 0, %v806
        %v808 = vrot.slane %v803, %v807
        %v810 = vmul.f32 %v800, %v808
        %v811 = vld [vmem:[%s6] sm:$0x1]
        %v813 = vlaneseq
        %v814 = vshrl.u32 %v813, 7
        %v815 = vsub.s32 0, %v814
        %v816 = vrot.slane %v811, %v815
        %v818 = vadd.f32 %v810, %v816
        %v819 = vmax.f32 %v818, 0.0
        %820 = vst.msk [vmem:[%s271] sm:$0xf] %vm571, %v819
        %s821 = sand.u32 %s181, 1
        %s822 = scalar_lea.sflag [#allocation5], %s821
        %s823 = sand.u32 %s181, 1
        %s824 = smul.addr %s823, 4
        %s825 = scalar_lea.vmem [#allocation4], %s824
        // Predicated region
        $region49: #{encoder2_forward.5} parent=47 // pred_check
          %p826 = pneg %p191
        $region50: #{encoder2_forward.5} parent=47 // pred_check_branch
          %828 = sbr.rel (%p826) target = $region52
        $region51: #{encoder2_forward.5} parent=47 // pred_region
          %s830 = ssub.s32 64, 64
          %831 = vsyncadd %s822, %s830
          %s832 = smul.addr %s21, 64
          %s833 = scalar_lea.hbm %s7, %s832
          %s835 = sshll.u32 %s825, 4
          %s836 = int_to_ptr.vmem [resolvable:$true] %s835
          %838 = dma.vmem_to_hbm [thread:$0]  %s836, 64, %s833, %s822
        $region52: #{encoder2_forward.5} parent=47 // pred_fallthru
          _
      $region48: #{encoder2_forward.5} parent=5 // pred_fallthru
        _
      %p839 = scmp.le.s32.totalorder 2, %s16
      // Predicated region
      $region53: #{encoder2_forward.5} parent=5 // pred_check
        %p840 = pneg %p839
      $region54: #{encoder2_forward.5} parent=5 // pred_check_branch
        %842 = sbr.rel (%p840) target = $region56
      $region55: #{encoder2_forward.5} parent=5 // pred_region
        %s843 = ssub.s32 %s16, 2
        // Predicated region
        $region57: #{encoder2_forward.5} parent=55 // pred_check
          %p844 = pneg %p197
        $region58: #{encoder2_forward.5} parent=55 // pred_check_branch
          %846 = sbr.rel (%p844) target = $region60
        $region59: #{encoder2_forward.5} parent=55 // pred_region
          %s847 = sand.u32 %s182, 1
          %s848 = scalar_lea.sflag [#allocation5], %s847
          %s849 = sand.u32 %s182, 1
          %s850 = smul.addr %s849, 4
          %s851 = scalar_lea.vmem [#allocation4], %s850
          %852 = dma.done %s848, 64
        $region60: #{encoder2_forward.5} parent=55 // pred_fallthru
          _
      $region56: #{encoder2_forward.5} parent=5 // pred_fallthru
        _
    $region6: #{encoder2_forward.5} parent=1 // loop_footer
      %s20 = sadd.s32 1, %s16
    $region7: #{encoder2_forward.5} parent=1 // loop_footer_branch
      %15 = sbr.rel target = $region3
    $region8: #{encoder2_forward.5} parent=1 // loop_exit
      _
    %853 = vsyncpa [#allocation5], 1
    %s854 = scalar_lea.sflag [#allocation5], 1
    %855 = vsyncpa %s854, 1

// kernel: encoder2_forward.3
$region0: #{encoder2_forward.3}
  #allocation0 [shape = 'u32[]', space=smem, size = 0x4, offset = 0x4, fixed_abs, tag = 'smem constant byte address 0x4 - core index']
  #allocation1 [shape = 'u32[144,128]{1,0:T(1,128)}', space=vmem, size = 0x12000, scoped, tag = 'internal scratch']
  #allocation2 [shape = 'f32[10,10,3]{2,1,0:T(8,128)}', space=vmem, size = 0x14000, scoped, tag = 'scratch operand']
  #allocation3 [shape = 'f32[10,10,4]{2,1,0:T(8,128)}', space=vmem, size = 0x14000, scoped, tag = 'scratch operand']
  %s0 = inlined_call_operand.vmem [shape: f32[2,16,16,3], index: 0, kind: input, shape index: {}]
  %s1 = inlined_call_operand.vmem [shape: f32[27,4], index: 1, kind: input, shape index: {}]
  %s2 = inlined_call_operand.vmem [shape: f32[1,4], index: 2, kind: input, shape index: {}]
  %s3 = inlined_call_operand.vmem [shape: f32[1,4], index: 3, kind: input, shape index: {}]
  %s4 = inlined_call_operand.vmem [shape: f32[36,4], index: 4, kind: input, shape index: {}]
  %s5 = inlined_call_operand.vmem [shape: f32[1,4], index: 5, kind: input, shape index: {}]
  %s6 = inlined_call_operand.vmem [shape: f32[1,4], index: 6, kind: input, shape index: {}]
  %s7 = inlined_call_operand.vmem [shape: f32[2,64,4], index: 7, kind: output, shape index: {}]
  %s8 = sld [smem:[#allocation0]]
  $region61: #{encoder2_forward.3} parent=0
    _
  %s10 = ssub.s32 1, %s8
  %s11 = scalar_select 0, %s10, %s8
  loop: start=0, step=1, limit=4
  $region2: #{encoder2_forward.3} parent=0 // loop_pre_header
    _
  $region3: #{encoder2_forward.3} parent=0 // loop_header
    %s13 = sphi 0, %s17
    %p14 = scmp.ge.s32.totalorder %s13, 4
    %s23 = sphi 0, %s25
    %s26 = sphi 0, %s23
    %s27 = sphi 0, %s26
    %s43 = sphi 0, %s27
    %s47 = sphi 0, %s47
    %s49 = sphi 0, %s47
    %s50 = sphi 0, %s49
    %s64 = sphi 0, %s50
    %s68 = sphi 0, %s68
    %s70 = sphi 0, %s68
    %s71 = sphi 0, %s70
    %s85 = sphi 0, %s71
    %s89 = sphi 0, %s89
    %s91 = sphi 0, %s89
    %s92 = sphi 0, %s91
    %s106 = sphi 0, %s92
    %s110 = sphi 0, %s110
    %s112 = sphi 0, %s110
    %s113 = sphi 0, %s112
    %s127 = sphi 0, %s113
    %s131 = sphi 0, %s131
    %s133 = sphi 0, %s131
    %s134 = sphi 0, %s133
    %s148 = sphi 0, %s134
    %s152 = sphi 0, %s152
    %s154 = sphi 0, %s152
    %s155 = sphi 0, %s154
    %s169 = sphi 0, %s155
    %s175 = sphi 0, %s177
    %s178 = sphi 0, %s175
    %s179 = sphi 0, %s178
    %s195 = sphi 0, %s179
  $region4: #{encoder2_forward.3} parent=0 // loop_header_branch
    %16 = sbr.rel (%p14) target = $region8
  $region5: #{encoder2_forward.3} parent=0 // loop_body
    %s18 = ssub.s32 %s13, 1
    %s19 = ssub.s32 %s13, 2
    %s20 = sadd.s32 %s13, 1
    %s21 = ssub.s32 %s13, %s20
    %p22 = scmp.eq.s32.totalorder %s21, 0
    %s24 = sadd.s32 %s23, 1
    %s25 = scalar_select %p22, %s23, %s24
    %p28 = pneg %p22
    %p29 = scmp.eq.s32.totalorder %s13, 1
    %p30 = por %p28, %p29
    %p31 = scmp.ne.s32.totalorder %s23, %s26
    %p32 = scmp.eq.s32.totalorder %s13, 0
    %p33 = por %p31, %p32
    %p34 = scmp.ne.s32.totalorder %s23, %s26
    %p35 = scmp.eq.s32.totalorder %s18, 1
    %p36 = por %p34, %p35
    %p37 = scmp.ne.s32.totalorder %s26, %s27
    %p38 = scmp.eq.s32.totalorder %s18, 0
    %p39 = por %p37, %p38
    %p40 = scmp.ne.s32.totalorder %s26, %s27
    %p41 = scmp.eq.s32.totalorder %s19, 1
    %p42 = por %p40, %p41
    %p44 = scmp.ne.s32.totalorder %s27, %s43
    %p45 = scmp.eq.s32.totalorder %s19, 0
    %p46 = por %p44, %p45
    %s48 = sadd.s32 %s47, 1
    %p51 = scmp.eq.s32.totalorder %s13, 1
    %p52 = scmp.ne.s32.totalorder %s47, %s49
    %p53 = scmp.eq.s32.totalorder %s13, 0
    %p54 = por %p52, %p53
    %p55 = scmp.ne.s32.totalorder %s47, %s49
    %p56 = scmp.eq.s32.totalorder %s18, 1
    %p57 = por %p55, %p56
    %p58 = scmp.ne.s32.totalorder %s49, %s50
    %p59 = scmp.eq.s32.totalorder %s18, 0
    %p60 = por %p58, %p59
    %p61 = scmp.ne.s32.totalorder %s49, %s50
    %p62 = scmp.eq.s32.totalorder %s19, 1
    %p63 = por %p61, %p62
    %p65 = scmp.ne.s32.totalorder %s50, %s64
    %p66 = scmp.eq.s32.totalorder %s19, 0
    %p67 = por %p65, %p66
    %s69 = sadd.s32 %s68, 1
    %p72 = scmp.eq.s32.totalorder %s13, 1
    %p73 = scmp.ne.s32.totalorder %s68, %s70
    %p74 = scmp.eq.s32.totalorder %s13, 0
    %p75 = por %p73, %p74
    %p76 = scmp.ne.s32.totalorder %s68, %s70
    %p77 = scmp.eq.s32.totalorder %s18, 1
    %p78 = por %p76, %p77
    %p79 = scmp.ne.s32.totalorder %s70, %s71
    %p80 = scmp.eq.s32.totalorder %s18, 0
    %p81 = por %p79, %p80
    %p82 = scmp.ne.s32.totalorder %s70, %s71
    %p83 = scmp.eq.s32.totalorder %s19, 1
    %p84 = por %p82, %p83
    %p86 = scmp.ne.s32.totalorder %s71, %s85
    %p87 = scmp.eq.s32.totalorder %s19, 0
    %p88 = por %p86, %p87
    %s90 = sadd.s32 %s89, 1
    %p93 = scmp.eq.s32.totalorder %s13, 1
    %p94 = scmp.ne.s32.totalorder %s89, %s91
    %p95 = scmp.eq.s32.totalorder %s13, 0
    %p96 = por %p94, %p95
    %p97 = scmp.ne.s32.totalorder %s89, %s91
    %p98 = scmp.eq.s32.totalorder %s18, 1
    %p99 = por %p97, %p98
    %p100 = scmp.ne.s32.totalorder %s91, %s92
    %p101 = scmp.eq.s32.totalorder %s18, 0
    %p102 = por %p100, %p101
    %p103 = scmp.ne.s32.totalorder %s91, %s92
    %p104 = scmp.eq.s32.totalorder %s19, 1
    %p105 = por %p103, %p104
    %p107 = scmp.ne.s32.totalorder %s92, %s106
    %p108 = scmp.eq.s32.totalorder %s19, 0
    %p109 = por %p107, %p108
    %s111 = sadd.s32 %s110, 1
    %p114 = scmp.eq.s32.totalorder %s13, 1
    %p115 = scmp.ne.s32.totalorder %s110, %s112
    %p116 = scmp.eq.s32.totalorder %s13, 0
    %p117 = por %p115, %p116
    %p118 = scmp.ne.s32.totalorder %s110, %s112
    %p119 = scmp.eq.s32.totalorder %s18, 1
    %p120 = por %p118, %p119
    %p121 = scmp.ne.s32.totalorder %s112, %s113
    %p122 = scmp.eq.s32.totalorder %s18, 0
    %p123 = por %p121, %p122
    %p124 = scmp.ne.s32.totalorder %s112, %s113
    %p125 = scmp.eq.s32.totalorder %s19, 1
    %p126 = por %p124, %p125
    %p128 = scmp.ne.s32.totalorder %s113, %s127
    %p129 = scmp.eq.s32.totalorder %s19, 0
    %p130 = por %p128, %p129
    %s132 = sadd.s32 %s131, 1
    %p135 = scmp.eq.s32.totalorder %s13, 1
    %p136 = scmp.ne.s32.totalorder %s131, %s133
    %p137 = scmp.eq.s32.totalorder %s13, 0
    %p138 = por %p136, %p137
    %p139 = scmp.ne.s32.totalorder %s131, %s133
    %p140 = scmp.eq.s32.totalorder %s18, 1
    %p141 = por %p139, %p140
    %p142 = scmp.ne.s32.totalorder %s133, %s134
    %p143 = scmp.eq.s32.totalorder %s18, 0
    %p144 = por %p142, %p143
    %p145 = scmp.ne.s32.totalorder %s133, %s134
    %p146 = scmp.eq.s32.totalorder %s19, 1
    %p147 = por %p145, %p146
    %p149 = scmp.ne.s32.totalorder %s134, %s148
    %p150 = scmp.eq.s32.totalorder %s19, 0
    %p151 = por %p149, %p150
    %s153 = sadd.s32 %s152, 1
    %p156 = scmp.eq.s32.totalorder %s13, 1
    %p157 = scmp.ne.s32.totalorder %s152, %s154
    %p158 = scmp.eq.s32.totalorder %s13, 0
    %p159 = por %p157, %p158
    %p160 = scmp.ne.s32.totalorder %s152, %s154
    %p161 = scmp.eq.s32.totalorder %s18, 1
    %p162 = por %p160, %p161
    %p163 = scmp.ne.s32.totalorder %s154, %s155
    %p164 = scmp.eq.s32.totalorder %s18, 0
    %p165 = por %p163, %p164
    %p166 = scmp.ne.s32.totalorder %s154, %s155
    %p167 = scmp.eq.s32.totalorder %s19, 1
    %p168 = por %p166, %p167
    %p170 = scmp.ne.s32.totalorder %s155, %s169
    %p171 = scmp.eq.s32.totalorder %s19, 0
    %p172 = por %p170, %p171
    %s173 = ssub.s32 %s13, %s20
    %p174 = scmp.eq.s32.totalorder %s173, 0
    %s176 = sadd.s32 %s175, 1
    %s177 = scalar_select %p174, %s175, %s176
    %p180 = pneg %p174
    %p181 = scmp.eq.s32.totalorder %s13, 1
    %p182 = por %p180, %p181
    %p183 = scmp.ne.s32.totalorder %s175, %s178
    %p184 = scmp.eq.s32.totalorder %s13, 0
    %p185 = por %p183, %p184
    %p186 = scmp.ne.s32.totalorder %s175, %s178
    %p187 = scmp.eq.s32.totalorder %s18, 1
    %p188 = por %p186, %p187
    %p189 = scmp.ne.s32.totalorder %s178, %s179
    %p190 = scmp.eq.s32.totalorder %s18, 0
    %p191 = por %p189, %p190
    %p192 = scmp.ne.s32.totalorder %s178, %s179
    %p193 = scmp.eq.s32.totalorder %s19, 1
    %p194 = por %p192, %p193
    %p196 = scmp.ne.s32.totalorder %s179, %s195
    %p197 = scmp.eq.s32.totalorder %s19, 0
    %p198 = por %p196, %p197
    %p199 = scmp.le.s32.totalorder 1, %s13
    %p200 = scmp.lt.s32.totalorder %s13, 3
    %p201 = pnand %p199, %p200
    %p202 = pneg %p201
    // Predicated region
    $region9: #{encoder2_forward.3} parent=5 // pred_check
      _
    $region10: #{encoder2_forward.3} parent=5 // pred_check_branch
      %204 = sbr.rel (%p201) target = $region12
    $region11: #{encoder2_forward.3} parent=5 // pred_region
      %s205 = ssub.s32 %s13, 1
      // Predicated region
      $region13: #{encoder2_forward.3} parent=11 // pred_check
        %p206 = pneg %p60
      $region14: #{encoder2_forward.3} parent=11 // pred_check_branch
        %208 = sbr.rel (%p206) target = $region16
      $region15: #{encoder2_forward.3} parent=11 // pred_region
        _
      $region16: #{encoder2_forward.3} parent=11 // pred_fallthru
        _
      // Predicated region
      $region17: #{encoder2_forward.3} parent=11 // pred_check
        %p209 = pneg %p81
      $region18: #{encoder2_forward.3} parent=11 // pred_check_branch
        %211 = sbr.rel (%p209) target = $region20
      $region19: #{encoder2_forward.3} parent=11 // pred_region
        _
      $region20: #{encoder2_forward.3} parent=11 // pred_fallthru
        _
      // Predicated region
      $region21: #{encoder2_forward.3} parent=11 // pred_check
        %p212 = pneg %p102
      $region22: #{encoder2_forward.3} parent=11 // pred_check_branch
        %214 = sbr.rel (%p212) target = $region24
      $region23: #{encoder2_forward.3} parent=11 // pred_region
        _
      $region24: #{encoder2_forward.3} parent=11 // pred_fallthru
        _
      // Predicated region
      $region25: #{encoder2_forward.3} parent=11 // pred_check
        %p215 = pneg %p123
      $region26: #{encoder2_forward.3} parent=11 // pred_check_branch
        %217 = sbr.rel (%p215) target = $region28
      $region27: #{encoder2_forward.3} parent=11 // pred_region
        _
      $region28: #{encoder2_forward.3} parent=11 // pred_fallthru
        _
      // Predicated region
      $region29: #{encoder2_forward.3} parent=11 // pred_check
        %p218 = pneg %p144
      $region30: #{encoder2_forward.3} parent=11 // pred_check_branch
        %220 = sbr.rel (%p218) target = $region32
      $region31: #{encoder2_forward.3} parent=11 // pred_region
        _
      $region32: #{encoder2_forward.3} parent=11 // pred_fallthru
        _
      // Predicated region
      $region33: #{encoder2_forward.3} parent=11 // pred_check
        %p221 = pneg %p165
      $region34: #{encoder2_forward.3} parent=11 // pred_check_branch
        %223 = sbr.rel (%p221) target = $region36
      $region35: #{encoder2_forward.3} parent=11 // pred_region
        _
      $region36: #{encoder2_forward.3} parent=11 // pred_fallthru
        _
    $region12: #{encoder2_forward.3} parent=5 // pred_fallthru
      _
    %p224 = scmp.lt.s32.totalorder %s13, 2
    // Predicated region
    $region37: #{encoder2_forward.3} parent=5 // pred_check
      %p225 = pneg %p224
    $region38: #{encoder2_forward.3} parent=5 // pred_check_branch
      %227 = sbr.rel (%p225) target = $region40
    $region39: #{encoder2_forward.3} parent=5 // pred_region
      // Predicated region
      $region41: #{encoder2_forward.3} parent=39 // pred_check
        %p228 = pneg %p33
      $region42: #{encoder2_forward.3} parent=39 // pred_check_branch
        %230 = sbr.rel (%p228) target = $region44
      $region43: #{encoder2_forward.3} parent=39 // pred_region
        %p231 = scmp.lt.s32.totalorder %s13, 1
        %s232 = scalar_select %p231, %s13, 1
        %s233 = smul.addr %s232, 32
        %s234 = smul.addr %s233, 8
        %s235 = scalar_lea.vmem %s0, %s234
      $region44: #{encoder2_forward.3} parent=39 // pred_fallthru
        _
    $region40: #{encoder2_forward.3} parent=5 // pred_fallthru
      _
    %p236 = scmp.le.s32.totalorder 1, %s13
    %p237 = scmp.lt.s32.totalorder %s13, 3
    %p238 = pnand %p236, %p237
    %p239 = pneg %p238
    // Predicated region
    $region45: #{encoder2_forward.3} parent=5 // pred_check
      _
    $region46: #{encoder2_forward.3} parent=5 // pred_check_branch
      %241 = sbr.rel (%p238) target = $region48
    $region47: #{encoder2_forward.3} parent=5 // pred_region
      %s242 = ssub.s32 %s13, 1
      %p243 = scmp.lt.s32.totalorder %s18, 1
      %s244 = scalar_select %p243, %s18, 1
      %s245 = smul.addr %s244, 32
      %s246 = smul.addr %s245, 8
      %s247 = scalar_lea.vmem %s0, %s246
      %p248 = pneg %p39
      %p249 = pneg %p36
      %p250 = pneg %p60
      %p251 = pneg %p57
      %p252 = pneg %p81
      %p253 = pneg %p78
      %p254 = pneg %p102
      %p255 = pneg %p99
      %p256 = pneg %p123
      %p257 = pneg %p120
      %p258 = pneg %p144
      %p259 = pneg %p141
      %p260 = pneg %p165
      %p261 = pneg %p162
      %p262 = pneg %p191
      %p263 = pneg %p188
      %p264 = scmp.lt.s32.totalorder %s18, 1
      %s265 = scalar_select %p264, %s18, 1
      %s266 = smul.addr %s265, 8
      %s267 = smul.addr %s266, 8
      %s268 = scalar_lea.vmem %s7, %s267
      %p269 = scmp.lt.s32.totalorder %s18, 1
      %s270 = scalar_select %p269, %s18, 1
      %s271 = smul.addr %s270, 32
      %s272 = smul.addr %s271, 8
      %s273 = scalar_lea.vmem %s0, %s272
      %p274 = scmp.lt.s32.totalorder %s18, 1
      %s275 = scalar_select %p274, %s18, 1
      %s276 = smul.addr %s275, 8
      %s277 = smul.addr %s276, 8
      %s278 = scalar_lea.vmem %s7, %s277
      %v279 = vld [vmem:[%s273] sm:$0xff]
      %v280 = vld [vmem:[%s273 + $0x8] sm:$0xff]
      %v281 = vld [vmem:[%s273 + $0x10] sm:$0xff]
      %v282 = vld [vmem:[%s273 + $0x18] sm:$0xff]
      %v283 = vld [vmem:[%s273 + $0x20] sm:$0xff]
      %v284 = vld [vmem:[%s273 + $0x28] sm:$0xff]
      %v285 = vld [vmem:[%s273 + $0x30] sm:$0xff]
      %v286 = vld [vmem:[%s273 + $0x38] sm:$0xff]
      %v287 = vld [vmem:[%s273 + $0x40] sm:$0xff]
      %v288 = vld [vmem:[%s273 + $0x48] sm:$0xff]
      %v289 = vld [vmem:[%s273 + $0x50] sm:$0xff]
      %v290 = vld [vmem:[%s273 + $0x58] sm:$0xff]
      %v291 = vld [vmem:[%s273 + $0x60] sm:$0xff]
      %v292 = vld [vmem:[%s273 + $0x68] sm:$0xff]
      %v293 = vld [vmem:[%s273 + $0x70] sm:$0xff]
      %v294 = vld [vmem:[%s273 + $0x78] sm:$0xff]
      %v295 = vld [vmem:[%s273 + $0x80] sm:$0xff]
      %v296 = vld [vmem:[%s273 + $0x88] sm:$0xff]
      %v297 = vld [vmem:[%s273 + $0x90] sm:$0xff]
      %v298 = vld [vmem:[%s273 + $0x98] sm:$0xff]
      %v299 = vld [vmem:[%s273 + $0xa0] sm:$0xff]
      %v300 = vld [vmem:[%s273 + $0xa8] sm:$0xff]
      %v301 = vld [vmem:[%s273 + $0xb0] sm:$0xff]
      %v302 = vld [vmem:[%s273 + $0xb8] sm:$0xff]
      %v303 = vld [vmem:[%s273 + $0xc0] sm:$0xff]
      %v304 = vld [vmem:[%s273 + $0xc8] sm:$0xff]
      %v305 = vld [vmem:[%s273 + $0xd0] sm:$0xff]
      %v306 = vld [vmem:[%s273 + $0xd8] sm:$0xff]
      %v307 = vld [vmem:[%s273 + $0xe0] sm:$0xff]
      %v308 = vld [vmem:[%s273 + $0xe8] sm:$0xff]
      %v309 = vld [vmem:[%s273 + $0xf0] sm:$0xff]
      %v310 = vld [vmem:[%s273 + $0xf8] sm:$0xff]
      %vm311 = vcmask 23552
      %v312 = vsel %vm311, %v279, -inf
      %v313 = vsel %vm311, %v281, -inf
      %v314 = vmax.f32 %v312, %v313
      %v315 = vsel %vm311, %v280, -inf
      %v316 = vsel %vm311, %v282, -inf
      %v317 = vmax.f32 %v315, %v316
      %v318 = vsel %vm311, %v283, -inf
      %v319 = vsel %vm311, %v285, -inf
      %v320 = vmax.f32 %v318, %v319
      %v321 = vsel %vm311, %v284, -inf
      %v322 = vsel %vm311, %v286, -inf
      %v323 = vmax.f32 %v321, %v322
      %v324 = vsel %vm311, %v287, -inf
      %v325 = vsel %vm311, %v289, -inf
      %v326 = vmax.f32 %v324, %v325
      %v327 = vsel %vm311, %v288, -inf
      %v328 = vsel %vm311, %v290, -inf
      %v329 = vmax.f32 %v327, %v328
      %v330 = vsel %vm311, %v291, -inf
      %v331 = vsel %vm311, %v293, -inf
      %v332 = vmax.f32 %v330, %v331
      %v333 = vsel %vm311, %v292, -inf
      %v334 = vsel %vm311, %v294, -inf
      %v335 = vmax.f32 %v333, %v334
      %v336 = vsel %vm311, %v295, -inf
      %v337 = vsel %vm311, %v297, -inf
      %v338 = vmax.f32 %v336, %v337
      %v339 = vsel %vm311, %v296, -inf
      %v340 = vsel %vm311, %v298, -inf
      %v341 = vmax.f32 %v339, %v340
      %v342 = vsel %vm311, %v299, -inf
      %v343 = vsel %vm311, %v301, -inf
      %v344 = vmax.f32 %v342, %v343
      %v345 = vsel %vm311, %v300, -inf
      %v346 = vsel %vm311, %v302, -inf
      %v347 = vmax.f32 %v345, %v346
      %v348 = vsel %vm311, %v303, -inf
      %v349 = vsel %vm311, %v305, -inf
      %v350 = vmax.f32 %v348, %v349
      %v351 = vsel %vm311, %v304, -inf
      %v352 = vsel %vm311, %v306, -inf
      %v353 = vmax.f32 %v351, %v352
      %v354 = vsel %vm311, %v307, -inf
      %v355 = vsel %vm311, %v309, -inf
      %v356 = vmax.f32 %v354, %v355
      %v357 = vsel %vm311, %v308, -inf
      %v358 = vsel %vm311, %v310, -inf
      %v359 = vmax.f32 %v357, %v358
      %v376 = vcombine.high %v314, %v314
      %v378 = vunpack.c.l.s4 1983009808
      %v379 = vunpack.c.0.s8 %v378
      %v380 = vlaneseq
      %v381 = vshrl.u32 %v380, 7
      %v382 = vsub.s32 %v379, %v381
      %v383 = vrot.slane %v314, %v382
      %v385 = vunpack.c.l.s4 1983009808
      %v386 = vunpack.c.0.s8 %v385
      %v387 = vlaneseq
      %v388 = vshrl.u32 %v387, 7
      %v389 = vsub.s32 %v386, %v388
      %v390 = vrot.slane %v376, %v389
      %v391 = vcombine.high %v383, %v383
      %v392 = vcombine.high %v390, %v390
      %v393 = vcombine.high %v317, %v317
      %v395 = vunpack.c.l.s4 1983009808
      %v396 = vunpack.c.0.s8 %v395
      %v397 = vlaneseq
      %v398 = vshrl.u32 %v397, 7
      %v399 = vsub.s32 %v396, %v398
      %v400 = vrot.slane %v317, %v399
      %v402 = vunpack.c.l.s4 1983009808
      %v403 = vunpack.c.0.s8 %v402
      %v404 = vlaneseq
      %v405 = vshrl.u32 %v404, 7
      %v406 = vsub.s32 %v403, %v405
      %v407 = vrot.slane %v393, %v406
      %v408 = vcombine.high %v400, %v400
      %v409 = vcombine.high %v407, %v407
      %v410 = vcombine.high %v320, %v320
      %v412 = vunpack.c.l.s4 1983009808
      %v413 = vunpack.c.0.s8 %v412
      %v414 = vlaneseq
      %v415 = vshrl.u32 %v414, 7
      %v416 = vsub.s32 %v413, %v415
      %v417 = vrot.slane %v320, %v416
      %v419 = vunpack.c.l.s4 1983009808
      %v420 = vunpack.c.0.s8 %v419
      %v421 = vlaneseq
      %v422 = vshrl.u32 %v421, 7
      %v423 = vsub.s32 %v420, %v422
      %v424 = vrot.slane %v410, %v423
      %v425 = vcombine.high %v417, %v417
      %v426 = vcombine.high %v424, %v424
      %v427 = vcombine.high %v323, %v323
      %v429 = vunpack.c.l.s4 1983009808
      %v430 = vunpack.c.0.s8 %v429
      %v431 = vlaneseq
      %v432 = vshrl.u32 %v431, 7
      %v433 = vsub.s32 %v430, %v432
      %v434 = vrot.slane %v323, %v433
      %v436 = vunpack.c.l.s4 1983009808
      %v437 = vunpack.c.0.s8 %v436
      %v438 = vlaneseq
      %v439 = vshrl.u32 %v438, 7
      %v440 = vsub.s32 %v437, %v439
      %v441 = vrot.slane %v427, %v440
      %v442 = vcombine.high %v434, %v434
      %v443 = vcombine.high %v441, %v441
      %v444 = vcombine.high %v326, %v326
      %v446 = vunpack.c.l.s4 1983009808
      %v447 = vunpack.c.0.s8 %v446
      %v448 = vlaneseq
      %v449 = vshrl.u32 %v448, 7
      %v450 = vsub.s32 %v447, %v449
      %v451 = vrot.slane %v326, %v450
      %v453 = vunpack.c.l.s4 1983009808
      %v454 = vunpack.c.0.s8 %v453
      %v455 = vlaneseq
      %v456 = vshrl.u32 %v455, 7
      %v457 = vsub.s32 %v454, %v456
      %v458 = vrot.slane %v444, %v457
      %v459 = vcombine.high %v451, %v451
      %v460 = vcombine.high %v458, %v458
      %v461 = vcombine.high %v329, %v329
      %v463 = vunpack.c.l.s4 1983009808
      %v464 = vunpack.c.0.s8 %v463
      %v465 = vlaneseq
      %v466 = vshrl.u32 %v465, 7
      %v467 = vsub.s32 %v464, %v466
      %v468 = vrot.slane %v329, %v467
      %v470 = vunpack.c.l.s4 1983009808
      %v471 = vunpack.c.0.s8 %v470
      %v472 = vlaneseq
      %v473 = vshrl.u32 %v472, 7
      %v474 = vsub.s32 %v471, %v473
      %v475 = vrot.slane %v461, %v474
      %v476 = vcombine.high %v468, %v468
      %v477 = vcombine.high %v475, %v475
      %v478 = vcombine.high %v332, %v332
      %v480 = vunpack.c.l.s4 1983009808
      %v481 = vunpack.c.0.s8 %v480
      %v482 = vlaneseq
      %v483 = vshrl.u32 %v482, 7
      %v484 = vsub.s32 %v481, %v483
      %v485 = vrot.slane %v332, %v484
      %v487 = vunpack.c.l.s4 1983009808
      %v488 = vunpack.c.0.s8 %v487
      %v489 = vlaneseq
      %v490 = vshrl.u32 %v489, 7
      %v491 = vsub.s32 %v488, %v490
      %v492 = vrot.slane %v478, %v491
      %v493 = vcombine.high %v485, %v485
      %v494 = vcombine.high %v492, %v492
      %v495 = vcombine.high %v335, %v335
      %v497 = vunpack.c.l.s4 1983009808
      %v498 = vunpack.c.0.s8 %v497
      %v499 = vlaneseq
      %v500 = vshrl.u32 %v499, 7
      %v501 = vsub.s32 %v498, %v500
      %v502 = vrot.slane %v335, %v501
      %v504 = vunpack.c.l.s4 1983009808
      %v505 = vunpack.c.0.s8 %v504
      %v506 = vlaneseq
      %v507 = vshrl.u32 %v506, 7
      %v508 = vsub.s32 %v505, %v507
      %v509 = vrot.slane %v495, %v508
      %v510 = vcombine.high %v502, %v502
      %v511 = vcombine.high %v509, %v509
      %v512 = vcombine.high %v338, %v338
      %v514 = vunpack.c.l.s4 1983009808
      %v515 = vunpack.c.0.s8 %v514
      %v516 = vlaneseq
      %v517 = vshrl.u32 %v516, 7
      %v518 = vsub.s32 %v515, %v517
      %v519 = vrot.slane %v338, %v518
      %v521 = vunpack.c.l.s4 1983009808
      %v522 = vunpack.c.0.s8 %v521
      %v523 = vlaneseq
      %v524 = vshrl.u32 %v523, 7
      %v525 = vsub.s32 %v522, %v524
      %v526 = vrot.slane %v512, %v525
      %v527 = vcombine.high %v519, %v519
      %v528 = vcombine.high %v526, %v526
      %v529 = vcombine.high %v341, %v341
      %v531 = vunpack.c.l.s4 1983009808
      %v532 = vunpack.c.0.s8 %v531
      %v533 = vlaneseq
      %v534 = vshrl.u32 %v533, 7
      %v535 = vsub.s32 %v532, %v534
      %v536 = vrot.slane %v341, %v535
      %v538 = vunpack.c.l.s4 1983009808
      %v539 = vunpack.c.0.s8 %v538
      %v540 = vlaneseq
      %v541 = vshrl.u32 %v540, 7
      %v542 = vsub.s32 %v539, %v541
      %v543 = vrot.slane %v529, %v542
      %v544 = vcombine.high %v536, %v536
      %v545 = vcombine.high %v543, %v543
      %v546 = vcombine.high %v344, %v344
      %v548 = vunpack.c.l.s4 1983009808
      %v549 = vunpack.c.0.s8 %v548
      %v550 = vlaneseq
      %v551 = vshrl.u32 %v550, 7
      %v552 = vsub.s32 %v549, %v551
      %v553 = vrot.slane %v344, %v552
      %v555 = vunpack.c.l.s4 1983009808
      %v556 = vunpack.c.0.s8 %v555
      %v557 = vlaneseq
      %v558 = vshrl.u32 %v557, 7
      %v559 = vsub.s32 %v556, %v558
      %v560 = vrot.slane %v546, %v559
      %v561 = vcombine.high %v553, %v553
      %v562 = vcombine.high %v560, %v560
      %v563 = vcombine.high %v347, %v347
      %v565 = vunpack.c.l.s4 1983009808
      %v566 = vunpack.c.0.s8 %v565
      %v567 = vlaneseq
      %v568 = vshrl.u32 %v567, 7
      %v569 = vsub.s32 %v566, %v568
      %v570 = vrot.slane %v347, %v569
      %v572 = vunpack.c.l.s4 1983009808
      %v573 = vunpack.c.0.s8 %v572
      %v574 = vlaneseq
      %v575 = vshrl.u32 %v574, 7
      %v576 = vsub.s32 %v573, %v575
      %v577 = vrot.slane %v563, %v576
      %v578 = vcombine.high %v570, %v570
      %v579 = vcombine.high %v577, %v577
      %v580 = vcombine.high %v350, %v350
      %v582 = vunpack.c.l.s4 1983009808
      %v583 = vunpack.c.0.s8 %v582
      %v584 = vlaneseq
      %v585 = vshrl.u32 %v584, 7
      %v586 = vsub.s32 %v583, %v585
      %v587 = vrot.slane %v350, %v586
      %v589 = vunpack.c.l.s4 1983009808
      %v590 = vunpack.c.0.s8 %v589
      %v591 = vlaneseq
      %v592 = vshrl.u32 %v591, 7
      %v593 = vsub.s32 %v590, %v592
      %v594 = vrot.slane %v580, %v593
      %v595 = vcombine.high %v587, %v587
      %v596 = vcombine.high %v594, %v594
      %v597 = vcombine.high %v353, %v353
      %v599 = vunpack.c.l.s4 1983009808
      %v600 = vunpack.c.0.s8 %v599
      %v601 = vlaneseq
      %v602 = vshrl.u32 %v601, 7
      %v603 = vsub.s32 %v600, %v602
      %v604 = vrot.slane %v353, %v603
      %v606 = vunpack.c.l.s4 1983009808
      %v607 = vunpack.c.0.s8 %v606
      %v608 = vlaneseq
      %v609 = vshrl.u32 %v608, 7
      %v610 = vsub.s32 %v607, %v609
      %v611 = vrot.slane %v597, %v610
      %v612 = vcombine.high %v604, %v604
      %v613 = vcombine.high %v611, %v611
      %v614 = vcombine.high %v356, %v356
      %v616 = vunpack.c.l.s4 1983009808
      %v617 = vunpack.c.0.s8 %v616
      %v618 = vlaneseq
      %v619 = vshrl.u32 %v618, 7
      %v620 = vsub.s32 %v617, %v619
      %v621 = vrot.slane %v356, %v620
      %v623 = vunpack.c.l.s4 1983009808
      %v624 = vunpack.c.0.s8 %v623
      %v625 = vlaneseq
      %v626 = vshrl.u32 %v625, 7
      %v627 = vsub.s32 %v624, %v626
      %v628 = vrot.slane %v614, %v627
      %v629 = vcombine.high %v621, %v621
      %v630 = vcombine.high %v628, %v628
      %v631 = vcombine.high %v359, %v359
      %v633 = vunpack.c.l.s4 1983009808
      %v634 = vunpack.c.0.s8 %v633
      %v635 = vlaneseq
      %v636 = vshrl.u32 %v635, 7
      %v637 = vsub.s32 %v634, %v636
      %v638 = vrot.slane %v359, %v637
      %v640 = vunpack.c.l.s4 1983009808
      %v641 = vunpack.c.0.s8 %v640
      %v642 = vlaneseq
      %v643 = vshrl.u32 %v642, 7
      %v644 = vsub.s32 %v641, %v643
      %v645 = vrot.slane %v631, %v644
      %v646 = vcombine.high %v638, %v638
      %v647 = vcombine.high %v645, %v645
      %vm712 = vcmask 17408
      %v713 = vsel %vm712, %v383, -inf
      %v714 = vrot.slane %v713, 4
      %v715 = vmax.f32 %v713, %v714
      %v716 = vrot.slane %v715, 2
      %v717 = vmax.f32 %v715, %v716
      %v718 = vrot.slane %v717, 1
      %v719 = vmax.f32 %v717, %v718
      %v720 = vsel %vm712, %v391, -inf
      %v721 = vrot.slane %v720, 4
      %v722 = vmax.f32 %v720, %v721
      %v723 = vrot.slane %v722, 2
      %v724 = vmax.f32 %v722, %v723
      %v725 = vrot.slane %v724, 1
      %v726 = vmax.f32 %v724, %v725
      %v727 = vsel %vm712, %v390, -inf
      %v728 = vrot.slane %v727, 4
      %v729 = vmax.f32 %v727, %v728
      %v730 = vrot.slane %v729, 2
      %v731 = vmax.f32 %v729, %v730
      %v732 = vrot.slane %v731, 1
      %v733 = vmax.f32 %v731, %v732
      %v734 = vsel %vm712, %v392, -inf
      %v735 = vrot.slane %v734, 4
      %v736 = vmax.f32 %v734, %v735
      %v737 = vrot.slane %v736, 2
      %v738 = vmax.f32 %v736, %v737
      %v739 = vrot.slane %v738, 1
      %v740 = vmax.f32 %v738, %v739
      %v741 = vsel %vm712, %v400, -inf
      %v742 = vrot.slane %v741, 4
      %v743 = vmax.f32 %v741, %v742
      %v744 = vrot.slane %v743, 2
      %v745 = vmax.f32 %v743, %v744
      %v746 = vrot.slane %v745, 1
      %v747 = vmax.f32 %v745, %v746
      %v748 = vsel %vm712, %v408, -inf
      %v749 = vrot.slane %v748, 4
      %v750 = vmax.f32 %v748, %v749
      %v751 = vrot.slane %v750, 2
      %v752 = vmax.f32 %v750, %v751
      %v753 = vrot.slane %v752, 1
      %v754 = vmax.f32 %v752, %v753
      %v755 = vsel %vm712, %v407, -inf
      %v756 = vrot.slane %v755, 4
      %v757 = vmax.f32 %v755, %v756
      %v758 = vrot.slane %v757, 2
      %v759 = vmax.f32 %v757, %v758
      %v760 = vrot.slane %v759, 1
      %v761 = vmax.f32 %v759, %v760
      %v762 = vsel %vm712, %v409, -inf
      %v763 = vrot.slane %v762, 4
      %v764 = vmax.f32 %v762, %v763
      %v765 = vrot.slane %v764, 2
      %v766 = vmax.f32 %v764, %v765
      %v767 = vrot.slane %v766, 1
      %v768 = vmax.f32 %v766, %v767
      %v769 = vsel %vm712, %v417, -inf
      %v770 = vrot.slane %v769, 4
      %v771 = vmax.f32 %v769, %v770
      %v772 = vrot.slane %v771, 2
      %v773 = vmax.f32 %v771, %v772
      %v774 = vrot.slane %v773, 1
      %v775 = vmax.f32 %v773, %v774
      %v776 = vsel %vm712, %v425, -inf
      %v777 = vrot.slane %v776, 4
      %v778 = vmax.f32 %v776, %v777
      %v779 = vrot.slane %v778, 2
      %v780 = vmax.f32 %v778, %v779
      %v781 = vrot.slane %v780, 1
      %v782 = vmax.f32 %v780, %v781
      %v783 = vsel %vm712, %v424, -inf
      %v784 = vrot.slane %v783, 4
      %v785 = vmax.f32 %v783, %v784
      %v786 = vrot.slane %v785, 2
      %v787 = vmax.f32 %v785, %v786
      %v788 = vrot.slane %v787, 1
      %v789 = vmax.f32 %v787, %v788
      %v790 = vsel %vm712, %v426, -inf
      %v791 = vrot.slane %v790, 4
      %v792 = vmax.f32 %v790, %v791
      %v793 = vrot.slane %v792, 2
      %v794 = vmax.f32 %v792, %v793
      %v795 = vrot.slane %v794, 1
      %v796 = vmax.f32 %v794, %v795
      %v797 = vsel %vm712, %v434, -inf
      %v798 = vrot.slane %v797, 4
      %v799 = vmax.f32 %v797, %v798
      %v800 = vrot.slane %v799, 2
      %v801 = vmax.f32 %v799, %v800
      %v802 = vrot.slane %v801, 1
      %v803 = vmax.f32 %v801, %v802
      %v804 = vsel %vm712, %v442, -inf
      %v805 = vrot.slane %v804, 4
      %v806 = vmax.f32 %v804, %v805
      %v807 = vrot.slane %v806, 2
      %v808 = vmax.f32 %v806, %v807
      %v809 = vrot.slane %v808, 1
      %v810 = vmax.f32 %v808, %v809
      %v811 = vsel %vm712, %v441, -inf
      %v812 = vrot.slane %v811, 4
      %v813 = vmax.f32 %v811, %v812
      %v814 = vrot.slane %v813, 2
      %v815 = vmax.f32 %v813, %v814
      %v816 = vrot.slane %v815, 1
      %v817 = vmax.f32 %v815, %v816
      %v818 = vsel %vm712, %v443, -inf
      %v819 = vrot.slane %v818, 4
      %v820 = vmax.f32 %v818, %v819
      %v821 = vrot.slane %v820, 2
      %v822 = vmax.f32 %v820, %v821
      %v823 = vrot.slane %v822, 1
      %v824 = vmax.f32 %v822, %v823
      %v825 = vsel %vm712, %v451, -inf
      %v826 = vrot.slane %v825, 4
      %v827 = vmax.f32 %v825, %v826
      %v828 = vrot.slane %v827, 2
      %v829 = vmax.f32 %v827, %v828
      %v830 = vrot.slane %v829, 1
      %v831 = vmax.f32 %v829, %v830
      %v832 = vsel %vm712, %v459, -inf
      %v833 = vrot.slane %v832, 4
      %v834 = vmax.f32 %v832, %v833
      %v835 = vrot.slane %v834, 2
      %v836 = vmax.f32 %v834, %v835
      %v837 = vrot.slane %v836, 1
      %v838 = vmax.f32 %v836, %v837
      %v839 = vsel %vm712, %v458, -inf
      %v840 = vrot.slane %v839, 4
      %v841 = vmax.f32 %v839, %v840
      %v842 = vrot.slane %v841, 2
      %v843 = vmax.f32 %v841, %v842
      %v844 = vrot.slane %v843, 1
      %v845 = vmax.f32 %v843, %v844
      %v846 = vsel %vm712, %v460, -inf
      %v847 = vrot.slane %v846, 4
      %v848 = vmax.f32 %v846, %v847
      %v849 = vrot.slane %v848, 2
      %v850 = vmax.f32 %v848, %v849
      %v851 = vrot.slane %v850, 1
      %v852 = vmax.f32 %v850, %v851
      %v853 = vsel %vm712, %v468, -inf
      %v854 = vrot.slane %v853, 4
      %v855 = vmax.f32 %v853, %v854
      %v856 = vrot.slane %v855, 2
      %v857 = vmax.f32 %v855, %v856
      %v858 = vrot.slane %v857, 1
      %v859 = vmax.f32 %v857, %v858
      %v860 = vsel %vm712, %v476, -inf
      %v861 = vrot.slane %v860, 4
      %v862 = vmax.f32 %v860, %v861
      %v863 = vrot.slane %v862, 2
      %v864 = vmax.f32 %v862, %v863
      %v865 = vrot.slane %v864, 1
      %v866 = vmax.f32 %v864, %v865
      %v867 = vsel %vm712, %v475, -inf
      %v868 = vrot.slane %v867, 4
      %v869 = vmax.f32 %v867, %v868
      %v870 = vrot.slane %v869, 2
      %v871 = vmax.f32 %v869, %v870
      %v872 = vrot.slane %v871, 1
      %v873 = vmax.f32 %v871, %v872
      %v874 = vsel %vm712, %v477, -inf
      %v875 = vrot.slane %v874, 4
      %v876 = vmax.f32 %v874, %v875
      %v877 = vrot.slane %v876, 2
      %v878 = vmax.f32 %v876, %v877
      %v879 = vrot.slane %v878, 1
      %v880 = vmax.f32 %v878, %v879
      %v881 = vsel %vm712, %v485, -inf
      %v882 = vrot.slane %v881, 4
      %v883 = vmax.f32 %v881, %v882
      %v884 = vrot.slane %v883, 2
      %v885 = vmax.f32 %v883, %v884
      %v886 = vrot.slane %v885, 1
      %v887 = vmax.f32 %v885, %v886
      %v888 = vsel %vm712, %v493, -inf
      %v889 = vrot.slane %v888, 4
      %v890 = vmax.f32 %v888, %v889
      %v891 = vrot.slane %v890, 2
      %v892 = vmax.f32 %v890, %v891
      %v893 = vrot.slane %v892, 1
      %v894 = vmax.f32 %v892, %v893
      %v895 = vsel %vm712, %v492, -inf
      %v896 = vrot.slane %v895, 4
      %v897 = vmax.f32 %v895, %v896
      %v898 = vrot.slane %v897, 2
      %v899 = vmax.f32 %v897, %v898
      %v900 = vrot.slane %v899, 1
      %v901 = vmax.f32 %v899, %v900
      %v902 = vsel %vm712, %v494, -inf
      %v903 = vrot.slane %v902, 4
      %v904 = vmax.f32 %v902, %v903
      %v905 = vrot.slane %v904, 2
      %v906 = vmax.f32 %v904, %v905
      %v907 = vrot.slane %v906, 1
      %v908 = vmax.f32 %v906, %v907
      %v909 = vsel %vm712, %v502, -inf
      %v910 = vrot.slane %v909, 4
      %v911 = vmax.f32 %v909, %v910
      %v912 = vrot.slane %v911, 2
      %v913 = vmax.f32 %v911, %v912
      %v914 = vrot.slane %v913, 1
      %v915 = vmax.f32 %v913, %v914
      %v916 = vsel %vm712, %v510, -inf
      %v917 = vrot.slane %v916, 4
      %v918 = vmax.f32 %v916, %v917
      %v919 = vrot.slane %v918, 2
      %v920 = vmax.f32 %v918, %v919
      %v921 = vrot.slane %v920, 1
      %v922 = vmax.f32 %v920, %v921
      %v923 = vsel %vm712, %v509, -inf
      %v924 = vrot.slane %v923, 4
      %v925 = vmax.f32 %v923, %v924
      %v926 = vrot.slane %v925, 2
      %v927 = vmax.f32 %v925, %v926
      %v928 = vrot.slane %v927, 1
      %v929 = vmax.f32 %v927, %v928
      %v930 = vsel %vm712, %v511, -inf
      %v931 = vrot.slane %v930, 4
      %v932 = vmax.f32 %v930, %v931
      %v933 = vrot.slane %v932, 2
      %v934 = vmax.f32 %v932, %v933
      %v935 = vrot.slane %v934, 1
      %v936 = vmax.f32 %v934, %v935
      %v937 = vsel %vm712, %v519, -inf
      %v938 = vrot.slane %v937, 4
      %v939 = vmax.f32 %v937, %v938
      %v940 = vrot.slane %v939, 2
      %v941 = vmax.f32 %v939, %v940
      %v942 = vrot.slane %v941, 1
      %v943 = vmax.f32 %v941, %v942
      %v944 = vsel %vm712, %v527, -inf
      %v945 = vrot.slane %v944, 4
      %v946 = vmax.f32 %v944, %v945
      %v947 = vrot.slane %v946, 2
      %v948 = vmax.f32 %v946, %v947
      %v949 = vrot.slane %v948, 1
      %v950 = vmax.f32 %v948, %v949
      %v951 = vsel %vm712, %v526, -inf
      %v952 = vrot.slane %v951, 4
      %v953 = vmax.f32 %v951, %v952
      %v954 = vrot.slane %v953, 2
      %v955 = vmax.f32 %v953, %v954
      %v956 = vrot.slane %v955, 1
      %v957 = vmax.f32 %v955, %v956
      %v958 = vsel %vm712, %v528, -inf
      %v959 = vrot.slane %v958, 4
      %v960 = vmax.f32 %v958, %v959
      %v961 = vrot.slane %v960, 2
      %v962 = vmax.f32 %v960, %v961
      %v963 = vrot.slane %v962, 1
      %v964 = vmax.f32 %v962, %v963
      %v965 = vsel %vm712, %v536, -inf
      %v966 = vrot.slane %v965, 4
      %v967 = vmax.f32 %v965, %v966
      %v968 = vrot.slane %v967, 2
      %v969 = vmax.f32 %v967, %v968
      %v970 = vrot.slane %v969, 1
      %v971 = vmax.f32 %v969, %v970
      %v972 = vsel %vm712, %v544, -inf
      %v973 = vrot.slane %v972, 4
      %v974 = vmax.f32 %v972, %v973
      %v975 = vrot.slane %v974, 2
      %v976 = vmax.f32 %v974, %v975
      %v977 = vrot.slane %v976, 1
      %v978 = vmax.f32 %v976, %v977
      %v979 = vsel %vm712, %v543, -inf
      %v980 = vrot.slane %v979, 4
      %v981 = vmax.f32 %v979, %v980
      %v982 = vrot.slane %v981, 2
      %v983 = vmax.f32 %v981, %v982
      %v984 = vrot.slane %v983, 1
      %v985 = vmax.f32 %v983, %v984
      %v986 = vsel %vm712, %v545, -inf
      %v987 = vrot.slane %v986, 4
      %v988 = vmax.f32 %v986, %v987
      %v989 = vrot.slane %v988, 2
      %v990 = vmax.f32 %v988, %v989
      %v991 = vrot.slane %v990, 1
      %v992 = vmax.f32 %v990, %v991
      %v993 = vsel %vm712, %v553, -inf
      %v994 = vrot.slane %v993, 4
      %v995 = vmax.f32 %v993, %v994
      %v996 = vrot.slane %v995, 2
      %v997 = vmax.f32 %v995, %v996
      %v998 = vrot.slane %v997, 1
      %v999 = vmax.f32 %v997, %v998
      %v1000 = vsel %vm712, %v561, -inf
      %v1001 = vrot.slane %v1000, 4
      %v1002 = vmax.f32 %v1000, %v1001
      %v1003 = vrot.slane %v1002, 2
      %v1004 = vmax.f32 %v1002, %v1003
      %v1005 = vrot.slane %v1004, 1
      %v1006 = vmax.f32 %v1004, %v1005
      %v1007 = vsel %vm712, %v560, -inf
      %v1008 = vrot.slane %v1007, 4
      %v1009 = vmax.f32 %v1007, %v1008
      %v1010 = vrot.slane %v1009, 2
      %v1011 = vmax.f32 %v1009, %v1010
      %v1012 = vrot.slane %v1011, 1
      %v1013 = vmax.f32 %v1011, %v1012
      %v1014 = vsel %vm712, %v562, -inf
      %v1015 = vrot.slane %v1014, 4
      %v1016 = vmax.f32 %v1014, %v1015
      %v1017 = vrot.slane %v1016, 2
      %v1018 = vmax.f32 %v1016, %v1017
      %v1019 = vrot.slane %v1018, 1
      %v1020 = vmax.f32 %v1018, %v1019
      %v1021 = vsel %vm712, %v570, -inf
      %v1022 = vrot.slane %v1021, 4
      %v1023 = vmax.f32 %v1021, %v1022
      %v1024 = vrot.slane %v1023, 2
      %v1025 = vmax.f32 %v1023, %v1024
      %v1026 = vrot.slane %v1025, 1
      %v1027 = vmax.f32 %v1025, %v1026
      %v1028 = vsel %vm712, %v578, -inf
      %v1029 = vrot.slane %v1028, 4
      %v1030 = vmax.f32 %v1028, %v1029
      %v1031 = vrot.slane %v1030, 2
      %v1032 = vmax.f32 %v1030, %v1031
      %v1033 = vrot.slane %v1032, 1
      %v1034 = vmax.f32 %v1032, %v1033
      %v1035 = vsel %vm712, %v577, -inf
      %v1036 = vrot.slane %v1035, 4
      %v1037 = vmax.f32 %v1035, %v1036
      %v1038 = vrot.slane %v1037, 2
      %v1039 = vmax.f32 %v1037, %v1038
      %v1040 = vrot.slane %v1039, 1
      %v1041 = vmax.f32 %v1039, %v1040
      %v1042 = vsel %vm712, %v579, -inf
      %v1043 = vrot.slane %v1042, 4
      %v1044 = vmax.f32 %v1042, %v1043
      %v1045 = vrot.slane %v1044, 2
      %v1046 = vmax.f32 %v1044, %v1045
      %v1047 = vrot.slane %v1046, 1
      %v1048 = vmax.f32 %v1046, %v1047
      %v1049 = vsel %vm712, %v587, -inf
      %v1050 = vrot.slane %v1049, 4
      %v1051 = vmax.f32 %v1049, %v1050
      %v1052 = vrot.slane %v1051, 2
      %v1053 = vmax.f32 %v1051, %v1052
      %v1054 = vrot.slane %v1053, 1
      %v1055 = vmax.f32 %v1053, %v1054
      %v1056 = vsel %vm712, %v595, -inf
      %v1057 = vrot.slane %v1056, 4
      %v1058 = vmax.f32 %v1056, %v1057
      %v1059 = vrot.slane %v1058, 2
      %v1060 = vmax.f32 %v1058, %v1059
      %v1061 = vrot.slane %v1060, 1
      %v1062 = vmax.f32 %v1060, %v1061
      %v1063 = vsel %vm712, %v594, -inf
      %v1064 = vrot.slane %v1063, 4
      %v1065 = vmax.f32 %v1063, %v1064
      %v1066 = vrot.slane %v1065, 2
      %v1067 = vmax.f32 %v1065, %v1066
      %v1068 = vrot.slane %v1067, 1
      %v1069 = vmax.f32 %v1067, %v1068
      %v1070 = vsel %vm712, %v596, -inf
      %v1071 = vrot.slane %v1070, 4
      %v1072 = vmax.f32 %v1070, %v1071
      %v1073 = vrot.slane %v1072, 2
      %v1074 = vmax.f32 %v1072, %v1073
      %v1075 = vrot.slane %v1074, 1
      %v1076 = vmax.f32 %v1074, %v1075
      %v1077 = vsel %vm712, %v604, -inf
      %v1078 = vrot.slane %v1077, 4
      %v1079 = vmax.f32 %v1077, %v1078
      %v1080 = vrot.slane %v1079, 2
      %v1081 = vmax.f32 %v1079, %v1080
      %v1082 = vrot.slane %v1081, 1
      %v1083 = vmax.f32 %v1081, %v1082
      %v1084 = vsel %vm712, %v612, -inf
      %v1085 = vrot.slane %v1084, 4
      %v1086 = vmax.f32 %v1084, %v1085
      %v1087 = vrot.slane %v1086, 2
      %v1088 = vmax.f32 %v1086, %v1087
      %v1089 = vrot.slane %v1088, 1
      %v1090 = vmax.f32 %v1088, %v1089
      %v1091 = vsel %vm712, %v611, -inf
      %v1092 = vrot.slane %v1091, 4
      %v1093 = vmax.f32 %v1091, %v1092
      %v1094 = vrot.slane %v1093, 2
      %v1095 = vmax.f32 %v1093, %v1094
      %v1096 = vrot.slane %v1095, 1
      %v1097 = vmax.f32 %v1095, %v1096
      %v1098 = vsel %vm712, %v613, -inf
      %v1099 = vrot.slane %v1098, 4
      %v1100 = vmax.f32 %v1098, %v1099
      %v1101 = vrot.slane %v1100, 2
      %v1102 = vmax.f32 %v1100, %v1101
      %v1103 = vrot.slane %v1102, 1
      %v1104 = vmax.f32 %v1102, %v1103
      %v1105 = vsel %vm712, %v621, -inf
      %v1106 = vrot.slane %v1105, 4
      %v1107 = vmax.f32 %v1105, %v1106
      %v1108 = vrot.slane %v1107, 2
      %v1109 = vmax.f32 %v1107, %v1108
      %v1110 = vrot.slane %v1109, 1
      %v1111 = vmax.f32 %v1109, %v1110
      %v1112 = vsel %vm712, %v629, -inf
      %v1113 = vrot.slane %v1112, 4
      %v1114 = vmax.f32 %v1112, %v1113
      %v1115 = vrot.slane %v1114, 2
      %v1116 = vmax.f32 %v1114, %v1115
      %v1117 = vrot.slane %v1116, 1
      %v1118 = vmax.f32 %v1116, %v1117
      %v1119 = vsel %vm712, %v628, -inf
      %v1120 = vrot.slane %v1119, 4
      %v1121 = vmax.f32 %v1119, %v1120
      %v1122 = vrot.slane %v1121, 2
      %v1123 = vmax.f32 %v1121, %v1122
      %v1124 = vrot.slane %v1123, 1
      %v1125 = vmax.f32 %v1123, %v1124
      %v1126 = vsel %vm712, %v630, -inf
      %v1127 = vrot.slane %v1126, 4
      %v1128 = vmax.f32 %v1126, %v1127
      %v1129 = vrot.slane %v1128, 2
      %v1130 = vmax.f32 %v1128, %v1129
      %v1131 = vrot.slane %v1130, 1
      %v1132 = vmax.f32 %v1130, %v1131
      %v1133 = vsel %vm712, %v638, -inf
      %v1134 = vrot.slane %v1133, 4
      %v1135 = vmax.f32 %v1133, %v1134
      %v1136 = vrot.slane %v1135, 2
      %v1137 = vmax.f32 %v1135, %v1136
      %v1138 = vrot.slane %v1137, 1
      %v1139 = vmax.f32 %v1137, %v1138
      %v1140 = vsel %vm712, %v646, -inf
      %v1141 = vrot.slane %v1140, 4
      %v1142 = vmax.f32 %v1140, %v1141
      %v1143 = vrot.slane %v1142, 2
      %v1144 = vmax.f32 %v1142, %v1143
      %v1145 = vrot.slane %v1144, 1
      %v1146 = vmax.f32 %v1144, %v1145
      %v1147 = vsel %vm712, %v645, -inf
      %v1148 = vrot.slane %v1147, 4
      %v1149 = vmax.f32 %v1147, %v1148
      %v1150 = vrot.slane %v1149, 2
      %v1151 = vmax.f32 %v1149, %v1150
      %v1152 = vrot.slane %v1151, 1
      %v1153 = vmax.f32 %v1151, %v1152
      %v1154 = vsel %vm712, %v647, -inf
      %v1155 = vrot.slane %v1154, 4
      %v1156 = vmax.f32 %v1154, %v1155
      %v1157 = vrot.slane %v1156, 2
      %v1158 = vmax.f32 %v1156, %v1157
      %v1159 = vrot.slane %v1158, 1
      %v1160 = vmax.f32 %v1158, %v1159
      %1161 = vst.msk [vmem:[#allocation2] sm:$0xff] %vm311, 0.0
      %1162 = vst.msk [vmem:[#allocation2 + $0x8] sm:$0x3] %vm712, 0.0
      %1163 = vst.msk [vmem:[#allocation2 + $0x10] sm:$0xff] %vm311, 0.0
      %1164 = vst.msk [vmem:[#allocation2 + $0x18] sm:$0x3] %vm712, 0.0
      %1165 = vst.msk [vmem:[#allocation2 + $0x20] sm:$0xff] %vm311, 0.0
      %1166 = vst.msk [vmem:[#allocation2 + $0x28] sm:$0x3] %vm712, 0.0
      %1167 = vst.msk [vmem:[#allocation2 + $0x30] sm:$0xff] %vm311, 0.0
      %1168 = vst.msk [vmem:[#allocation2 + $0x38] sm:$0x3] %vm712, 0.0
      %1169 = vst.msk [vmem:[#allocation2 + $0x40] sm:$0xff] %vm311, 0.0
      %1170 = vst.msk [vmem:[#allocation2 + $0x48] sm:$0x3] %vm712, 0.0
      %1171 = vst.msk [vmem:[#allocation2 + $0x50] sm:$0xff] %vm311, 0.0
      %1172 = vst.msk [vmem:[#allocation2 + $0x58] sm:$0x3] %vm712, 0.0
      %1173 = vst.msk [vmem:[#allocation2 + $0x60] sm:$0xff] %vm311, 0.0
      %1174 = vst.msk [vmem:[#allocation2 + $0x68] sm:$0x3] %vm712, 0.0
      %1175 = vst.msk [vmem:[#allocation2 + $0x70] sm:$0xff] %vm311, 0.0
      %1176 = vst.msk [vmem:[#allocation2 + $0x78] sm:$0x3] %vm712, 0.0
      %1177 = vst.msk [vmem:[#allocation2 + $0x80] sm:$0xff] %vm311, 0.0
      %1178 = vst.msk [vmem:[#allocation2 + $0x88] sm:$0x3] %vm712, 0.0
      %1179 = vst.msk [vmem:[#allocation2 + $0x90] sm:$0xff] %vm311, 0.0
      %1180 = vst.msk [vmem:[#allocation2 + $0x98] sm:$0x3] %vm712, 0.0
      %vm1245 = vcmask 1041409
      %v1246 = vsel %vm1245, %v726, %v719
      %vm1247 = vcmask 1042434
      %v1248 = vsel %vm1247, %v733, %v1246
      %vm1249 = vcmask 1043459
      %v1250 = vsel %vm1249, %v740, %v1248
      %vm1251 = vcmask 1044484
      %v1252 = vsel %vm1251, %v747, %v1250
      %vm1253 = vcmask 1045509
      %v1254 = vsel %vm1253, %v754, %v1252
      %vm1255 = vcmask 1046534
      %v1256 = vsel %vm1255, %v761, %v1254
      %vm1257 = vcmask 1047559
      %v1258 = vsel %vm1257, %v768, %v1256
      %v1259 = vsel %vm1245, %v782, %v775
      %v1260 = vsel %vm1247, %v789, %v1259
      %v1261 = vsel %vm1249, %v796, %v1260
      %v1262 = vsel %vm1251, %v803, %v1261
      %v1263 = vsel %vm1253, %v810, %v1262
      %v1264 = vsel %vm1255, %v817, %v1263
      %v1265 = vsel %vm1257, %v824, %v1264
      %v1266 = vsel %vm1245, %v838, %v831
      %v1267 = vsel %vm1247, %v845, %v1266
      %v1268 = vsel %vm1249, %v852, %v1267
      %v1269 = vsel %vm1251, %v859, %v1268
      %v1270 = vsel %vm1253, %v866, %v1269
      %v1271 = vsel %vm1255, %v873, %v1270
      %v1272 = vsel %vm1257, %v880, %v1271
      %v1273 = vsel %vm1245, %v894, %v887
      %v1274 = vsel %vm1247, %v901, %v1273
      %v1275 = vsel %vm1249, %v908, %v1274
      %v1276 = vsel %vm1251, %v915, %v1275
      %v1277 = vsel %vm1253, %v922, %v1276
      %v1278 = vsel %vm1255, %v929, %v1277
      %v1279 = vsel %vm1257, %v936, %v1278
      %v1280 = vsel %vm1245, %v950, %v943
      %v1281 = vsel %vm1247, %v957, %v1280
      %v1282 = vsel %vm1249, %v964, %v1281
      %v1283 = vsel %vm1251, %v971, %v1282
      %v1284 = vsel %vm1253, %v978, %v1283
      %v1285 = vsel %vm1255, %v985, %v1284
      %v1286 = vsel %vm1257, %v992, %v1285
      %v1287 = vsel %vm1245, %v1006, %v999
      %v1288 = vsel %vm1247, %v1013, %v1287
      %v1289 = vsel %vm1249, %v1020, %v1288
      %v1290 = vsel %vm1251, %v1027, %v1289
      %v1291 = vsel %vm1253, %v1034, %v1290
      %v1292 = vsel %vm1255, %v1041, %v1291
      %v1293 = vsel %vm1257, %v1048, %v1292
      %v1294 = vsel %vm1245, %v1062, %v1055
      %v1295 = vsel %vm1247, %v1069, %v1294
      %v1296 = vsel %vm1249, %v1076, %v1295
      %v1297 = vsel %vm1251, %v1083, %v1296
      %v1298 = vsel %vm1253, %v1090, %v1297
      %v1299 = vsel %vm1255, %v1097, %v1298
      %v1300 = vsel %vm1257, %v1104, %v1299
      %v1301 = vsel %vm1245, %v1118, %v1111
      %v1302 = vsel %vm1247, %v1125, %v1301
      %v1303 = vsel %vm1249, %v1132, %v1302
      %v1304 = vsel %vm1251, %v1139, %v1303
      %v1305 = vsel %vm1253, %v1146, %v1304
      %v1306 = vsel %vm1255, %v1153, %v1305
      %v1307 = vsel %vm1257, %v1160, %v1306
      %s1316 = scalar_lea.vmem [#allocation2], 16
      %1317 = vst.msk [vmem:[%s1316 + $0x1] sm:$0xff] %vm311, %v1258
      %1318 = vst.msk [vmem:[%s1316 + $0x11] sm:$0xff] %vm311, %v1265
      %1319 = vst.msk [vmem:[%s1316 + $0x21] sm:$0xff] %vm311, %v1272
      %1320 = vst.msk [vmem:[%s1316 + $0x31] sm:$0xff] %vm311, %v1279
      %1321 = vst.msk [vmem:[%s1316 + $0x41] sm:$0xff] %vm311, %v1286
      %1322 = vst.msk [vmem:[%s1316 + $0x51] sm:$0xff] %vm311, %v1293
      %1323 = vst.msk [vmem:[%s1316 + $0x61] sm:$0xff] %vm311, %v1300
      %1324 = vst.msk [vmem:[%s1316 + $0x71] sm:$0xff] %vm311, %v1307
      %v1325 = vld [vmem:[#allocation2] sm:$0xff]
      %v1326 = vld [vmem:[#allocation2 + $0x10] sm:$0xff]
      %v1327 = vld [vmem:[#allocation2 + $0x20] sm:$0xff]
      %v1328 = vld [vmem:[#allocation2 + $0x30] sm:$0xff]
      %v1329 = vld [vmem:[#allocation2 + $0x40] sm:$0xff]
      %v1330 = vld [vmem:[#allocation2 + $0x50] sm:$0xff]
      %v1331 = vld [vmem:[#allocation2 + $0x60] sm:$0xff]
      %v1332 = vld [vmem:[#allocation2 + $0x70] sm:$0xff]
      %v1333 = vld [vmem:[#allocation2 + $0x1] sm:$0xff]
      %v1334 = vld [vmem:[#allocation2 + $0x11] sm:$0xff]
      %v1335 = vld [vmem:[#allocation2 + $0x21] sm:$0xff]
      %v1336 = vld [vmem:[#allocation2 + $0x31] sm:$0xff]
      %v1337 = vld [vmem:[#allocation2 + $0x41] sm:$0xff]
      %v1338 = vld [vmem:[#allocation2 + $0x51] sm:$0xff]
      %v1339 = vld [vmem:[#allocation2 + $0x61] sm:$0xff]
      %v1340 = vld [vmem:[#allocation2 + $0x71] sm:$0xff]
      %v1341 = vld [vmem:[#allocation2 + $0x2] sm:$0xff]
      %v1342 = vld [vmem:[#allocation2 + $0x12] sm:$0xff]
      %v1343 = vld [vmem:[#allocation2 + $0x22] sm:$0xff]
      %v1344 = vld [vmem:[#allocation2 + $0x32] sm:$0xff]
      %v1345 = vld [vmem:[#allocation2 + $0x42] sm:$0xff]
      %v1346 = vld [vmem:[#allocation2 + $0x52] sm:$0xff]
      %v1347 = vld [vmem:[#allocation2 + $0x62] sm:$0xff]
      %v1348 = vld [vmem:[#allocation2 + $0x72] sm:$0xff]
      %v1349 = vld [vmem:[%s1316] sm:$0xff]
      %v1350 = vld [vmem:[%s1316 + $0x10] sm:$0xff]
      %v1351 = vld [vmem:[%s1316 + $0x20] sm:$0xff]
      %v1352 = vld [vmem:[%s1316 + $0x30] sm:$0xff]
      %v1353 = vld [vmem:[%s1316 + $0x40] sm:$0xff]
      %v1354 = vld [vmem:[%s1316 + $0x50] sm:$0xff]
      %v1355 = vld [vmem:[%s1316 + $0x60] sm:$0xff]
      %v1356 = vld [vmem:[%s1316 + $0x70] sm:$0xff]
      %v1357 = vld [vmem:[%s1316 + $0x1] sm:$0xff]
      %v1358 = vld [vmem:[%s1316 + $0x11] sm:$0xff]
      %v1359 = vld [vmem:[%s1316 + $0x21] sm:$0xff]
      %v1360 = vld [vmem:[%s1316 + $0x31] sm:$0xff]
      %v1361 = vld [vmem:[%s1316 + $0x41] sm:$0xff]
      %v1362 = vld [vmem:[%s1316 + $0x51] sm:$0xff]
      %v1363 = vld [vmem:[%s1316 + $0x61] sm:$0xff]
      %v1364 = vld [vmem:[%s1316 + $0x71] sm:$0xff]
      %v1365 = vld [vmem:[%s1316 + $0x2] sm:$0xff]
      %v1366 = vld [vmem:[%s1316 + $0x12] sm:$0xff]
      %v1367 = vld [vmem:[%s1316 + $0x22] sm:$0xff]
      %v1368 = vld [vmem:[%s1316 + $0x32] sm:$0xff]
      %v1369 = vld [vmem:[%s1316 + $0x42] sm:$0xff]
      %v1370 = vld [vmem:[%s1316 + $0x52] sm:$0xff]
      %v1371 = vld [vmem:[%s1316 + $0x62] sm:$0xff]
      %v1372 = vld [vmem:[%s1316 + $0x72] sm:$0xff]
      %s1373 = scalar_lea.vmem [#allocation2], 32
      %v1374 = vld [vmem:[%s1373] sm:$0xff]
      %v1375 = vld [vmem:[%s1373 + $0x10] sm:$0xff]
      %v1376 = vld [vmem:[%s1373 + $0x20] sm:$0xff]
      %v1377 = vld [vmem:[%s1373 + $0x30] sm:$0xff]
      %v1378 = vld [vmem:[%s1373 + $0x40] sm:$0xff]
      %v1379 = vld [vmem:[%s1373 + $0x50] sm:$0xff]
      %v1380 = vld [vmem:[%s1373 + $0x60] sm:$0xff]
      %v1381 = vld [vmem:[%s1373 + $0x70] sm:$0xff]
      %v1382 = vld [vmem:[%s1373 + $0x1] sm:$0xff]
      %v1383 = vld [vmem:[%s1373 + $0x11] sm:$0xff]
      %v1384 = vld [vmem:[%s1373 + $0x21] sm:$0xff]
      %v1385 = vld [vmem:[%s1373 + $0x31] sm:$0xff]
      %v1386 = vld [vmem:[%s1373 + $0x41] sm:$0xff]
      %v1387 = vld [vmem:[%s1373 + $0x51] sm:$0xff]
      %v1388 = vld [vmem:[%s1373 + $0x61] sm:$0xff]
      %v1389 = vld [vmem:[%s1373 + $0x71] sm:$0xff]
      %v1390 = vld [vmem:[%s1373 + $0x2] sm:$0xff]
      %v1391 = vld [vmem:[%s1373 + $0x12] sm:$0xff]
      %v1392 = vld [vmem:[%s1373 + $0x22] sm:$0xff]
      %v1393 = vld [vmem:[%s1373 + $0x32] sm:$0xff]
      %v1394 = vld [vmem:[%s1373 + $0x42] sm:$0xff]
      %v1395 = vld [vmem:[%s1373 + $0x52] sm:$0xff]
      %v1396 = vld [vmem:[%s1373 + $0x62] sm:$0xff]
      %v1397 = vld [vmem:[%s1373 + $0x72] sm:$0xff]
      %1406 = vrot.lane.b32.xlu0 %v1333, 3
      %v1407 = vpop.permute.xlu0 %1406
      %1408 = vrot.lane.b32.xlu0 %v1334, 3
      %v1409 = vpop.permute.xlu0 %1408
      %1410 = vrot.lane.b32.xlu0 %v1335, 3
      %v1411 = vpop.permute.xlu0 %1410
      %1412 = vrot.lane.b32.xlu0 %v1336, 3
      %v1413 = vpop.permute.xlu0 %1412
      %1414 = vrot.lane.b32.xlu0 %v1337, 3
      %v1415 = vpop.permute.xlu0 %1414
      %1416 = vrot.lane.b32.xlu0 %v1338, 3
      %v1417 = vpop.permute.xlu0 %1416
      %1418 = vrot.lane.b32.xlu0 %v1339, 3
      %v1419 = vpop.permute.xlu0 %1418
      %1420 = vrot.lane.b32.xlu0 %v1340, 3
      %v1421 = vpop.permute.xlu0 %1420
      %1438 = vrot.lane.b32.xlu0 %v1341, 6
      %v1439 = vpop.permute.xlu0 %1438
      %1440 = vrot.lane.b32.xlu0 %v1342, 6
      %v1441 = vpop.permute.xlu0 %1440
      %1442 = vrot.lane.b32.xlu0 %v1343, 6
      %v1443 = vpop.permute.xlu0 %1442
      %1444 = vrot.lane.b32.xlu0 %v1344, 6
      %v1445 = vpop.permute.xlu0 %1444
      %1446 = vrot.lane.b32.xlu0 %v1345, 6
      %v1447 = vpop.permute.xlu0 %1446
      %1448 = vrot.lane.b32.xlu0 %v1346, 6
      %v1449 = vpop.permute.xlu0 %1448
      %1450 = vrot.lane.b32.xlu0 %v1347, 6
      %v1451 = vpop.permute.xlu0 %1450
      %1452 = vrot.lane.b32.xlu0 %v1348, 6
      %v1453 = vpop.permute.xlu0 %1452
      %1470 = vrot.lane.b32.xlu0 %v1349, 9
      %v1471 = vpop.permute.xlu0 %1470
      %1472 = vrot.lane.b32.xlu0 %v1350, 9
      %v1473 = vpop.permute.xlu0 %1472
      %1474 = vrot.lane.b32.xlu0 %v1351, 9
      %v1475 = vpop.permute.xlu0 %1474
      %1476 = vrot.lane.b32.xlu0 %v1352, 9
      %v1477 = vpop.permute.xlu0 %1476
      %1478 = vrot.lane.b32.xlu0 %v1353, 9
      %v1479 = vpop.permute.xlu0 %1478
      %1480 = vrot.lane.b32.xlu0 %v1354, 9
      %v1481 = vpop.permute.xlu0 %1480
      %1482 = vrot.lane.b32.xlu0 %v1355, 9
      %v1483 = vpop.permute.xlu0 %1482
      %1484 = vrot.lane.b32.xlu0 %v1356, 9
      %v1485 = vpop.permute.xlu0 %1484
      %1502 = vrot.lane.b32.xlu0 %v1357, 12
      %v1503 = vpop.permute.xlu0 %1502
      %1504 = vrot.lane.b32.xlu0 %v1358, 12
      %v1505 = vpop.permute.xlu0 %1504
      %1506 = vrot.lane.b32.xlu0 %v1359, 12
      %v1507 = vpop.permute.xlu0 %1506
      %1508 = vrot.lane.b32.xlu0 %v1360, 12
      %v1509 = vpop.permute.xlu0 %1508
      %1510 = vrot.lane.b32.xlu0 %v1361, 12
      %v1511 = vpop.permute.xlu0 %1510
      %1512 = vrot.lane.b32.xlu0 %v1362, 12
      %v1513 = vpop.permute.xlu0 %1512
      %1514 = vrot.lane.b32.xlu0 %v1363, 12
      %v1515 = vpop.permute.xlu0 %1514
      %1516 = vrot.lane.b32.xlu0 %v1364, 12
      %v1517 = vpop.permute.xlu0 %1516
      %1534 = vrot.lane.b32.xlu0 %v1365, 15
      %v1535 = vpop.permute.xlu0 %1534
      %1536 = vrot.lane.b32.xlu0 %v1366, 15
      %v1537 = vpop.permute.xlu0 %1536
      %1538 = vrot.lane.b32.xlu0 %v1367, 15
      %v1539 = vpop.permute.xlu0 %1538
      %1540 = vrot.lane.b32.xlu0 %v1368, 15
      %v1541 = vpop.permute.xlu0 %1540
      %1542 = vrot.lane.b32.xlu0 %v1369, 15
      %v1543 = vpop.permute.xlu0 %1542
      %1544 = vrot.lane.b32.xlu0 %v1370, 15
      %v1545 = vpop.permute.xlu0 %1544
      %1546 = vrot.lane.b32.xlu0 %v1371, 15
      %v1547 = vpop.permute.xlu0 %1546
      %1548 = vrot.lane.b32.xlu0 %v1372, 15
      %v1549 = vpop.permute.xlu0 %1548
      %1566 = vrot.lane.b32.xlu0 %v1374, 18
      %v1567 = vpop.permute.xlu0 %1566
      %1568 = vrot.lane.b32.xlu0 %v1375, 18
      %v1569 = vpop.permute.xlu0 %1568
      %1570 = vrot.lane.b32.xlu0 %v1376, 18
      %v1571 = vpop.permute.xlu0 %1570
      %1572 = vrot.lane.b32.xlu0 %v1377, 18
      %v1573 = vpop.permute.xlu0 %1572
      %1574 = vrot.lane.b32.xlu0 %v1378, 18
      %v1575 = vpop.permute.xlu0 %1574
      %1576 = vrot.lane.b32.xlu0 %v1379, 18
      %v1577 = vpop.permute.xlu0 %1576
      %1578 = vrot.lane.b32.xlu0 %v1380, 18
      %v1579 = vpop.permute.xlu0 %1578
      %1580 = vrot.lane.b32.xlu0 %v1381, 18
      %v1581 = vpop.permute.xlu0 %1580
      %1598 = vrot.lane.b32.xlu0 %v1382, 21
      %v1599 = vpop.permute.xlu0 %1598
      %1600 = vrot.lane.b32.xlu0 %v1383, 21
      %v1601 = vpop.permute.xlu0 %1600
      %1602 = vrot.lane.b32.xlu0 %v1384, 21
      %v1603 = vpop.permute.xlu0 %1602
      %1604 = vrot.lane.b32.xlu0 %v1385, 21
      %v1605 = vpop.permute.xlu0 %1604
      %1606 = vrot.lane.b32.xlu0 %v1386, 21
      %v1607 = vpop.permute.xlu0 %1606
      %1608 = vrot.lane.b32.xlu0 %v1387, 21
      %v1609 = vpop.permute.xlu0 %1608
      %1610 = vrot.lane.b32.xlu0 %v1388, 21
      %v1611 = vpop.permute.xlu0 %1610
      %1612 = vrot.lane.b32.xlu0 %v1389, 21
      %v1613 = vpop.permute.xlu0 %1612
      %1630 = vrot.lane.b32.xlu0 %v1390, 24
      %v1631 = vpop.permute.xlu0 %1630
      %1632 = vrot.lane.b32.xlu0 %v1391, 24
      %v1633 = vpop.permute.xlu0 %1632
      %1634 = vrot.lane.b32.xlu0 %v1392, 24
      %v1635 = vpop.permute.xlu0 %1634
      %1636 = vrot.lane.b32.xlu0 %v1393, 24
      %v1637 = vpop.permute.xlu0 %1636
      %1638 = vrot.lane.b32.xlu0 %v1394, 24
      %v1639 = vpop.permute.xlu0 %1638
      %1640 = vrot.lane.b32.xlu0 %v1395, 24
      %v1641 = vpop.permute.xlu0 %1640
      %1642 = vrot.lane.b32.xlu0 %v1396, 24
      %v1643 = vpop.permute.xlu0 %1642
      %1644 = vrot.lane.b32.xlu0 %v1397, 24
      %v1645 = vpop.permute.xlu0 %1644
      %v1654 = vsel %vm311, %v1325, %v1407
      %v1655 = vsel %vm311, %v1326, %v1409
      %v1656 = vsel %vm311, %v1327, %v1411
      %v1657 = vsel %vm311, %v1328, %v1413
      %v1658 = vsel %vm311, %v1329, %v1415
      %v1659 = vsel %vm311, %v1330, %v1417
      %v1660 = vsel %vm311, %v1331, %v1419
      %v1661 = vsel %vm311, %v1332, %v1421
      %vm1662 = vcmask 48128
      %v1663 = vsel %vm1662, %v1654, %v1439
      %v1664 = vsel %vm1662, %v1655, %v1441
      %v1665 = vsel %vm1662, %v1656, %v1443
      %v1666 = vsel %vm1662, %v1657, %v1445
      %v1667 = vsel %vm1662, %v1658, %v1447
      %v1668 = vsel %vm1662, %v1659, %v1449
      %v1669 = vsel %vm1662, %v1660, %v1451
      %v1670 = vsel %vm1662, %v1661, %v1453
      %vm1671 = vcmask 72704
      %v1672 = vsel %vm1671, %v1663, %v1471
      %v1673 = vsel %vm1671, %v1664, %v1473
      %v1674 = vsel %vm1671, %v1665, %v1475
      %v1675 = vsel %vm1671, %v1666, %v1477
      %v1676 = vsel %vm1671, %v1667, %v1479
      %v1677 = vsel %vm1671, %v1668, %v1481
      %v1678 = vsel %vm1671, %v1669, %v1483
      %v1679 = vsel %vm1671, %v1670, %v1485
      %vm1680 = vcmask 97280
      %v1681 = vsel %vm1680, %v1672, %v1503
      %v1682 = vsel %vm1680, %v1673, %v1505
      %v1683 = vsel %vm1680, %v1674, %v1507
      %v1684 = vsel %vm1680, %v1675, %v1509
      %v1685 = vsel %vm1680, %v1676, %v1511
      %v1686 = vsel %vm1680, %v1677, %v1513
      %v1687 = vsel %vm1680, %v1678, %v1515
      %v1688 = vsel %vm1680, %v1679, %v1517
      %vm1689 = vcmask 121856
      %v1690 = vsel %vm1689, %v1681, %v1535
      %v1691 = vsel %vm1689, %v1682, %v1537
      %v1692 = vsel %vm1689, %v1683, %v1539
      %v1693 = vsel %vm1689, %v1684, %v1541
      %v1694 = vsel %vm1689, %v1685, %v1543
      %v1695 = vsel %vm1689, %v1686, %v1545
      %v1696 = vsel %vm1689, %v1687, %v1547
      %v1697 = vsel %vm1689, %v1688, %v1549
      %vm1698 = vcmask 146432
      %v1699 = vsel %vm1698, %v1690, %v1567
      %v1700 = vsel %vm1698, %v1691, %v1569
      %v1701 = vsel %vm1698, %v1692, %v1571
      %v1702 = vsel %vm1698, %v1693, %v1573
      %v1703 = vsel %vm1698, %v1694, %v1575
      %v1704 = vsel %vm1698, %v1695, %v1577
      %v1705 = vsel %vm1698, %v1696, %v1579
      %v1706 = vsel %vm1698, %v1697, %v1581
      %vm1707 = vcmask 171008
      %v1708 = vsel %vm1707, %v1699, %v1599
      %v1709 = vsel %vm1707, %v1700, %v1601
      %v1710 = vsel %vm1707, %v1701, %v1603
      %v1711 = vsel %vm1707, %v1702, %v1605
      %v1712 = vsel %vm1707, %v1703, %v1607
      %v1713 = vsel %vm1707, %v1704, %v1609
      %v1714 = vsel %vm1707, %v1705, %v1611
      %v1715 = vsel %vm1707, %v1706, %v1613
      %vm1716 = vcmask 195584
      %v1717 = vsel %vm1716, %v1708, %v1631
      %v1718 = vsel %vm1716, %v1709, %v1633
      %v1719 = vsel %vm1716, %v1710, %v1635
      %v1720 = vsel %vm1716, %v1711, %v1637
      %v1721 = vsel %vm1716, %v1712, %v1639
      %v1722 = vsel %vm1716, %v1713, %v1641
      %v1723 = vsel %vm1716, %v1714, %v1643
      %v1724 = vsel %vm1716, %v1715, %v1645
      %v1725 = vld [vmem:[%s1] sm:$0xff]
      %v1726 = vld [vmem:[%s1 + $0x8] sm:$0xff]
      %v1727 = vld [vmem:[%s1 + $0x10] sm:$0xff]
      %v1728 = vld [vmem:[%s1 + $0x18] sm:$0x7]
      %vm1729 = vcmask 220160
      %v1731 = vsel %vm1729, %v1717, 0
      %v1734 = vsel %vm1729, %v1718, 0
      %v1737 = vsel %vm1729, %v1719, 0
      %v1740 = vsel %vm1729, %v1720, 0
      %v1743 = vsel %vm1729, %v1721, 0
      %v1746 = vsel %vm1729, %v1722, 0
      %v1749 = vsel %vm1729, %v1723, 0
      %v1752 = vsel %vm1729, %v1724, 0
      %vm1754 = vcmask 1042432
      %v1756 = vsel %vm1754, %v1728, 0
      %1758 = vmatprep.subr.mxu0 0.0
      %1759 = vmatpush1.msra.mxu0 %v1725
      %1760 = vmatprep.subr.mxu0 0.0
      %1761 = vmatpush1.msra.mxu0 %v1726
      %1762 = vmatprep.subr.mxu0 0.0
      %1763 = vmatpush1.msra.mxu0 %v1727
      %1764 = vmatprep.subr.mxu0 0.0
      %1765 = vmatpush1.msra.mxu0 %v1756
      %1766 = vmatprep.subr.mxu0 0.0
      %1767 = vmatpush1.msra.mxu0 0.0
      %1768 = vmatprep.subr.mxu0 0.0
      %1769 = vmatpush1.msra.mxu0 0.0
      %1770 = vmatprep.subr.mxu0 0.0
      %1771 = vmatpush1.msra.mxu0 0.0
      %1772 = vmatprep.subr.mxu0 0.0
      %1773 = vmatpush1.msra.mxu0 0.0
      %1774 = vmatprep.subr.mxu0 0.0
      %1775 = vmatpush1.msra.mxu0 0.0
      %1776 = vmatprep.subr.mxu0 0.0
      %1777 = vmatpush1.msra.mxu0 0.0
      %1778 = vmatprep.subr.mxu0 0.0
      %1779 = vmatpush1.msra.mxu0 0.0
      %1780 = vmatprep.subr.mxu0 0.0
      %1781 = vmatpush1.msra.mxu0 0.0
      %1782 = vmatprep.subr.mxu0 0.0
      %1783 = vmatpush1.msra.mxu0 0.0
      %1784 = vmatprep.subr.mxu0 0.0
      %1785 = vmatpush1.msra.mxu0 0.0
      %1786 = vmatprep.subr.mxu0 0.0
      %1787 = vmatpush1.msra.mxu0 0.0
      %1788 = vmatprep.subr.mxu0 0.0
      %1789 = vmatpush1.msra.mxu0 0.0
      %1790 = vmatprep.subr.mxu0 0.0
      %1791 = vmatpush1.msra.mxu0 0.0
      %1792 = vmatprep.subr.mxu0 0.0
      %1793 = vmatpush1.msra.mxu0 0.0
      %1794 = vmatprep.subr.mxu0 0.0
      %1795 = vmatpush1.msra.mxu0 0.0
      %1796 = vmatprep.subr.mxu0 0.0
      %1797 = vmatpush1.msra.mxu0 0.0
      %1798 = vmatprep.subr.mxu0 0.0
      %1799 = vmatpush1.msra.mxu0 0.0
      %1800 = vmatprep.subr.mxu0 0.0
      %1801 = vmatpush1.msra.mxu0 0.0
      %1802 = vmatprep.subr.mxu0 0.0
      %1803 = vmatpush1.msra.mxu0 0.0
      %1804 = vmatprep.subr.mxu0 0.0
      %1805 = vmatpush1.msra.mxu0 0.0
      %1806 = vmatprep.subr.mxu0 0.0
      %1807 = vmatpush1.msra.mxu0 0.0
      %1808 = vmatprep.subr.mxu0 0.0
      %1809 = vmatpush1.msra.mxu0 0.0
      %1810 = vmatprep.subr.mxu0 0.0
      %1811 = vmatpush1.msra.mxu0 0.0
      %1812 = vmatprep.subr.mxu0 0.0
      %1813 = vmatpush1.msra.mxu0 0.0
      %1814 = vmatprep.subr.mxu0 0.0
      %1815 = vmatpush1.msra.mxu0 0.0
      %1816 = vmatprep.subr.mxu0 0.0
      %1817 = vmatpush1.msra.mxu0 0.0
      %1818 = vmatprep.subr.mxu0 0.0
      %1819 = vmatpush1.msra.mxu0 0.0
      %1820 = vmatprep.subr.mxu0 0.0
      %1821 = vmatpush1.msra.mxu0 0.0
      %1822 = vmatprep.mubr.f32.mxu0 0.0
      %1823 = vmatmul.mubr.f32.gmra.mrb[0].mxu0 %v1731
      %v1824 = vpop.f32.mrb[0].mxu0
      %v1825 = vadd.f32 0.0, %v1824
      %v1826 = vpop.f32.mrb[0].mxu0
      %1827 = vmatprep.mubr.f32.mxu0 0.0
      %1828 = vmatmul.mubr.f32.gmra.mrb[0].mxu0 %v1734
      %v1829 = vpop.f32.mrb[0].mxu0
      %v1830 = vadd.f32 0.0, %v1829
      %v1831 = vpop.f32.mrb[0].mxu0
      %1832 = vmatprep.mubr.f32.mxu0 0.0
      %1833 = vmatmul.mubr.f32.gmra.mrb[0].mxu0 %v1737
      %v1834 = vpop.f32.mrb[0].mxu0
      %v1835 = vadd.f32 0.0, %v1834
      %v1836 = vpop.f32.mrb[0].mxu0
      %1837 = vmatprep.mubr.f32.mxu0 0.0
      %1838 = vmatmul.mubr.f32.gmra.mrb[0].mxu0 %v1740
      %v1839 = vpop.f32.mrb[0].mxu0
      %v1840 = vadd.f32 0.0, %v1839
      %v1841 = vpop.f32.mrb[0].mxu0
      %1842 = vmatprep.mubr.f32.mxu0 0.0
      %1843 = vmatmul.mubr.f32.gmra.mrb[0].mxu0 %v1743
      %v1844 = vpop.f32.mrb[0].mxu0
      %v1845 = vadd.f32 0.0, %v1844
      %v1846 = vpop.f32.mrb[0].mxu0
      %1847 = vmatprep.mubr.f32.mxu0 0.0
      %1848 = vmatmul.mubr.f32.gmra.mrb[0].mxu0 %v1746
      %v1849 = vpop.f32.mrb[0].mxu0
      %v1850 = vadd.f32 0.0, %v1849
      %v1851 = vpop.f32.mrb[0].mxu0
      %1852 = vmatprep.mubr.f32.mxu0 0.0
      %1853 = vmatmul.mubr.f32.gmra.mrb[0].mxu0 %v1749
      %v1854 = vpop.f32.mrb[0].mxu0
      %v1855 = vadd.f32 0.0, %v1854
      %v1856 = vpop.f32.mrb[0].mxu0
      %1857 = vmatprep.mubr.f32.mxu0 0.0
      %1858 = vmatmul.mubr.f32.gmra.mrb[0].mxu0 %v1752
      %v1859 = vpop.f32.mrb[0].mxu0
      %v1860 = vadd.f32 0.0, %v1859
      %v1861 = vpop.f32.mrb[0].mxu0
      %1862 = vdwg.mxu0
      %v1863 = vld [vmem:[%s2] sm:$0x1]
      %v1865 = vlaneseq
      %v1866 = vshrl.u32 %v1865, 7
      %v1867 = vsub.s32 0, %v1866
      %v1868 = vrot.slane %v1863, %v1867
      %v1870 = vmul.f32 %v1825, %v1868
      %v1871 = vmul.f32 %v1830, %v1868
      %v1872 = vmul.f32 %v1835, %v1868
      %v1873 = vmul.f32 %v1840, %v1868
      %v1874 = vmul.f32 %v1845, %v1868
      %v1875 = vmul.f32 %v1850, %v1868
      %v1876 = vmul.f32 %v1855, %v1868
      %v1877 = vmul.f32 %v1860, %v1868
      %v1878 = vld [vmem:[%s3] sm:$0x1]
      %v1880 = vlaneseq
      %v1881 = vshrl.u32 %v1880, 7
      %v1882 = vsub.s32 0, %v1881
      %v1883 = vrot.slane %v1878, %v1882
      %v1885 = vadd.f32 %v1870, %v1883
      %v1886 = vadd.f32 %v1871, %v1883
      %v1887 = vadd.f32 %v1872, %v1883
      %v1888 = vadd.f32 %v1873, %v1883
      %v1889 = vadd.f32 %v1874, %v1883
      %v1890 = vadd.f32 %v1875, %v1883
      %v1891 = vadd.f32 %v1876, %v1883
      %v1892 = vadd.f32 %v1877, %v1883
      %v1893 = vmax.f32 %v1885, 0.0
      %v1894 = vmax.f32 %v1886, 0.0
      %v1895 = vmax.f32 %v1887, 0.0
      %v1896 = vmax.f32 %v1888, 0.0
      %v1897 = vmax.f32 %v1889, 0.0
      %v1898 = vmax.f32 %v1890, 0.0
      %v1899 = vmax.f32 %v1891, 0.0
      %v1900 = vmax.f32 %v1892, 0.0
      %vm1901 = vcmask 31744
      %1902 = vst.msk [vmem:[#allocation3] sm:$0xff] %vm1901, 0.0
      %vm1903 = vcmask 25600
      %1904 = vst.msk [vmem:[#allocation3 + $0x8] sm:$0x3] %vm1903, 0.0
      %1905 = vst.msk [vmem:[#allocation3 + $0x10] sm:$0xff] %vm1901, 0.0
      %1906 = vst.msk [vmem:[#allocation3 + $0x18] sm:$0x3] %vm1903, 0.0
      %1907 = vst.msk [vmem:[#allocation3 + $0x20] sm:$0xff] %vm1901, 0.0
      %1908 = vst.msk [vmem:[#allocation3 + $0x28] sm:$0x3] %vm1903, 0.0
      %1909 = vst.msk [vmem:[#allocation3 + $0x30] sm:$0xff] %vm1901, 0.0
      %1910 = vst.msk [vmem:[#allocation3 + $0x38] sm:$0x3] %vm1903, 0.0
      %1911 = vst.msk [vmem:[#allocation3 + $0x40] sm:$0xff] %vm1901, 0.0
      %1912 = vst.msk [vmem:[#allocation3 + $0x48] sm:$0x3] %vm1903, 0.0
      %1913 = vst.msk [vmem:[#allocation3 + $0x50] sm:$0xff] %vm1901, 0.0
      %1914 = vst.msk [vmem:[#allocation3 + $0x58] sm:$0x3] %vm1903, 0.0
      %1915 = vst.msk [vmem:[#allocation3 + $0x60] sm:$0xff] %vm1901, 0.0
      %1916 = vst.msk [vmem:[#allocation3 + $0x68] sm:$0x3] %vm1903, 0.0
      %1917 = vst.msk [vmem:[#allocation3 + $0x70] sm:$0xff] %vm1901, 0.0
      %1918 = vst.msk [vmem:[#allocation3 + $0x78] sm:$0x3] %vm1903, 0.0
      %1919 = vst.msk [vmem:[#allocation3 + $0x80] sm:$0xff] %vm1901, 0.0
      %1920 = vst.msk [vmem:[#allocation3 + $0x88] sm:$0x3] %vm1903, 0.0
      %1921 = vst.msk [vmem:[#allocation3 + $0x90] sm:$0xff] %vm1901, 0.0
      %1922 = vst.msk [vmem:[#allocation3 + $0x98] sm:$0x3] %vm1903, 0.0
      %s1923 = scalar_lea.vmem [#allocation3], 16
      %1924 = vst.msk [vmem:[%s1923 + $0x1] sm:$0xff] %vm1901, %v1893
      %1925 = vst.msk [vmem:[%s1923 + $0x11] sm:$0xff] %vm1901, %v1894
      %1926 = vst.msk [vmem:[%s1923 + $0x21] sm:$0xff] %vm1901, %v1895
      %1927 = vst.msk [vmem:[%s1923 + $0x31] sm:$0xff] %vm1901, %v1896
      %1928 = vst.msk [vmem:[%s1923 + $0x41] sm:$0xff] %vm1901, %v1897
      %1929 = vst.msk [vmem:[%s1923 + $0x51] sm:$0xff] %vm1901, %v1898
      %1930 = vst.msk [vmem:[%s1923 + $0x61] sm:$0xff] %vm1901, %v1899
      %1931 = vst.msk [vmem:[%s1923 + $0x71] sm:$0xff] %vm1901, %v1900
      %v1932 = vld [vmem:[#allocation3] sm:$0xff]
      %v1933 = vld [vmem:[#allocation3 + $0x10] sm:$0xff]
      %v1934 = vld [vmem:[#allocation3 + $0x20] sm:$0xff]
      %v1935 = vld [vmem:[#allocation3 + $0x30] sm:$0xff]
      %v1936 = vld [vmem:[#allocation3 + $0x40] sm:$0xff]
      %v1937 = vld [vmem:[#allocation3 + $0x50] sm:$0xff]
      %v1938 = vld [vmem:[#allocation3 + $0x60] sm:$0xff]
      %v1939 = vld [vmem:[#allocation3 + $0x70] sm:$0xff]
      %v1940 = vld [vmem:[#allocation3 + $0x1] sm:$0xff]
      %v1941 = vld [vmem:[#allocation3 + $0x11] sm:$0xff]
      %v1942 = vld [vmem:[#allocation3 + $0x21] sm:$0xff]
      %v1943 = vld [vmem:[#allocation3 + $0x31] sm:$0xff]
      %v1944 = vld [vmem:[#allocation3 + $0x41] sm:$0xff]
      %v1945 = vld [vmem:[#allocation3 + $0x51] sm:$0xff]
      %v1946 = vld [vmem:[#allocation3 + $0x61] sm:$0xff]
      %v1947 = vld [vmem:[#allocation3 + $0x71] sm:$0xff]
      %v1948 = vld [vmem:[#allocation3 + $0x2] sm:$0xff]
      %v1949 = vld [vmem:[#allocation3 + $0x12] sm:$0xff]
      %v1950 = vld [vmem:[#allocation3 + $0x22] sm:$0xff]
      %v1951 = vld [vmem:[#allocation3 + $0x32] sm:$0xff]
      %v1952 = vld [vmem:[#allocation3 + $0x42] sm:$0xff]
      %v1953 = vld [vmem:[#allocation3 + $0x52] sm:$0xff]
      %v1954 = vld [vmem:[#allocation3 + $0x62] sm:$0xff]
      %v1955 = vld [vmem:[#allocation3 + $0x72] sm:$0xff]
      %v1956 = vld [vmem:[%s1923] sm:$0xff]
      %v1957 = vld [vmem:[%s1923 + $0x10] sm:$0xff]
      %v1958 = vld [vmem:[%s1923 + $0x20] sm:$0xff]
      %v1959 = vld [vmem:[%s1923 + $0x30] sm:$0xff]
      %v1960 = vld [vmem:[%s1923 + $0x40] sm:$0xff]
      %v1961 = vld [vmem:[%s1923 + $0x50] sm:$0xff]
      %v1962 = vld [vmem:[%s1923 + $0x60] sm:$0xff]
      %v1963 = vld [vmem:[%s1923 + $0x70] sm:$0xff]
      %v1964 = vld [vmem:[%s1923 + $0x1] sm:$0xff]
      %v1965 = vld [vmem:[%s1923 + $0x11] sm:$0xff]
      %v1966 = vld [vmem:[%s1923 + $0x21] sm:$0xff]
      %v1967 = vld [vmem:[%s1923 + $0x31] sm:$0xff]
      %v1968 = vld [vmem:[%s1923 + $0x41] sm:$0xff]
      %v1969 = vld [vmem:[%s1923 + $0x51] sm:$0xff]
      %v1970 = vld [vmem:[%s1923 + $0x61] sm:$0xff]
      %v1971 = vld [vmem:[%s1923 + $0x71] sm:$0xff]
      %v1972 = vld [vmem:[%s1923 + $0x2] sm:$0xff]
      %v1973 = vld [vmem:[%s1923 + $0x12] sm:$0xff]
      %v1974 = vld [vmem:[%s1923 + $0x22] sm:$0xff]
      %v1975 = vld [vmem:[%s1923 + $0x32] sm:$0xff]
      %v1976 = vld [vmem:[%s1923 + $0x42] sm:$0xff]
      %v1977 = vld [vmem:[%s1923 + $0x52] sm:$0xff]
      %v1978 = vld [vmem:[%s1923 + $0x62] sm:$0xff]
      %v1979 = vld [vmem:[%s1923 + $0x72] sm:$0xff]
      %s1980 = scalar_lea.vmem [#allocation3], 32
      %v1981 = vld [vmem:[%s1980] sm:$0xff]
      %v1982 = vld [vmem:[%s1980 + $0x10] sm:$0xff]
      %v1983 = vld [vmem:[%s1980 + $0x20] sm:$0xff]
      %v1984 = vld [vmem:[%s1980 + $0x30] sm:$0xff]
      %v1985 = vld [vmem:[%s1980 + $0x40] sm:$0xff]
      %v1986 = vld [vmem:[%s1980 + $0x50] sm:$0xff]
      %v1987 = vld [vmem:[%s1980 + $0x60] sm:$0xff]
      %v1988 = vld [vmem:[%s1980 + $0x70] sm:$0xff]
      %v1989 = vld [vmem:[%s1980 + $0x1] sm:$0xff]
      %v1990 = vld [vmem:[%s1980 + $0x11] sm:$0xff]
      %v1991 = vld [vmem:[%s1980 + $0x21] sm:$0xff]
      %v1992 = vld [vmem:[%s1980 + $0x31] sm:$0xff]
      %v1993 = vld [vmem:[%s1980 + $0x41] sm:$0xff]
      %v1994 = vld [vmem:[%s1980 + $0x51] sm:$0xff]
      %v1995 = vld [vmem:[%s1980 + $0x61] sm:$0xff]
      %v1996 = vld [vmem:[%s1980 + $0x71] sm:$0xff]
      %v1997 = vld [vmem:[%s1980 + $0x2] sm:$0xff]
      %v1998 = vld [vmem:[%s1980 + $0x12] sm:$0xff]
      %v1999 = vld [vmem:[%s1980 + $0x22] sm:$0xff]
      %v2000 = vld [vmem:[%s1980 + $0x32] sm:$0xff]
      %v2001 = vld [vmem:[%s1980 + $0x42] sm:$0xff]
      %v2002 = vld [vmem:[%s1980 + $0x52] sm:$0xff]
      %v2003 = vld [vmem:[%s1980 + $0x62] sm:$0xff]
      %v2004 = vld [vmem:[%s1980 + $0x72] sm:$0xff]
      %2013 = vrot.lane.b32.xlu0 %v1940, 4
      %v2014 = vpop.permute.xlu0 %2013
      %2015 = vrot.lane.b32.xlu0 %v1941, 4
      %v2016 = vpop.permute.xlu0 %2015
      %2017 = vrot.lane.b32.xlu0 %v1942, 4
      %v2018 = vpop.permute.xlu0 %2017
      %2019 = vrot.lane.b32.xlu0 %v1943, 4
      %v2020 = vpop.permute.xlu0 %2019
      %2021 = vrot.lane.b32.xlu0 %v1944, 4
      %v2022 = vpop.permute.xlu0 %2021
      %2023 = vrot.lane.b32.xlu0 %v1945, 4
      %v2024 = vpop.permute.xlu0 %2023
      %2025 = vrot.lane.b32.xlu0 %v1946, 4
      %v2026 = vpop.permute.xlu0 %2025
      %2027 = vrot.lane.b32.xlu0 %v1947, 4
      %v2028 = vpop.permute.xlu0 %2027
      %2045 = vrot.lane.b32.xlu0 %v1948, 8
      %v2046 = vpop.permute.xlu0 %2045
      %2047 = vrot.lane.b32.xlu0 %v1949, 8
      %v2048 = vpop.permute.xlu0 %2047
      %2049 = vrot.lane.b32.xlu0 %v1950, 8
      %v2050 = vpop.permute.xlu0 %2049
      %2051 = vrot.lane.b32.xlu0 %v1951, 8
      %v2052 = vpop.permute.xlu0 %2051
      %2053 = vrot.lane.b32.xlu0 %v1952, 8
      %v2054 = vpop.permute.xlu0 %2053
      %2055 = vrot.lane.b32.xlu0 %v1953, 8
      %v2056 = vpop.permute.xlu0 %2055
      %2057 = vrot.lane.b32.xlu0 %v1954, 8
      %v2058 = vpop.permute.xlu0 %2057
      %2059 = vrot.lane.b32.xlu0 %v1955, 8
      %v2060 = vpop.permute.xlu0 %2059
      %2077 = vrot.lane.b32.xlu0 %v1956, 12
      %v2078 = vpop.permute.xlu0 %2077
      %2079 = vrot.lane.b32.xlu0 %v1957, 12
      %v2080 = vpop.permute.xlu0 %2079
      %2081 = vrot.lane.b32.xlu0 %v1958, 12
      %v2082 = vpop.permute.xlu0 %2081
      %2083 = vrot.lane.b32.xlu0 %v1959, 12
      %v2084 = vpop.permute.xlu0 %2083
      %2085 = vrot.lane.b32.xlu0 %v1960, 12
      %v2086 = vpop.permute.xlu0 %2085
      %2087 = vrot.lane.b32.xlu0 %v1961, 12
      %v2088 = vpop.permute.xlu0 %2087
      %2089 = vrot.lane.b32.xlu0 %v1962, 12
      %v2090 = vpop.permute.xlu0 %2089
      %2091 = vrot.lane.b32.xlu0 %v1963, 12
      %v2092 = vpop.permute.xlu0 %2091
      %2109 = vrot.lane.b32.xlu0 %v1964, 16
      %v2110 = vpop.permute.xlu0 %2109
      %2111 = vrot.lane.b32.xlu0 %v1965, 16
      %v2112 = vpop.permute.xlu0 %2111
      %2113 = vrot.lane.b32.xlu0 %v1966, 16
      %v2114 = vpop.permute.xlu0 %2113
      %2115 = vrot.lane.b32.xlu0 %v1967, 16
      %v2116 = vpop.permute.xlu0 %2115
      %2117 = vrot.lane.b32.xlu0 %v1968, 16
      %v2118 = vpop.permute.xlu0 %2117
      %2119 = vrot.lane.b32.xlu0 %v1969, 16
      %v2120 = vpop.permute.xlu0 %2119
      %2121 = vrot.lane.b32.xlu0 %v1970, 16
      %v2122 = vpop.permute.xlu0 %2121
      %2123 = vrot.lane.b32.xlu0 %v1971, 16
      %v2124 = vpop.permute.xlu0 %2123
      %2141 = vrot.lane.b32.xlu0 %v1972, 20
      %v2142 = vpop.permute.xlu0 %2141
      %2143 = vrot.lane.b32.xlu0 %v1973, 20
      %v2144 = vpop.permute.xlu0 %2143
      %2145 = vrot.lane.b32.xlu0 %v1974, 20
      %v2146 = vpop.permute.xlu0 %2145
      %2147 = vrot.lane.b32.xlu0 %v1975, 20
      %v2148 = vpop.permute.xlu0 %2147
      %2149 = vrot.lane.b32.xlu0 %v1976, 20
      %v2150 = vpop.permute.xlu0 %2149
      %2151 = vrot.lane.b32.xlu0 %v1977, 20
      %v2152 = vpop.permute.xlu0 %2151
      %2153 = vrot.lane.b32.xlu0 %v1978, 20
      %v2154 = vpop.permute.xlu0 %2153
      %2155 = vrot.lane.b32.xlu0 %v1979, 20
      %v2156 = vpop.permute.xlu0 %2155
      %2173 = vrot.lane.b32.xlu0 %v1981, 24
      %v2174 = vpop.permute.xlu0 %2173
      %2175 = vrot.lane.b32.xlu0 %v1982, 24
      %v2176 = vpop.permute.xlu0 %2175
      %2177 = vrot.lane.b32.xlu0 %v1983, 24
      %v2178 = vpop.permute.xlu0 %2177
      %2179 = vrot.lane.b32.xlu0 %v1984, 24
      %v2180 = vpop.permute.xlu0 %2179
      %2181 = vrot.lane.b32.xlu0 %v1985, 24
      %v2182 = vpop.permute.xlu0 %2181
      %2183 = vrot.lane.b32.xlu0 %v1986, 24
      %v2184 = vpop.permute.xlu0 %2183
      %2185 = vrot.lane.b32.xlu0 %v1987, 24
      %v2186 = vpop.permute.xlu0 %2185
      %2187 = vrot.lane.b32.xlu0 %v1988, 24
      %v2188 = vpop.permute.xlu0 %2187
      %2205 = vrot.lane.b32.xlu0 %v1989, 28
      %v2206 = vpop.permute.xlu0 %2205
      %2207 = vrot.lane.b32.xlu0 %v1990, 28
      %v2208 = vpop.permute.xlu0 %2207
      %2209 = vrot.lane.b32.xlu0 %v1991, 28
      %v2210 = vpop.permute.xlu0 %2209
      %2211 = vrot.lane.b32.xlu0 %v1992, 28
      %v2212 = vpop.permute.xlu0 %2211
      %2213 = vrot.lane.b32.xlu0 %v1993, 28
      %v2214 = vpop.permute.xlu0 %2213
      %2215 = vrot.lane.b32.xlu0 %v1994, 28
      %v2216 = vpop.permute.xlu0 %2215
      %2217 = vrot.lane.b32.xlu0 %v1995, 28
      %v2218 = vpop.permute.xlu0 %2217
      %2219 = vrot.lane.b32.xlu0 %v1996, 28
      %v2220 = vpop.permute.xlu0 %2219
      %2237 = vrot.lane.b32.xlu0 %v1997, 32
      %v2238 = vpop.permute.xlu0 %2237
      %2239 = vrot.lane.b32.xlu0 %v1998, 32
      %v2240 = vpop.permute.xlu0 %2239
      %2241 = vrot.lane.b32.xlu0 %v1999, 32
      %v2242 = vpop.permute.xlu0 %2241
      %2243 = vrot.lane.b32.xlu0 %v2000, 32
      %v2244 = vpop.permute.xlu0 %2243
      %2245 = vrot.lane.b32.xlu0 %v2001, 32
      %v2246 = vpop.permute.xlu0 %2245
      %2247 = vrot.lane.b32.xlu0 %v2002, 32
      %v2248 = vpop.permute.xlu0 %2247
      %2249 = vrot.lane.b32.xlu0 %v2003, 32
      %v2250 = vpop.permute.xlu0 %2249
      %2251 = vrot.lane.b32.xlu0 %v2004, 32
      %v2252 = vpop.permute.xlu0 %2251
      %v2261 = vsel %vm1901, %v1932, %v2014
      %v2262 = vsel %vm1901, %v1933, %v2016
      %v2263 = vsel %vm1901, %v1934, %v2018
      %v2264 = vsel %vm1901, %v1935, %v2020
      %v2265 = vsel %vm1901, %v1936, %v2022
      %v2266 = vsel %vm1901, %v1937, %v2024
      %v2267 = vsel %vm1901, %v1938, %v2026
      %v2268 = vsel %vm1901, %v1939, %v2028
      %vm2269 = vcmask 64512
      %v2270 = vsel %vm2269, %v2261, %v2046
      %v2271 = vsel %vm2269, %v2262, %v2048
      %v2272 = vsel %vm2269, %v2263, %v2050
      %v2273 = vsel %vm2269, %v2264, %v2052
      %v2274 = vsel %vm2269, %v2265, %v2054
      %v2275 = vsel %vm2269, %v2266, %v2056
      %v2276 = vsel %vm2269, %v2267, %v2058
      %v2277 = vsel %vm2269, %v2268, %v2060
      %v2278 = vsel %vm1680, %v2270, %v2078
      %v2279 = vsel %vm1680, %v2271, %v2080
      %v2280 = vsel %vm1680, %v2272, %v2082
      %v2281 = vsel %vm1680, %v2273, %v2084
      %v2282 = vsel %vm1680, %v2274, %v2086
      %v2283 = vsel %vm1680, %v2275, %v2088
      %v2284 = vsel %vm1680, %v2276, %v2090
      %v2285 = vsel %vm1680, %v2277, %v2092
      %vm2286 = vcmask 130048
      %v2287 = vsel %vm2286, %v2278, %v2110
      %v2288 = vsel %vm2286, %v2279, %v2112
      %v2289 = vsel %vm2286, %v2280, %v2114
      %v2290 = vsel %vm2286, %v2281, %v2116
      %v2291 = vsel %vm2286, %v2282, %v2118
      %v2292 = vsel %vm2286, %v2283, %v2120
      %v2293 = vsel %vm2286, %v2284, %v2122
      %v2294 = vsel %vm2286, %v2285, %v2124
      %vm2295 = vcmask 162816
      %v2296 = vsel %vm2295, %v2287, %v2142
      %v2297 = vsel %vm2295, %v2288, %v2144
      %v2298 = vsel %vm2295, %v2289, %v2146
      %v2299 = vsel %vm2295, %v2290, %v2148
      %v2300 = vsel %vm2295, %v2291, %v2150
      %v2301 = vsel %vm2295, %v2292, %v2152
      %v2302 = vsel %vm2295, %v2293, %v2154
      %v2303 = vsel %vm2295, %v2294, %v2156
      %v2304 = vsel %vm1716, %v2296, %v2174
      %v2305 = vsel %vm1716, %v2297, %v2176
      %v2306 = vsel %vm1716, %v2298, %v2178
      %v2307 = vsel %vm1716, %v2299, %v2180
      %v2308 = vsel %vm1716, %v2300, %v2182
      %v2309 = vsel %vm1716, %v2301, %v2184
      %v2310 = vsel %vm1716, %v2302, %v2186
      %v2311 = vsel %vm1716, %v2303, %v2188
      %vm2312 = vcmask 228352
      %v2313 = vsel %vm2312, %v2304, %v2206
      %v2314 = vsel %vm2312, %v2305, %v2208
      %v2315 = vsel %vm2312, %v2306, %v2210
      %v2316 = vsel %vm2312, %v2307, %v2212
      %v2317 = vsel %vm2312, %v2308, %v2214
      %v2318 = vsel %vm2312, %v2309, %v2216
      %v2319 = vsel %vm2312, %v2310, %v2218
      %v2320 = vsel %vm2312, %v2311, %v2220
      %vm2321 = vcmask 261120
      %v2322 = vsel %vm2321, %v2313, %v2238
      %v2323 = vsel %vm2321, %v2314, %v2240
      %v2324 = vsel %vm2321, %v2315, %v2242
      %v2325 = vsel %vm2321, %v2316, %v2244
      %v2326 = vsel %vm2321, %v2317, %v2246
      %v2327 = vsel %vm2321, %v2318, %v2248
      %v2328 = vsel %vm2321, %v2319, %v2250
      %v2329 = vsel %vm2321, %v2320, %v2252
      %v2330 = vld [vmem:[%s4] sm:$0xff]
      %v2331 = vld [vmem:[%s4 + $0x8] sm:$0xff]
      %v2332 = vld [vmem:[%s4 + $0x10] sm:$0xff]
      %v2333 = vld [vmem:[%s4 + $0x18] sm:$0xff]
      %v2334 = vld [vmem:[%s4 + $0x20] sm:$0xf]
      %vm2335 = vcmask 293888
      %v2337 = vsel %vm2335, %v2322, 0
      %v2340 = vsel %vm2335, %v2323, 0
      %v2343 = vsel %vm2335, %v2324, 0
      %v2346 = vsel %vm2335, %v2325, 0
      %v2349 = vsel %vm2335, %v2326, 0
      %v2352 = vsel %vm2335, %v2327, 0
      %v2355 = vsel %vm2335, %v2328, 0
      %v2358 = vsel %vm2335, %v2329, 0
      %vm2360 = vcmask 1043456
      %v2362 = vsel %vm2360, %v2334, 0
      %2364 = vmatprep.subr.mxu0 0.0
      %2365 = vmatpush1.msra.mxu0 %v2330
      %2366 = vmatprep.subr.mxu0 0.0
      %2367 = vmatpush1.msra.mxu0 %v2331
      %2368 = vmatprep.subr.mxu0 0.0
      %2369 = vmatpush1.msra.mxu0 %v2332
      %2370 = vmatprep.subr.mxu0 0.0
      %2371 = vmatpush1.msra.mxu0 %v2333
      %2372 = vmatprep.subr.mxu0 0.0
      %2373 = vmatpush1.msra.mxu0 %v2362
      %2374 = vmatprep.subr.mxu0 0.0
      %2375 = vmatpush1.msra.mxu0 0.0
      %2376 = vmatprep.subr.mxu0 0.0
      %2377 = vmatpush1.msra.mxu0 0.0
      %2378 = vmatprep.subr.mxu0 0.0
      %2379 = vmatpush1.msra.mxu0 0.0
      %2380 = vmatprep.subr.mxu0 0.0
      %2381 = vmatpush1.msra.mxu0 0.0
      %2382 = vmatprep.subr.mxu0 0.0
      %2383 = vmatpush1.msra.mxu0 0.0
      %2384 = vmatprep.subr.mxu0 0.0
      %2385 = vmatpush1.msra.mxu0 0.0
      %2386 = vmatprep.subr.mxu0 0.0
      %2387 = vmatpush1.msra.mxu0 0.0
      %2388 = vmatprep.subr.mxu0 0.0
      %2389 = vmatpush1.msra.mxu0 0.0
      %2390 = vmatprep.subr.mxu0 0.0
      %2391 = vmatpush1.msra.mxu0 0.0
      %2392 = vmatprep.subr.mxu0 0.0
      %2393 = vmatpush1.msra.mxu0 0.0
      %2394 = vmatprep.subr.mxu0 0.0
      %2395 = vmatpush1.msra.mxu0 0.0
      %2396 = vmatprep.subr.mxu0 0.0
      %2397 = vmatpush1.msra.mxu0 0.0
      %2398 = vmatprep.subr.mxu0 0.0
      %2399 = vmatpush1.msra.mxu0 0.0
      %2400 = vmatprep.subr.mxu0 0.0
      %2401 = vmatpush1.msra.mxu0 0.0
      %2402 = vmatprep.subr.mxu0 0.0
      %2403 = vmatpush1.msra.mxu0 0.0
      %2404 = vmatprep.subr.mxu0 0.0
      %2405 = vmatpush1.msra.mxu0 0.0
      %2406 = vmatprep.subr.mxu0 0.0
      %2407 = vmatpush1.msra.mxu0 0.0
      %2408 = vmatprep.subr.mxu0 0.0
      %2409 = vmatpush1.msra.mxu0 0.0
      %2410 = vmatprep.subr.mxu0 0.0
      %2411 = vmatpush1.msra.mxu0 0.0
      %2412 = vmatprep.subr.mxu0 0.0
      %2413 = vmatpush1.msra.mxu0 0.0
      %2414 = vmatprep.subr.mxu0 0.0
      %2415 = vmatpush1.msra.mxu0 0.0
      %2416 = vmatprep.subr.mxu0 0.0
      %2417 = vmatpush1.msra.mxu0 0.0
      %2418 = vmatprep.subr.mxu0 0.0
      %2419 = vmatpush1.msra.mxu0 0.0
      %2420 = vmatprep.subr.mxu0 0.0
      %2421 = vmatpush1.msra.mxu0 0.0
      %2422 = vmatprep.subr.mxu0 0.0
      %2423 = vmatpush1.msra.mxu0 0.0
      %2424 = vmatprep.subr.mxu0 0.0
      %2425 = vmatpush1.msra.mxu0 0.0
      %2426 = vmatprep.subr.mxu0 0.0
      %2427 = vmatpush1.msra.mxu0 0.0
      %2428 = vmatprep.mubr.f32.mxu0 0.0
      %2429 = vmatmul.mubr.f32.gmra.mrb[0].mxu0 %v2337
      %v2430 = vpop.f32.mrb[0].mxu0
      %v2431 = vadd.f32 0.0, %v2430
      %v2432 = vpop.f32.mrb[0].mxu0
      %2433 = vmatprep.mubr.f32.mxu0 0.0
      %2434 = vmatmul.mubr.f32.gmra.mrb[0].mxu0 %v2340
      %v2435 = vpop.f32.mrb[0].mxu0
      %v2436 = vadd.f32 0.0, %v2435
      %v2437 = vpop.f32.mrb[0].mxu0
      %2438 = vmatprep.mubr.f32.mxu0 0.0
      %2439 = vmatmul.mubr.f32.gmra.mrb[0].mxu0 %v2343
      %v2440 = vpop.f32.mrb[0].mxu0
      %v2441 = vadd.f32 0.0, %v2440
      %v2442 = vpop.f32.mrb[0].mxu0
      %2443 = vmatprep.mubr.f32.mxu0 0.0
      %2444 = vmatmul.mubr.f32.gmra.mrb[0].mxu0 %v2346
      %v2445 = vpop.f32.mrb[0].mxu0
      %v2446 = vadd.f32 0.0, %v2445
      %v2447 = vpop.f32.mrb[0].mxu0
      %2448 = vmatprep.mubr.f32.mxu0 0.0
      %2449 = vmatmul.mubr.f32.gmra.mrb[0].mxu0 %v2349
      %v2450 = vpop.f32.mrb[0].mxu0
      %v2451 = vadd.f32 0.0, %v2450
      %v2452 = vpop.f32.mrb[0].mxu0
      %2453 = vmatprep.mubr.f32.mxu0 0.0
      %2454 = vmatmul.mubr.f32.gmra.mrb[0].mxu0 %v2352
      %v2455 = vpop.f32.mrb[0].mxu0
      %v2456 = vadd.f32 0.0, %v2455
      %v2457 = vpop.f32.mrb[0].mxu0
      %2458 = vmatprep.mubr.f32.mxu0 0.0
      %2459 = vmatmul.mubr.f32.gmra.mrb[0].mxu0 %v2355
      %v2460 = vpop.f32.mrb[0].mxu0
      %v2461 = vadd.f32 0.0, %v2460
      %v2462 = vpop.f32.mrb[0].mxu0
      %2463 = vmatprep.mubr.f32.mxu0 0.0
      %2464 = vmatmul.mubr.f32.gmra.mrb[0].mxu0 %v2358
      %v2465 = vpop.f32.mrb[0].mxu0
      %v2466 = vadd.f32 0.0, %v2465
      %v2467 = vpop.f32.mrb[0].mxu0
      %2468 = vdwg.mxu0
      %v2469 = vld [vmem:[%s5] sm:$0x1]
      %v2471 = vlaneseq
      %v2472 = vshrl.u32 %v2471, 7
      %v2473 = vsub.s32 0, %v2472
      %v2474 = vrot.slane %v2469, %v2473
      %v2476 = vmul.f32 %v2431, %v2474
      %v2477 = vmul.f32 %v2436, %v2474
      %v2478 = vmul.f32 %v2441, %v2474
      %v2479 = vmul.f32 %v2446, %v2474
      %v2480 = vmul.f32 %v2451, %v2474
      %v2481 = vmul.f32 %v2456, %v2474
      %v2482 = vmul.f32 %v2461, %v2474
      %v2483 = vmul.f32 %v2466, %v2474
      %v2484 = vld [vmem:[%s6] sm:$0x1]
      %v2486 = vlaneseq
      %v2487 = vshrl.u32 %v2486, 7
      %v2488 = vsub.s32 0, %v2487
      %v2489 = vrot.slane %v2484, %v2488
      %v2491 = vadd.f32 %v2476, %v2489
      %v2492 = vadd.f32 %v2477, %v2489
      %v2493 = vadd.f32 %v2478, %v2489
      %v2494 = vadd.f32 %v2479, %v2489
      %v2495 = vadd.f32 %v2480, %v2489
      %v2496 = vadd.f32 %v2481, %v2489
      %v2497 = vadd.f32 %v2482, %v2489
      %v2498 = vadd.f32 %v2483, %v2489
      %v2499 = vmax.f32 %v2491, 0.0
      %v2500 = vmax.f32 %v2492, 0.0
      %v2501 = vmax.f32 %v2493, 0.0
      %v2502 = vmax.f32 %v2494, 0.0
      %v2503 = vmax.f32 %v2495, 0.0
      %v2504 = vmax.f32 %v2496, 0.0
      %v2505 = vmax.f32 %v2497, 0.0
      %v2506 = vmax.f32 %v2498, 0.0
      %2507 = vst.msk [vmem:[%s278] sm:$0xff] %vm1901, %v2499
      %2508 = vst.msk [vmem:[%s278 + $0x8] sm:$0xff] %vm1901, %v2500
      %2509 = vst.msk [vmem:[%s278 + $0x10] sm:$0xff] %vm1901, %v2501
      %2510 = vst.msk [vmem:[%s278 + $0x18] sm:$0xff] %vm1901, %v2502
      %2511 = vst.msk [vmem:[%s278 + $0x20] sm:$0xff] %vm1901, %v2503
      %2512 = vst.msk [vmem:[%s278 + $0x28] sm:$0xff] %vm1901, %v2504
      %2513 = vst.msk [vmem:[%s278 + $0x30] sm:$0xff] %vm1901, %v2505
      %2514 = vst.msk [vmem:[%s278 + $0x38] sm:$0xff] %vm1901, %v2506
      %p2515 = scmp.lt.s32.totalorder %s18, 1
      %s2516 = scalar_select %p2515, %s18, 1
      %s2517 = smul.addr %s2516, 8
      %s2518 = smul.addr %s2517, 8
      %s2519 = scalar_lea.vmem %s7, %s2518
      // Predicated region
      $region49: #{encoder2_forward.3} parent=47 // pred_check
        %p2520 = pneg %p188
      $region50: #{encoder2_forward.3} parent=47 // pred_check_branch
        %2522 = sbr.rel (%p2520) target = $region52
      $region51: #{encoder2_forward.3} parent=47 // pred_region
        _
      $region52: #{encoder2_forward.3} parent=47 // pred_fallthru
        _
    $region48: #{encoder2_forward.3} parent=5 // pred_fallthru
      _
    %p2523 = scmp.le.s32.totalorder 2, %s13
    // Predicated region
    $region53: #{encoder2_forward.3} parent=5 // pred_check
      %p2524 = pneg %p2523
    $region54: #{encoder2_forward.3} parent=5 // pred_check_branch
      %2526 = sbr.rel (%p2524) target = $region56
    $region55: #{encoder2_forward.3} parent=5 // pred_region
      %s2527 = ssub.s32 %s13, 2
      // Predicated region
      $region57: #{encoder2_forward.3} parent=55 // pred_check
        %p2528 = pneg %p194
      $region58: #{encoder2_forward.3} parent=55 // pred_check_branch
        %2530 = sbr.rel (%p2528) target = $region60
      $region59: #{encoder2_forward.3} parent=55 // pred_region
        %p2531 = scmp.lt.s32.totalorder %s19, 1
        %s2532 = scalar_select %p2531, %s19, 1
        %s2533 = smul.addr %s2532, 8
        %s2534 = smul.addr %s2533, 8
        %s2535 = scalar_lea.vmem %s7, %s2534
      $region60: #{encoder2_forward.3} parent=55 // pred_fallthru
        _
    $region56: #{encoder2_forward.3} parent=5 // pred_fallthru
      _
  $region6: #{encoder2_forward.3} parent=0 // loop_footer
    %s17 = sadd.s32 1, %s13
  $region7: #{encoder2_forward.3} parent=0 // loop_footer_branch
    %12 = sbr.rel target = $region3
  $region8: #{encoder2_forward.3} parent=0 // loop_exit
    _

</llo_original>
